<compile_context>
chip_gen: v7x
topology: tpu7x:2x2x1
jax: 0.10.0
libtpu: 0.0.40
codegen_flags: <defaults>
</compile_context>

<pallas_src>
import jax
import jax.numpy as jnp
from jax.experimental import pallas as pl
from jax.experimental.pallas import tpu as pltpu


# ------------------------------------------------------------------ helpers --
def _round_up(n, m):
    return ((n + m - 1) // m) * m


# ------------------------------------------------------------------- kernel --
def make_vae_kernel(layout, n_slabs, batch, latent, latent_pad, tile_batch,
                    need_row_mask):
    """layout: tuple of (slab_id, row_offset, in_pad, out_pad, bias_row) per
    fused layer, in network order:
      0..3  encoder, 4 fused head-0 ([hm|hs]), 5 fused head-1 ([mu|log_sigma]),
      6..11 decoder."""

    def kernel(*refs):
        x_ref, noise_ref = refs[0], refs[1]
        slab_refs = refs[2:2 + n_slabs]
        bias_ref = refs[2 + n_slabs]
        out_ref = refs[3 + n_slabs]
        kl_ref = refs[4 + n_slabs]

        def linear(h_bf16, idx):
            slab, r0, ip, op, brow = layout[idx]
            w = slab_refs[slab][r0:r0 + ip, :]          # bf16, exact-width slab
            b = bias_ref[brow:brow + 1, 0:op]           # (1, op) f32
            acc = jnp.dot(h_bf16, w, preferred_element_type=jnp.float32)
            return acc + b

        def relu_bf16(t_f32):
            # ReLU on the f32 accumulator, single cast to bf16 for the next matmul.
            return jnp.maximum(t_f32, 0.0).astype(jnp.bfloat16)

        x = x_ref[...].astype(jnp.bfloat16)              # (TB, F_pad)

        # ----- encoder (4x Linear+ReLU) -----
        h = relu_bf16(linear(x, 0))
        h = relu_bf16(linear(h, 1))
        h = relu_bf16(linear(h, 2))
        encoded = relu_bf16(linear(h, 3))                # (TB, 256) bf16

        # ----- fused mu/sigma heads -----
        hh = relu_bf16(linear(encoded, 4))               # [relu(hm) | relu(hs)]
        mu_ls = linear(hh, 5)                            # (TB, 2*L_pad) f32
        mu = mu_ls[:, 0:latent_pad]                      # padded lanes are 0
        log_sigma = mu_ls[:, latent_pad:2 * latent_pad]  # padded lanes are 0
        sigma = jnp.exp(log_sigma)                       # padded lanes -> 1

        # ----- reparameterization (noise padded lanes are 0 => z padded lanes 0)
        z = mu + sigma * noise_ref[...]

        # ----- KL partial sums for this batch tile (masked to real rows/cols) --
        term = sigma * sigma + mu * mu - log_sigma - 0.5
        col_ok = jax.lax.broadcasted_iota(jnp.int32, (1, latent_pad), 1) < latent
        if need_row_mask:
            rows = (pl.program_id(0) * tile_batch
                    + jax.lax.broadcasted_iota(jnp.int32, (tile_batch, 1), 0))
            valid = col_ok & (rows < batch)
        else:
            valid = jnp.broadcast_to(col_ok, term.shape)
        kl_part = jnp.sum(jnp.where(valid, term, 0.0), axis=0, keepdims=True)
        kl_ref[...] = kl_part[None]                      # (1, 1, L_pad)

        # ----- decoder (5x Linear+ReLU, Linear+Sigmoid) -----
        d = relu_bf16(linear(z.astype(jnp.bfloat16), 6))
        d = relu_bf16(linear(d, 7))
        d = relu_bf16(linear(d, 8))
        d = relu_bf16(linear(d, 9))
        d = relu_bf16(linear(d, 10))
        out_ref[...] = jax.nn.sigmoid(linear(d, 11))     # lane-dense (TB, F_pad)

    return kernel


# ----------------------------------------------------------- parameter init --
def init_linear(key, fan_in, fan_out):
    """Deterministic init: weight [in, out] (pre-transposed), bias [1, out]."""
    kw, kb = jax.random.split(key)
    w = jax.random.normal(kw, (fan_in, fan_out), jnp.float32) * 0.05
    b = jax.random.normal(kb, (1, fan_out), jnp.float32) * 0.01
    return w, b


def init_vae_params(key, num_features, latent_features):
    dims_enc = [(num_features, 480), (480, 320), (320, 213), (213, 142)]
    dims_mu = [(142, 95), (95, latent_features)]
    dims_sig = [(142, 95), (95, latent_features)]
    dims_dec = [(latent_features, 95), (95, 142), (142, 213),
                (213, 320), (320, 480), (480, num_features)]
    all_dims = dims_enc + dims_mu + dims_sig + dims_dec
    keys = jax.random.split(key, len(all_dims))
    params = []
    for k, (fi, fo) in zip(keys, all_dims):
        w, b = init_linear(k, fi, fo)
        params.append(w)
        params.append(b)
    return params  # flat list: [w0, b0, w1, b1, ...], 14 layers


# --------------------------------------------------------- parameter packing --
def pack_vae_params(params, num_features, latent_features):
    """Pack the 14 Linear layers into per-width bf16 weight slabs + 1 f32 bias
    slab, fusing the mu/sigma heads.  Every layer is zero-padded to a multiple
    of 128 on both dims and stored in the slab whose width equals its padded
    out-dim, so the slabs contain no pure-zero column bands."""
    L = latent_features
    Lp = _round_up(L, 128)

    w = [jnp.asarray(params[2 * i], jnp.float32) for i in range(14)]
    b = [jnp.asarray(params[2 * i + 1], jnp.float32).reshape(-1) for i in range(14)]

    def padded(Wf, bf):
        fi, fo = Wf.shape
        ip, op = _round_up(fi, 128), _round_up(fo, 128)
        W = jnp.zeros((ip, op), jnp.float32).at[:fi, :fo].set(Wf)
        bb = jnp.zeros((op,), jnp.float32).at[:fo].set(bf)
        return W, bb

    fused = [padded(w[i], b[i]) for i in range(4)]        # encoder

    # fused head layer 0: to_mu[0] (idx 4) | to_sigma[0] (idx 6) -> [hm | hs]
    fi, H = w[4].shape                                    # 142, 95
    ip, Hp = _round_up(fi, 128), _round_up(H, 128)
    W = (jnp.zeros((ip, 2 * Hp), jnp.float32)
         .at[:fi, :H].set(w[4]).at[:fi, Hp:Hp + H].set(w[6]))
    bb = (jnp.zeros((2 * Hp,), jnp.float32)
          .at[:H].set(b[4]).at[Hp:Hp + H].set(b[6]))
    fused.append((W, bb))

    # fused head layer 1 (block diagonal): to_mu[1] (idx 5) | to_sigma[1] (idx 7)
    W = (jnp.zeros((2 * Hp, 2 * Lp), jnp.float32)
         .at[:H, :L].set(w[5]).at[Hp:Hp + H, Lp:Lp + L].set(w[7]))
    bb = (jnp.zeros((2 * Lp,), jnp.float32)
          .at[:L].set(b[5]).at[Lp:Lp + L].set(b[7]))
    fused.append((W, bb))

    fused += [padded(w[i], b[i]) for i in range(8, 14)]   # decoder

    # --- one slab per distinct padded out-width; record static offsets ---
    widths = sorted({Wp.shape[1] for Wp, _ in fused})
    width_to_slab = {wd: s for s, wd in enumerate(widths)}
    row_off = [0] * len(widths)
    layout = []
    for li, (Wp, _) in enumerate(fused):
        ip, op = Wp.shape
        s = width_to_slab[op]
        layout.append((s, row_off[s], ip, op, li))
        row_off[s] += ip

    slabs = [jnp.zeros((row_off[s], wd), jnp.float32) for s, wd in enumerate(widths)]
    for (s, r0, ip, op, _), (Wp, _) in zip(layout, fused):
        slabs[s] = slabs[s].at[r0:r0 + ip, :].set(Wp)
    slabs = [sl.astype(jnp.bfloat16) for sl in slabs]

    bias_rows = _round_up(len(fused), 8)
    bias_slab = jnp.zeros((bias_rows, max(widths)), jnp.float32)
    for li, (_, bb) in enumerate(fused):
        bias_slab = bias_slab.at[li, :bb.shape[0]].set(bb)

    return tuple(slabs), bias_slab, tuple(layout)


# ----------------------------------------------------------------- wrapper ---
def vae_forward(x, noise, slabs, bias_slab, layout, *, tile_batch=256):
    B, F = x.shape
    L = noise.shape[1]
    F_pad = _round_up(F, 128)
    L_pad = _round_up(L, 128)

    # Batch tile: multiple of 16 (bf16 sublane packing), capped at tile_batch.
    TB = _round_up(min(max(tile_batch, 16), _round_up(B, 16)), 16)
    B_pad = _round_up(B, TB)
    num_tiles = B_pad // TB

    x_p = jnp.zeros((B_pad, F_pad), jnp.float32).at[:B, :F].set(x)
    n_p = jnp.zeros((B_pad, L_pad), jnp.float32).at[:B, :L].set(noise)

    kernel = make_vae_kernel(layout, len(slabs), B, L, L_pad, TB,
                             need_row_mask=(B_pad != B))

    in_specs = [
        pl.BlockSpec((TB, F_pad), lambda i: (i, 0)),      # x tile
        pl.BlockSpec((TB, L_pad), lambda i: (i, 0)),      # noise tile
    ]
    for sl in slabs:                                      # weights: VMEM-resident
        in_specs.append(pl.BlockSpec(sl.shape, lambda i: (0, 0)))
    in_specs.append(pl.BlockSpec(bias_slab.shape, lambda i: (0, 0)))

    out_specs = (
        pl.BlockSpec((TB, F_pad), lambda i: (i, 0)),      # decoded tile
        pl.BlockSpec((1, 1, L_pad), lambda i: (i, 0, 0)),  # per-tile KL partials
    )

    fn = pl.pallas_call(
        kernel,
        out_shape=(jax.ShapeDtypeStruct((B_pad, F_pad), jnp.float32),
                   jax.ShapeDtypeStruct((num_tiles, 1, L_pad), jnp.float32)),
        grid=(num_tiles,),
        in_specs=in_specs,
        out_specs=out_specs,
        compiler_params=pltpu.CompilerParams(
            dimension_semantics=("parallel",),            # both v7x TCs split tiles
            vmem_limit_bytes=32 << 20),
    )
    decoded_p, kl_part = fn(x_p, n_p, *slabs, bias_slab)
    kl = jnp.sum(kl_part) / jnp.float32(B * L)
    return decoded_p[:B, :F], kl


# --------------------------------------------------------------- reference ---
def vae_forward_ref(x, noise, params):
    """Pure-JAX reference with the same numerics (bf16 matmul operands,
    f32 accumulation / bias / elementwise)."""
    p = list(params)

    def lin(h, i):
        w = p[2 * i].astype(jnp.bfloat16)
        return jnp.dot(h.astype(jnp.bfloat16), w,
                       preferred_element_type=jnp.float32) + p[2 * i + 1]

    h = x
    for i in range(4):                       # encoder
        h = jax.nn.relu(lin(h, i))
    encoded = h
    mu = lin(jax.nn.relu(lin(encoded, 4)), 5)
    log_sigma = lin(jax.nn.relu(lin(encoded, 6)), 7)
    sigma = jnp.exp(log_sigma)
    z = mu + sigma * noise
    kl = jnp.sum(sigma ** 2 + mu ** 2 - log_sigma - 0.5) / (mu.shape[0] * mu.shape[1])
    d = z
    for i in range(8, 13):                   # decoder hidden layers
        d = jax.nn.relu(lin(d, i))
    decoded = jax.nn.sigmoid(lin(d, 13))
    return decoded, kl


# -------------------------------------------------------------------- main ---
if __name__ == "__main__":
    num_features = 64
    latent_features = 16
    batch = 40           # pads to 48 -> exercises the batch grid + row masking

    key = jax.random.PRNGKey(0)
    k_x, k_noise, k_params = jax.random.split(key, 3)

    x = jax.random.uniform(k_x, (batch, num_features), jnp.float32)
    noise = jax.random.normal(k_noise, (batch, latent_features), jnp.float32)
    params = init_vae_params(k_params, num_features, latent_features)

    slabs, bias_slab, layout = pack_vae_params(
        params, num_features, latent_features)

    # tile_batch=16 so this small demo runs a multi-step grid (3 tiles);
    # production default is 256 for full MXU row utilization.
    decoded, kl = vae_forward(x, noise, slabs, bias_slab, layout, tile_batch=16)
    decoded = jax.block_until_ready(decoded)
    kl = jax.block_until_ready(kl)

    # correctness check against a pure-JAX reference with matching numerics
    decoded_ref, kl_ref_val = vae_forward_ref(x, noise, params)
    assert jnp.allclose(decoded, decoded_ref, atol=2e-3, rtol=2e-3), "decoded mismatch"
    assert jnp.allclose(kl, kl_ref_val, atol=2e-3, rtol=2e-3), "kl mismatch"

    print("KERNEL_OK")
</pallas_src>

<mosaic_0001>
module attributes {stable_mosaic.version = 11 : i64} {
  func.func @kernel(%arg0: i32, %arg1: memref<16x128xf32, #tpu.memory_space<vmem>>, %arg2: memref<16x128xf32, #tpu.memory_space<vmem>>, %arg3: memref<640x128xbf16, #tpu.memory_space<vmem>>, %arg4: memref<1536x256xbf16, #tpu.memory_space<vmem>>, %arg5: memref<768x384xbf16, #tpu.memory_space<vmem>>, %arg6: memref<512x512xbf16, #tpu.memory_space<vmem>>, %arg7: memref<16x512xf32, #tpu.memory_space<vmem>>, %arg8: memref<16x128xf32, #tpu.memory_space<vmem>>, %arg9: memref<1x1x128xf32, #tpu.memory_space<vmem>>) attributes {dimension_semantics = [#tpu.dimension_semantics<parallel>], iteration_bounds = array<i64: 3>, scalar_prefetch = 0 : i64, scratch_operands = 0 : i64, tpu.core_type = #tpu.core_type<tc>, window_params = [{transform_indices = @transform_0, window_bounds = array<i64: 16, 128>}, {transform_indices = @transform_1, window_bounds = array<i64: 16, 128>}, {pipeline_mode = #tpu.pipeline_mode<synchronous>, transform_indices = @transform_2, window_bounds = array<i64: 640, 128>}, {pipeline_mode = #tpu.pipeline_mode<synchronous>, transform_indices = @transform_3, window_bounds = array<i64: 1536, 256>}, {pipeline_mode = #tpu.pipeline_mode<synchronous>, transform_indices = @transform_4, window_bounds = array<i64: 768, 384>}, {pipeline_mode = #tpu.pipeline_mode<synchronous>, transform_indices = @transform_5, window_bounds = array<i64: 512, 512>}, {pipeline_mode = #tpu.pipeline_mode<synchronous>, transform_indices = @transform_6, window_bounds = array<i64: 16, 512>}, {transform_indices = @transform_7, window_bounds = array<i64: 16, 128>}, {transform_indices = @transform_8, window_bounds = array<i64: 1, 1, 128>}]} {
    %c0 = arith.constant 0 : index
    %c0_0 = arith.constant 0 : index
    %0 = vector.load %arg1[%c0, %c0_0] : memref<16x128xf32, #tpu.memory_space<vmem>>, vector<16x128xf32>
    %1 = arith.truncf %0 : vector<16x128xf32> to vector<16x128xbf16>
    %c0_1 = arith.constant 0 : index
    %c0_2 = arith.constant 0 : index
    %2 = vector.load %arg6[%c0_1, %c0_2] : memref<512x512xbf16, #tpu.memory_space<vmem>>, vector<128x512xbf16>
    %c0_3 = arith.constant 0 : index
    %c0_4 = arith.constant 0 : index
    %3 = vector.load %arg7[%c0_3, %c0_4] : memref<16x512xf32, #tpu.memory_space<vmem>>, vector<1x512xf32>
    %cst = arith.constant dense<0.000000e+00> : vector<16x512xf32>
    %4 = tpu.matmul %1, %2, %cst {dimension_numbers = #tpu.dot_dimension_numbers<[1], [0], [0], [1], [0, 0, 1, 1], [], []>} : vector<16x128xbf16>, vector<128x512xbf16>, vector<16x512xf32> -> vector<16x512xf32>
    %5 = vector.broadcast %3 : vector<1x512xf32> to vector<16x512xf32>
    %6 = arith.addf %4, %5 : vector<16x512xf32>
    %cst_5 = arith.constant 0.000000e+00 : f32
    %7 = vector.broadcast %cst_5 : f32 to vector<16x512xf32>
    %8 = arith.maximumf %6, %7 : vector<16x512xf32>
    %9 = arith.truncf %8 : vector<16x512xf32> to vector<16x512xbf16>
    %c0_6 = arith.constant 0 : index
    %c0_7 = arith.constant 0 : index
    %10 = vector.load %arg5[%c0_6, %c0_7] : memref<768x384xbf16, #tpu.memory_space<vmem>>, vector<512x384xbf16>
    %c1 = arith.constant 1 : index
    %c0_8 = arith.constant 0 : index
    %11 = vector.load %arg7[%c1, %c0_8] : memref<16x512xf32, #tpu.memory_space<vmem>>, vector<1x384xf32>
    %cst_9 = arith.constant dense<0.000000e+00> : vector<16x384xf32>
    %12 = tpu.matmul %9, %10, %cst_9 {dimension_numbers = #tpu.dot_dimension_numbers<[1], [0], [0], [1], [0, 0, 1, 1], [], []>} : vector<16x512xbf16>, vector<512x384xbf16>, vector<16x384xf32> -> vector<16x384xf32>
    %13 = vector.broadcast %11 : vector<1x384xf32> to vector<16x384xf32>
    %14 = arith.addf %12, %13 : vector<16x384xf32>
    %cst_10 = arith.constant 0.000000e+00 : f32
    %15 = vector.broadcast %cst_10 : f32 to vector<16x384xf32>
    %16 = arith.maximumf %14, %15 : vector<16x384xf32>
    %17 = arith.truncf %16 : vector<16x384xf32> to vector<16x384xbf16>
    %c0_11 = arith.constant 0 : index
    %c0_12 = arith.constant 0 : index
    %18 = vector.load %arg4[%c0_11, %c0_12] : memref<1536x256xbf16, #tpu.memory_space<vmem>>, vector<384x256xbf16>
    %c2 = arith.constant 2 : index
    %c0_13 = arith.constant 0 : index
    %19 = vector.load %arg7[%c2, %c0_13] : memref<16x512xf32, #tpu.memory_space<vmem>>, vector<1x256xf32>
    %cst_14 = arith.constant dense<0.000000e+00> : vector<16x256xf32>
    %20 = tpu.matmul %17, %18, %cst_14 {dimension_numbers = #tpu.dot_dimension_numbers<[1], [0], [0], [1], [0, 0, 1, 1], [], []>} : vector<16x384xbf16>, vector<384x256xbf16>, vector<16x256xf32> -> vector<16x256xf32>
    %21 = vector.broadcast %19 : vector<1x256xf32> to vector<16x256xf32>
    %22 = arith.addf %20, %21 : vector<16x256xf32>
    %cst_15 = arith.constant 0.000000e+00 : f32
    %23 = vector.broadcast %cst_15 : f32 to vector<16x256xf32>
    %24 = arith.maximumf %22, %23 : vector<16x256xf32>
    %25 = arith.truncf %24 : vector<16x256xf32> to vector<16x256xbf16>
    %c384 = arith.constant 384 : index
    %c0_16 = arith.constant 0 : index
    %26 = vector.load %arg4[%c384, %c0_16] : memref<1536x256xbf16, #tpu.memory_space<vmem>>, vector<256x256xbf16>
    %c3 = arith.constant 3 : index
    %c0_17 = arith.constant 0 : index
    %27 = vector.load %arg7[%c3, %c0_17] : memref<16x512xf32, #tpu.memory_space<vmem>>, vector<1x256xf32>
    %cst_18 = arith.constant dense<0.000000e+00> : vector<16x256xf32>
    %28 = tpu.matmul %25, %26, %cst_18 {dimension_numbers = #tpu.dot_dimension_numbers<[1], [0], [0], [1], [0, 0, 1, 1], [], []>} : vector<16x256xbf16>, vector<256x256xbf16>, vector<16x256xf32> -> vector<16x256xf32>
    %29 = vector.broadcast %27 : vector<1x256xf32> to vector<16x256xf32>
    %30 = arith.addf %28, %29 : vector<16x256xf32>
    %cst_19 = arith.constant 0.000000e+00 : f32
    %31 = vector.broadcast %cst_19 : f32 to vector<16x256xf32>
    %32 = arith.maximumf %30, %31 : vector<16x256xf32>
    %33 = arith.truncf %32 : vector<16x256xf32> to vector<16x256xbf16>
    %c640 = arith.constant 640 : index
    %c0_20 = arith.constant 0 : index
    %34 = vector.load %arg4[%c640, %c0_20] : memref<1536x256xbf16, #tpu.memory_space<vmem>>, vector<256x256xbf16>
    %c4 = arith.constant 4 : index
    %c0_21 = arith.constant 0 : index
    %35 = vector.load %arg7[%c4, %c0_21] : memref<16x512xf32, #tpu.memory_space<vmem>>, vector<1x256xf32>
    %cst_22 = arith.constant dense<0.000000e+00> : vector<16x256xf32>
    %36 = tpu.matmul %33, %34, %cst_22 {dimension_numbers = #tpu.dot_dimension_numbers<[1], [0], [0], [1], [0, 0, 1, 1], [], []>} : vector<16x256xbf16>, vector<256x256xbf16>, vector<16x256xf32> -> vector<16x256xf32>
    %37 = vector.broadcast %35 : vector<1x256xf32> to vector<16x256xf32>
    %38 = arith.addf %36, %37 : vector<16x256xf32>
    %cst_23 = arith.constant 0.000000e+00 : f32
    %39 = vector.broadcast %cst_23 : f32 to vector<16x256xf32>
    %40 = arith.maximumf %38, %39 : vector<16x256xf32>
    %41 = arith.truncf %40 : vector<16x256xf32> to vector<16x256xbf16>
    %c896 = arith.constant 896 : index
    %c0_24 = arith.constant 0 : index
    %42 = vector.load %arg4[%c896, %c0_24] : memref<1536x256xbf16, #tpu.memory_space<vmem>>, vector<256x256xbf16>
    %c5 = arith.constant 5 : index
    %c0_25 = arith.constant 0 : index
    %43 = vector.load %arg7[%c5, %c0_25] : memref<16x512xf32, #tpu.memory_space<vmem>>, vector<1x256xf32>
    %cst_26 = arith.constant dense<0.000000e+00> : vector<16x256xf32>
    %44 = tpu.matmul %41, %42, %cst_26 {dimension_numbers = #tpu.dot_dimension_numbers<[1], [0], [0], [1], [0, 0, 1, 1], [], []>} : vector<16x256xbf16>, vector<256x256xbf16>, vector<16x256xf32> -> vector<16x256xf32>
    %45 = vector.broadcast %43 : vector<1x256xf32> to vector<16x256xf32>
    %46 = arith.addf %44, %45 : vector<16x256xf32>
    %47 = vector.extract_strided_slice %46 {offsets = [0, 0], sizes = [16, 128], strides = [1, 1]} : vector<16x256xf32> to vector<16x128xf32>
    %48 = vector.extract_strided_slice %46 {offsets = [0, 128], sizes = [16, 128], strides = [1, 1]} : vector<16x256xf32> to vector<16x128xf32>
    %49 = math.exp %48 : vector<16x128xf32>
    %c0_27 = arith.constant 0 : index
    %c0_28 = arith.constant 0 : index
    %50 = vector.load %arg2[%c0_27, %c0_28] : memref<16x128xf32, #tpu.memory_space<vmem>>, vector<16x128xf32>
    %51 = arith.mulf %49, %50 : vector<16x128xf32>
    %52 = arith.addf %47, %51 : vector<16x128xf32>
    %53 = arith.mulf %49, %49 : vector<16x128xf32>
    %54 = arith.mulf %47, %47 : vector<16x128xf32>
    %55 = arith.addf %53, %54 : vector<16x128xf32>
    %56 = arith.subf %55, %48 : vector<16x128xf32>
    %cst_29 = arith.constant 5.000000e-01 : f32
    %57 = vector.broadcast %cst_29 : f32 to vector<16x128xf32>
    %58 = arith.subf %56, %57 : vector<16x128xf32>
    %59 = tpu.iota {dimensions = array<i32: 1>} : vector<1x128xi32>
    %c16_i32 = arith.constant 16 : i32
    %60 = vector.broadcast %c16_i32 : i32 to vector<1x128xi32>
    %61 = arith.cmpi slt, %59, %60 : vector<1x128xi32>
    %c16_i32_30 = arith.constant 16 : i32
    %62 = arith.muli %arg0, %c16_i32_30 : i32
    %63 = tpu.iota {dimensions = array<i32: 0>} : vector<16x1xi32>
    %64 = vector.broadcast %62 : i32 to vector<16x1xi32>
    %65 = arith.addi %64, %63 : vector<16x1xi32>
    %c40_i32 = arith.constant 40 : i32
    %66 = vector.broadcast %c40_i32 : i32 to vector<16x1xi32>
    %67 = arith.cmpi slt, %65, %66 : vector<16x1xi32>
    %68 = vector.broadcast %61 : vector<1x128xi1> to vector<16x128xi1>
    %69 = vector.broadcast %67 : vector<16x1xi1> to vector<16x128xi1>
    %70 = arith.andi %68, %69 : vector<16x128xi1>
    %cst_31 = arith.constant 0.000000e+00 : f32
    %71 = vector.broadcast %cst_31 : f32 to vector<16x128xf32>
    %72 = arith.select %70, %58, %71 : vector<16x128xi1>, vector<16x128xf32>
    %cst_32 = arith.constant dense<0.000000e+00> : vector<128xf32>
    %73 = vector.multi_reduction <add>, %72, %cst_32 [0] : vector<16x128xf32> to vector<128xf32>
    %74 = vector.shape_cast %73 : vector<128xf32> to vector<1x128xf32>
    %75 = vector.shape_cast %74 : vector<1x128xf32> to vector<1x1x128xf32>
    %c0_33 = arith.constant 0 : index
    %c0_34 = arith.constant 0 : index
    %c0_35 = arith.constant 0 : index
    %76 = vector.load %arg9[%c0_33, %c0_34, %c0_35] : memref<1x1x128xf32, #tpu.memory_space<vmem>>, vector<1x1x128xf32>
    tpu.vector_store %arg9[%c0_33, %c0_34, %c0_35], %75 {strides = array<i32>} : memref<1x1x128xf32, #tpu.memory_space<vmem>>, vector<1x1x128xf32>,
    %77 = arith.truncf %52 : vector<16x128xf32> to vector<16x128xbf16>
    %c0_36 = arith.constant 0 : index
    %c0_37 = arith.constant 0 : index
    %78 = vector.load %arg3[%c0_36, %c0_37] : memref<640x128xbf16, #tpu.memory_space<vmem>>, vector<128x128xbf16>
    %c6 = arith.constant 6 : index
    %c0_38 = arith.constant 0 : index
    %79 = vector.load %arg7[%c6, %c0_38] : memref<16x512xf32, #tpu.memory_space<vmem>>, vector<1x128xf32>
    %cst_39 = arith.constant dense<0.000000e+00> : vector<16x128xf32>
    %80 = tpu.matmul %77, %78, %cst_39 {dimension_numbers = #tpu.dot_dimension_numbers<[1], [0], [0], [1], [0, 0, 1, 1], [], []>} : vector<16x128xbf16>, vector<128x128xbf16>, vector<16x128xf32> -> vector<16x128xf32>
    %81 = vector.broadcast %79 : vector<1x128xf32> to vector<16x128xf32>
    %82 = arith.addf %80, %81 : vector<16x128xf32>
    %cst_40 = arith.constant 0.000000e+00 : f32
    %83 = vector.broadcast %cst_40 : f32 to vector<16x128xf32>
    %84 = arith.maximumf %82, %83 : vector<16x128xf32>
    %85 = arith.truncf %84 : vector<16x128xf32> to vector<16x128xbf16>
    %c1152 = arith.constant 1152 : index
    %c0_41 = arith.constant 0 : index
    %86 = vector.load %arg4[%c1152, %c0_41] : memref<1536x256xbf16, #tpu.memory_space<vmem>>, vector<128x256xbf16>
    %c7 = arith.constant 7 : index
    %c0_42 = arith.constant 0 : index
    %87 = vector.load %arg7[%c7, %c0_42] : memref<16x512xf32, #tpu.memory_space<vmem>>, vector<1x256xf32>
    %cst_43 = arith.constant dense<0.000000e+00> : vector<16x256xf32>
    %88 = tpu.matmul %85, %86, %cst_43 {dimension_numbers = #tpu.dot_dimension_numbers<[1], [0], [0], [1], [0, 0, 1, 1], [], []>} : vector<16x128xbf16>, vector<128x256xbf16>, vector<16x256xf32> -> vector<16x256xf32>
    %89 = vector.broadcast %87 : vector<1x256xf32> to vector<16x256xf32>
    %90 = arith.addf %88, %89 : vector<16x256xf32>
    %cst_44 = arith.constant 0.000000e+00 : f32
    %91 = vector.broadcast %cst_44 : f32 to vector<16x256xf32>
    %92 = arith.maximumf %90, %91 : vector<16x256xf32>
    %93 = arith.truncf %92 : vector<16x256xf32> to vector<16x256xbf16>
    %c1280 = arith.constant 1280 : index
    %c0_45 = arith.constant 0 : index
    %94 = vector.load %arg4[%c1280, %c0_45] : memref<1536x256xbf16, #tpu.memory_space<vmem>>, vector<256x256xbf16>
    %c8 = arith.constant 8 : index
    %c0_46 = arith.constant 0 : index
    %95 = vector.load %arg7[%c8, %c0_46] : memref<16x512xf32, #tpu.memory_space<vmem>>, vector<1x256xf32>
    %cst_47 = arith.constant dense<0.000000e+00> : vector<16x256xf32>
    %96 = tpu.matmul %93, %94, %cst_47 {dimension_numbers = #tpu.dot_dimension_numbers<[1], [0], [0], [1], [0, 0, 1, 1], [], []>} : vector<16x256xbf16>, vector<256x256xbf16>, vector<16x256xf32> -> vector<16x256xf32>
    %97 = vector.broadcast %95 : vector<1x256xf32> to vector<16x256xf32>
    %98 = arith.addf %96, %97 : vector<16x256xf32>
    %cst_48 = arith.constant 0.000000e+00 : f32
    %99 = vector.broadcast %cst_48 : f32 to vector<16x256xf32>
    %100 = arith.maximumf %98, %99 : vector<16x256xf32>
    %101 = arith.truncf %100 : vector<16x256xf32> to vector<16x256xbf16>
    %c512 = arith.constant 512 : index
    %c0_49 = arith.constant 0 : index
    %102 = vector.load %arg5[%c512, %c0_49] : memref<768x384xbf16, #tpu.memory_space<vmem>>, vector<256x384xbf16>
    %c9 = arith.constant 9 : index
    %c0_50 = arith.constant 0 : index
    %103 = vector.load %arg7[%c9, %c0_50] : memref<16x512xf32, #tpu.memory_space<vmem>>, vector<1x384xf32>
    %cst_51 = arith.constant dense<0.000000e+00> : vector<16x384xf32>
    %104 = tpu.matmul %101, %102, %cst_51 {dimension_numbers = #tpu.dot_dimension_numbers<[1], [0], [0], [1], [0, 0, 1, 1], [], []>} : vector<16x256xbf16>, vector<256x384xbf16>, vector<16x384xf32> -> vector<16x384xf32>
    %105 = vector.broadcast %103 : vector<1x384xf32> to vector<16x384xf32>
    %106 = arith.addf %104, %105 : vector<16x384xf32>
    %cst_52 = arith.constant 0.000000e+00 : f32
    %107 = vector.broadcast %cst_52 : f32 to vector<16x384xf32>
    %108 = arith.maximumf %106, %107 : vector<16x384xf32>
    %109 = arith.truncf %108 : vector<16x384xf32> to vector<16x384xbf16>
    %c128 = arith.constant 128 : index
    %c0_53 = arith.constant 0 : index
    %110 = vector.load %arg6[%c128, %c0_53] : memref<512x512xbf16, #tpu.memory_space<vmem>>, vector<384x512xbf16>
    %c10 = arith.constant 10 : index
    %c0_54 = arith.constant 0 : index
    %111 = vector.load %arg7[%c10, %c0_54] : memref<16x512xf32, #tpu.memory_space<vmem>>, vector<1x512xf32>
    %cst_55 = arith.constant dense<0.000000e+00> : vector<16x512xf32>
    %112 = tpu.matmul %109, %110, %cst_55 {dimension_numbers = #tpu.dot_dimension_numbers<[1], [0], [0], [1], [0, 0, 1, 1], [], []>} : vector<16x384xbf16>, vector<384x512xbf16>, vector<16x512xf32> -> vector<16x512xf32>
    %113 = vector.broadcast %111 : vector<1x512xf32> to vector<16x512xf32>
    %114 = arith.addf %112, %113 : vector<16x512xf32>
    %cst_56 = arith.constant 0.000000e+00 : f32
    %115 = vector.broadcast %cst_56 : f32 to vector<16x512xf32>
    %116 = arith.maximumf %114, %115 : vector<16x512xf32>
    %117 = arith.truncf %116 : vector<16x512xf32> to vector<16x512xbf16>
    %c128_57 = arith.constant 128 : index
    %c0_58 = arith.constant 0 : index
    %118 = vector.load %arg3[%c128_57, %c0_58] : memref<640x128xbf16, #tpu.memory_space<vmem>>, vector<512x128xbf16>
    %c11 = arith.constant 11 : index
    %c0_59 = arith.constant 0 : index
    %119 = vector.load %arg7[%c11, %c0_59] : memref<16x512xf32, #tpu.memory_space<vmem>>, vector<1x128xf32>
    %cst_60 = arith.constant dense<0.000000e+00> : vector<16x128xf32>
    %120 = tpu.matmul %117, %118, %cst_60 {dimension_numbers = #tpu.dot_dimension_numbers<[1], [0], [0], [1], [0, 0, 1, 1], [], []>} : vector<16x512xbf16>, vector<512x128xbf16>, vector<16x128xf32> -> vector<16x128xf32>
    %121 = vector.broadcast %119 : vector<1x128xf32> to vector<16x128xf32>
    %122 = arith.addf %120, %121 : vector<16x128xf32>
    %123 = arith.negf %122 : vector<16x128xf32>
    %124 = math.exp %123 : vector<16x128xf32>
    %cst_61 = arith.constant 1.000000e+00 : f32
    %125 = vector.broadcast %cst_61 : f32 to vector<16x128xf32>
    %126 = arith.addf %125, %124 : vector<16x128xf32>
    %127 = arith.divf %125, %126 : vector<16x128xf32>
    %c0_62 = arith.constant 0 : index
    %c0_63 = arith.constant 0 : index
    %128 = vector.load %arg8[%c0_62, %c0_63] : memref<16x128xf32, #tpu.memory_space<vmem>>, vector<16x128xf32>
    tpu.vector_store %arg8[%c0_62, %c0_63], %127 {strides = array<i32>} : memref<16x128xf32, #tpu.memory_space<vmem>>, vector<16x128xf32>,
    return
  }
  func.func @transform_0(%arg0: i32) -> (i32, i32) {
    %c0_i32 = arith.constant 0 : i32
    %c0_i32_0 = arith.constant 0 : i32
    return %arg0, %c0_i32 : i32, i32
  }
  func.func @transform_1(%arg0: i32) -> (i32, i32) {
    %c0_i32 = arith.constant 0 : i32
    %c0_i32_0 = arith.constant 0 : i32
    return %arg0, %c0_i32 : i32, i32
  }
  func.func @transform_2(%arg0: i32) -> (i32, i32) {
    %c0_i32 = arith.constant 0 : i32
    %c0_i32_0 = arith.constant 0 : i32
    %c0_i32_1 = arith.constant 0 : i32
    return %c0_i32, %c0_i32_0 : i32, i32
  }
  func.func @transform_3(%arg0: i32) -> (i32, i32) {
    %c0_i32 = arith.constant 0 : i32
    %c0_i32_0 = arith.constant 0 : i32
    %c0_i32_1 = arith.constant 0 : i32
    return %c0_i32, %c0_i32_0 : i32, i32
  }
  func.func @transform_4(%arg0: i32) -> (i32, i32) {
    %c0_i32 = arith.constant 0 : i32
    %c0_i32_0 = arith.constant 0 : i32
    %c0_i32_1 = arith.constant 0 : i32
    return %c0_i32, %c0_i32_0 : i32, i32
  }
  func.func @transform_5(%arg0: i32) -> (i32, i32) {
    %c0_i32 = arith.constant 0 : i32
    %c0_i32_0 = arith.constant 0 : i32
    %c0_i32_1 = arith.constant 0 : i32
    return %c0_i32, %c0_i32_0 : i32, i32
  }
  func.func @transform_6(%arg0: i32) -> (i32, i32) {
    %c0_i32 = arith.constant 0 : i32
    %c0_i32_0 = arith.constant 0 : i32
    %c0_i32_1 = arith.constant 0 : i32
    return %c0_i32, %c0_i32_0 : i32, i32
  }
  func.func @transform_7(%arg0: i32) -> (i32, i32) {
    %c0_i32 = arith.constant 0 : i32
    %c0_i32_0 = arith.constant 0 : i32
    return %arg0, %c0_i32 : i32, i32
  }
  func.func @transform_8(%arg0: i32) -> (i32, i32, i32) {
    %c0_i32 = arith.constant 0 : i32
    %c0_i32_0 = arith.constant 0 : i32
    %c0_i32_1 = arith.constant 0 : i32
    return %arg0, %c0_i32, %c0_i32_0 : i32, i32, i32
  }
}

</mosaic_0001>

<llo_original>
// kernel: tpu_custom_call.1
$region0: #{tpu_custom_call.1}
  #allocation0 [shape = 'u32[]', space=smem, size = 0x4, offset = 0x4, fixed_abs, tag = 'smem constant byte address 0x4 - core index']
  #allocation1 [shape = 'u32[144,128]{1,0:T(1,128)}', space=vmem, size = 0x12000, scoped, tag = 'internal scratch']
  %s0 = inlined_call_operand.hbm [shape: f32[48,128], index: 0, kind: input, shape index: {}]
  %s1 = inlined_call_operand.hbm [shape: f32[48,128], index: 1, kind: input, shape index: {}]
  %s2 = inlined_call_operand.hbm [shape: bf16[640,128], index: 2, kind: input, shape index: {}]
  %s3 = inlined_call_operand.hbm [shape: bf16[1536,256], index: 3, kind: input, shape index: {}]
  %s4 = inlined_call_operand.hbm [shape: bf16[768,384], index: 4, kind: input, shape index: {}]
  %s5 = inlined_call_operand.hbm [shape: bf16[512,512], index: 5, kind: input, shape index: {}]
  %s6 = inlined_call_operand.hbm [shape: f32[16,512], index: 6, kind: input, shape index: {}]
  %s7 = inlined_call_operand.hbm [shape: f32[48,128], index: 7, kind: output, shape index: {0}]
  %s8 = inlined_call_operand.hbm [shape: f32[3,1,128], index: 8, kind: output, shape index: {1}]
  %9 = xla_tuple %s7, %s8
  %s10 = sld [smem:[#allocation0]]
  $region97: #{tpu_custom_call.1} parent=0
    _
  %s12 = ssub.s32 1, %s10
  %s13 = scalar_select 0, %s12, %s10
  $region1: #{tpu_custom_call.1} parent=0
    #allocation2 [shape = 'u8[16384]{0}', space=vmem, size = 0x4000, scoped, tag = 'input window, operand 0']
    #allocation3 [shape = 's32[2]{0}', space=sflag, size = 0x8, scoped, tag = 'scoped memory for tpu_custom_call.1']
    #allocation4 [shape = 's32[2]{0}', space=sflag, size = 0x8, scoped, tag = 'scoped memory for tpu_custom_call.1']
    #allocation5 [shape = 'u8[16384]{0}', space=vmem, size = 0x4000, scoped, tag = 'input window, operand 1']
    #allocation6 [shape = 's32[2]{0}', space=sflag, size = 0x8, scoped, tag = 'scoped memory for tpu_custom_call.1']
    #allocation7 [shape = 'u8[163840]{0}', space=vmem, size = 0x28000, scoped, tag = 'input window, operand 2, single buffered']
    #allocation8 [shape = 'u8[786432]{0}', space=vmem, size = 0xc0000, scoped, tag = 'input window, operand 3, single buffered']
    #allocation9 [shape = 's32[1]{0}', space=sflag, size = 0x4, scoped, tag = 'scoped memory for tpu_custom_call.1']
    #allocation10 [shape = 'u8[589824]{0}', space=vmem, size = 0x90000, scoped, tag = 'input window, operand 4, single buffered']
    #allocation11 [shape = 'u8[524288]{0}', space=vmem, size = 0x80000, scoped, tag = 'input window, operand 5, single buffered']
    #allocation12 [shape = 's32[1]{0}', space=sflag, size = 0x4, scoped, tag = 'scoped memory for tpu_custom_call.1']
    #allocation13 [shape = 'u8[32768]{0}', space=vmem, size = 0x8000, scoped, tag = 'input window, operand 6, single buffered']
    #allocation14 [shape = 'u8[16384]{0}', space=vmem, size = 0x4000, scoped, tag = 'output window, operand 0']
    #allocation15 [shape = 'u8[1024]{0}', space=vmem, size = 0x400, scoped, tag = 'output window, operand 1']
    #allocation16 [shape = 's32[2]{0}', space=sflag, size = 0x8, scoped, tag = 'scoped memory for tpu_custom_call.1']
    %14 = vsyncpa [#allocation3], 0
    %s15 = scalar_lea.sflag [#allocation3], 1
    %16 = vsyncpa %s15, 0
    %17 = vsyncpa [#allocation6], 0
    %s18 = scalar_lea.sflag [#allocation6], 1
    %19 = vsyncpa %s18, 0
    %20 = vsyncpa [#allocation9], 0
    %21 = vsyncpa [#allocation12], 0
    %22 = vsyncpa [#allocation4], 0
    %s23 = scalar_lea.sflag [#allocation4], 1
    %24 = vsyncpa %s23, 0
    %25 = vsyncpa [#allocation16], 0
    %s26 = scalar_lea.sflag [#allocation16], 1
    %27 = vsyncpa %s26, 0
    loop: start=0, step=1, limit=5
    $region2: #{tpu_custom_call.1} parent=1 // loop_pre_header
      _
    $region3: #{tpu_custom_call.1} parent=1 // loop_header
      %s29 = sphi 0, %s33
      %p30 = scmp.ge.s32.totalorder %s29, 5
      %s39 = sphi 0, %s41
      %s42 = sphi 0, %s39
      %s43 = sphi 0, %s42
      %s59 = sphi 0, %s43
      %s65 = sphi 0, %s67
      %s68 = sphi 0, %s65
      %s69 = sphi 0, %s68
      %s85 = sphi 0, %s69
      %s89 = sphi 0, %s89
      %s91 = sphi 0, %s89
      %s92 = sphi 0, %s91
      %s106 = sphi 0, %s92
      %s110 = sphi 0, %s110
      %s112 = sphi 0, %s110
      %s113 = sphi 0, %s112
      %s127 = sphi 0, %s113
      %s131 = sphi 0, %s131
      %s133 = sphi 0, %s131
      %s134 = sphi 0, %s133
      %s148 = sphi 0, %s134
      %s152 = sphi 0, %s152
      %s154 = sphi 0, %s152
      %s155 = sphi 0, %s154
      %s169 = sphi 0, %s155
      %s173 = sphi 0, %s173
      %s175 = sphi 0, %s173
      %s176 = sphi 0, %s175
      %s190 = sphi 0, %s176
      %s196 = sphi 0, %s198
      %s199 = sphi 0, %s196
      %s200 = sphi 0, %s199
      %s216 = sphi 0, %s200
      %s222 = sphi 0, %s224
      %s225 = sphi 0, %s222
      %s226 = sphi 0, %s225
      %s242 = sphi 0, %s226
    $region4: #{tpu_custom_call.1} parent=1 // loop_header_branch
      %32 = sbr.rel (%p30) target = $region8
    $region5: #{tpu_custom_call.1} parent=1 // loop_body
      %s34 = ssub.s32 %s29, 1
      %s35 = ssub.s32 %s29, 2
      %s36 = sadd.s32 %s29, 1
      %s37 = ssub.s32 %s29, %s36
      %p38 = scmp.eq.s32.totalorder %s37, 0
      %s40 = sadd.s32 %s39, 1
      %s41 = scalar_select %p38, %s39, %s40
      %p44 = pneg %p38
      %p45 = scmp.eq.s32.totalorder %s29, 2
      %p46 = por %p44, %p45
      %p47 = scmp.ne.s32.totalorder %s39, %s42
      %p48 = scmp.eq.s32.totalorder %s29, 0
      %p49 = por %p47, %p48
      %p50 = scmp.ne.s32.totalorder %s39, %s42
      %p51 = scmp.eq.s32.totalorder %s34, 2
      %p52 = por %p50, %p51
      %p53 = scmp.ne.s32.totalorder %s42, %s43
      %p54 = scmp.eq.s32.totalorder %s34, 0
      %p55 = por %p53, %p54
      %p56 = scmp.ne.s32.totalorder %s42, %s43
      %p57 = scmp.eq.s32.totalorder %s35, 2
      %p58 = por %p56, %p57
      %p60 = scmp.ne.s32.totalorder %s43, %s59
      %p61 = scmp.eq.s32.totalorder %s35, 0
      %p62 = por %p60, %p61
      %s63 = ssub.s32 %s29, %s36
      %p64 = scmp.eq.s32.totalorder %s63, 0
      %s66 = sadd.s32 %s65, 1
      %s67 = scalar_select %p64, %s65, %s66
      %p70 = pneg %p64
      %p71 = scmp.eq.s32.totalorder %s29, 2
      %p72 = por %p70, %p71
      %p73 = scmp.ne.s32.totalorder %s65, %s68
      %p74 = scmp.eq.s32.totalorder %s29, 0
      %p75 = por %p73, %p74
      %p76 = scmp.ne.s32.totalorder %s65, %s68
      %p77 = scmp.eq.s32.totalorder %s34, 2
      %p78 = por %p76, %p77
      %p79 = scmp.ne.s32.totalorder %s68, %s69
      %p80 = scmp.eq.s32.totalorder %s34, 0
      %p81 = por %p79, %p80
      %p82 = scmp.ne.s32.totalorder %s68, %s69
      %p83 = scmp.eq.s32.totalorder %s35, 2
      %p84 = por %p82, %p83
      %p86 = scmp.ne.s32.totalorder %s69, %s85
      %p87 = scmp.eq.s32.totalorder %s35, 0
      %p88 = por %p86, %p87
      %s90 = sadd.s32 %s89, 1
      %p93 = scmp.eq.s32.totalorder %s29, 2
      %p94 = scmp.ne.s32.totalorder %s89, %s91
      %p95 = scmp.eq.s32.totalorder %s29, 0
      %p96 = por %p94, %p95
      %p97 = scmp.ne.s32.totalorder %s89, %s91
      %p98 = scmp.eq.s32.totalorder %s34, 2
      %p99 = por %p97, %p98
      %p100 = scmp.ne.s32.totalorder %s91, %s92
      %p101 = scmp.eq.s32.totalorder %s34, 0
      %p102 = por %p100, %p101
      %p103 = scmp.ne.s32.totalorder %s91, %s92
      %p104 = scmp.eq.s32.totalorder %s35, 2
      %p105 = por %p103, %p104
      %p107 = scmp.ne.s32.totalorder %s92, %s106
      %p108 = scmp.eq.s32.totalorder %s35, 0
      %p109 = por %p107, %p108
      %s111 = sadd.s32 %s110, 1
      %p114 = scmp.eq.s32.totalorder %s29, 2
      %p115 = scmp.ne.s32.totalorder %s110, %s112
      %p116 = scmp.eq.s32.totalorder %s29, 0
      %p117 = por %p115, %p116
      %p118 = scmp.ne.s32.totalorder %s110, %s112
      %p119 = scmp.eq.s32.totalorder %s34, 2
      %p120 = por %p118, %p119
      %p121 = scmp.ne.s32.totalorder %s112, %s113
      %p122 = scmp.eq.s32.totalorder %s34, 0
      %p123 = por %p121, %p122
      %p124 = scmp.ne.s32.totalorder %s112, %s113
      %p125 = scmp.eq.s32.totalorder %s35, 2
      %p126 = por %p124, %p125
      %p128 = scmp.ne.s32.totalorder %s113, %s127
      %p129 = scmp.eq.s32.totalorder %s35, 0
      %p130 = por %p128, %p129
      %s132 = sadd.s32 %s131, 1
      %p135 = scmp.eq.s32.totalorder %s29, 2
      %p136 = scmp.ne.s32.totalorder %s131, %s133
      %p137 = scmp.eq.s32.totalorder %s29, 0
      %p138 = por %p136, %p137
      %p139 = scmp.ne.s32.totalorder %s131, %s133
      %p140 = scmp.eq.s32.totalorder %s34, 2
      %p141 = por %p139, %p140
      %p142 = scmp.ne.s32.totalorder %s133, %s134
      %p143 = scmp.eq.s32.totalorder %s34, 0
      %p144 = por %p142, %p143
      %p145 = scmp.ne.s32.totalorder %s133, %s134
      %p146 = scmp.eq.s32.totalorder %s35, 2
      %p147 = por %p145, %p146
      %p149 = scmp.ne.s32.totalorder %s134, %s148
      %p150 = scmp.eq.s32.totalorder %s35, 0
      %p151 = por %p149, %p150
      %s153 = sadd.s32 %s152, 1
      %p156 = scmp.eq.s32.totalorder %s29, 2
      %p157 = scmp.ne.s32.totalorder %s152, %s154
      %p158 = scmp.eq.s32.totalorder %s29, 0
      %p159 = por %p157, %p158
      %p160 = scmp.ne.s32.totalorder %s152, %s154
      %p161 = scmp.eq.s32.totalorder %s34, 2
      %p162 = por %p160, %p161
      %p163 = scmp.ne.s32.totalorder %s154, %s155
      %p164 = scmp.eq.s32.totalorder %s34, 0
      %p165 = por %p163, %p164
      %p166 = scmp.ne.s32.totalorder %s154, %s155
      %p167 = scmp.eq.s32.totalorder %s35, 2
      %p168 = por %p166, %p167
      %p170 = scmp.ne.s32.totalorder %s155, %s169
      %p171 = scmp.eq.s32.totalorder %s35, 0
      %p172 = por %p170, %p171
      %s174 = sadd.s32 %s173, 1
      %p177 = scmp.eq.s32.totalorder %s29, 2
      %p178 = scmp.ne.s32.totalorder %s173, %s175
      %p179 = scmp.eq.s32.totalorder %s29, 0
      %p180 = por %p178, %p179
      %p181 = scmp.ne.s32.totalorder %s173, %s175
      %p182 = scmp.eq.s32.totalorder %s34, 2
      %p183 = por %p181, %p182
      %p184 = scmp.ne.s32.totalorder %s175, %s176
      %p185 = scmp.eq.s32.totalorder %s34, 0
      %p186 = por %p184, %p185
      %p187 = scmp.ne.s32.totalorder %s175, %s176
      %p188 = scmp.eq.s32.totalorder %s35, 2
      %p189 = por %p187, %p188
      %p191 = scmp.ne.s32.totalorder %s176, %s190
      %p192 = scmp.eq.s32.totalorder %s35, 0
      %p193 = por %p191, %p192
      %s194 = ssub.s32 %s29, %s36
      %p195 = scmp.eq.s32.totalorder %s194, 0
      %s197 = sadd.s32 %s196, 1
      %s198 = scalar_select %p195, %s196, %s197
      %p201 = pneg %p195
      %p202 = scmp.eq.s32.totalorder %s29, 2
      %p203 = por %p201, %p202
      %p204 = scmp.ne.s32.totalorder %s196, %s199
      %p205 = scmp.eq.s32.totalorder %s29, 0
      %p206 = por %p204, %p205
      %p207 = scmp.ne.s32.totalorder %s196, %s199
      %p208 = scmp.eq.s32.totalorder %s34, 2
      %p209 = por %p207, %p208
      %p210 = scmp.ne.s32.totalorder %s199, %s200
      %p211 = scmp.eq.s32.totalorder %s34, 0
      %p212 = por %p210, %p211
      %p213 = scmp.ne.s32.totalorder %s199, %s200
      %p214 = scmp.eq.s32.totalorder %s35, 2
      %p215 = por %p213, %p214
      %p217 = scmp.ne.s32.totalorder %s200, %s216
      %p218 = scmp.eq.s32.totalorder %s35, 0
      %p219 = por %p217, %p218
      %s220 = ssub.s32 %s29, %s36
      %p221 = scmp.eq.s32.totalorder %s220, 0
      %s223 = sadd.s32 %s222, 1
      %s224 = scalar_select %p221, %s222, %s223
      %p227 = pneg %p221
      %p228 = scmp.eq.s32.totalorder %s29, 2
      %p229 = por %p227, %p228
      %p230 = scmp.ne.s32.totalorder %s222, %s225
      %p231 = scmp.eq.s32.totalorder %s29, 0
      %p232 = por %p230, %p231
      %p233 = scmp.ne.s32.totalorder %s222, %s225
      %p234 = scmp.eq.s32.totalorder %s34, 2
      %p235 = por %p233, %p234
      %p236 = scmp.ne.s32.totalorder %s225, %s226
      %p237 = scmp.eq.s32.totalorder %s34, 0
      %p238 = por %p236, %p237
      %p239 = scmp.ne.s32.totalorder %s225, %s226
      %p240 = scmp.eq.s32.totalorder %s35, 2
      %p241 = por %p239, %p240
      %p243 = scmp.ne.s32.totalorder %s226, %s242
      %p244 = scmp.eq.s32.totalorder %s35, 0
      %p245 = por %p243, %p244
      %p246 = scmp.le.s32.totalorder 1, %s29
      %p247 = scmp.lt.s32.totalorder %s29, 4
      %p248 = pnand %p246, %p247
      %p249 = pneg %p248
      // Predicated region
      $region9: #{tpu_custom_call.1} parent=5 // pred_check
        _
      $region10: #{tpu_custom_call.1} parent=5 // pred_check_branch
        %251 = sbr.rel (%p248) target = $region12
      $region11: #{tpu_custom_call.1} parent=5 // pred_region
        %s252 = ssub.s32 %s29, 1
        // Predicated region
        $region13: #{tpu_custom_call.1} parent=11 // pred_check
          %p253 = pneg %p102
        $region14: #{tpu_custom_call.1} parent=11 // pred_check_branch
          %255 = sbr.rel (%p253) target = $region16
        $region15: #{tpu_custom_call.1} parent=11 // pred_region
          %s257 = ssub.s32 5120, 5120
          %258 = vsyncadd [#allocation6], %s257
          %s259 = sshll.u32 [#allocation7], 4
          %s260 = int_to_ptr.vmem [resolvable:$true] %s259
          %265 = dma.hbm_to_vmem [thread:$0]  %s2, 5120, %s260, [#allocation6], 64, 64, 4
        $region16: #{tpu_custom_call.1} parent=11 // pred_fallthru
          _
        // Predicated region
        $region17: #{tpu_custom_call.1} parent=11 // pred_check
          %p266 = pneg %p123
        $region18: #{tpu_custom_call.1} parent=11 // pred_check_branch
          %268 = sbr.rel (%p266) target = $region20
        $region19: #{tpu_custom_call.1} parent=11 // pred_region
          %s270 = ssub.s32 24576, 24576
          %271 = vsyncadd [#allocation9], %s270
          %s272 = sshll.u32 [#allocation8], 4
          %s273 = int_to_ptr.vmem [resolvable:$true] %s272
          %278 = dma.hbm_to_vmem [thread:$0]  %s3, 24576, %s273, [#allocation9], 128, 128, 8
        $region20: #{tpu_custom_call.1} parent=11 // pred_fallthru
          _
        // Predicated region
        $region21: #{tpu_custom_call.1} parent=11 // pred_check
          %p279 = pneg %p144
        $region22: #{tpu_custom_call.1} parent=11 // pred_check_branch
          %281 = sbr.rel (%p279) target = $region24
        $region23: #{tpu_custom_call.1} parent=11 // pred_region
          %s283 = ssub.s32 18432, 18432
          %284 = vsyncadd [#allocation9], %s283
          %s285 = sshll.u32 [#allocation10], 4
          %s286 = int_to_ptr.vmem [resolvable:$true] %s285
          %291 = dma.hbm_to_vmem [thread:$0]  %s4, 18432, %s286, [#allocation9], 192, 192, 12
        $region24: #{tpu_custom_call.1} parent=11 // pred_fallthru
          _
        // Predicated region
        $region25: #{tpu_custom_call.1} parent=11 // pred_check
          %p292 = pneg %p165
        $region26: #{tpu_custom_call.1} parent=11 // pred_check_branch
          %294 = sbr.rel (%p292) target = $region28
        $region27: #{tpu_custom_call.1} parent=11 // pred_region
          %s296 = ssub.s32 16384, 16384
          %297 = vsyncadd [#allocation12], %s296
          %s298 = sshll.u32 [#allocation11], 4
          %s299 = int_to_ptr.vmem [resolvable:$true] %s298
          %304 = dma.hbm_to_vmem [thread:$0]  %s5, 16384, %s299, [#allocation12], 256, 256, 16
        $region28: #{tpu_custom_call.1} parent=11 // pred_fallthru
          _
        // Predicated region
        $region29: #{tpu_custom_call.1} parent=11 // pred_check
          %p305 = pneg %p186
        $region30: #{tpu_custom_call.1} parent=11 // pred_check_branch
          %307 = sbr.rel (%p305) target = $region32
        $region31: #{tpu_custom_call.1} parent=11 // pred_region
          %s309 = ssub.s32 1024, 1024
          %310 = vsyncadd [#allocation12], %s309
          %s311 = sshll.u32 [#allocation13], 4
          %s312 = int_to_ptr.vmem [resolvable:$true] %s311
          %317 = dma.hbm_to_vmem [thread:$0]  %s6, 1024, %s312, [#allocation12], 512, 512, 32
        $region32: #{tpu_custom_call.1} parent=11 // pred_fallthru
          _
      $region12: #{tpu_custom_call.1} parent=5 // pred_fallthru
        _
      %p318 = scmp.lt.s32.totalorder %s29, 3
      // Predicated region
      $region33: #{tpu_custom_call.1} parent=5 // pred_check
        %p319 = pneg %p318
      $region34: #{tpu_custom_call.1} parent=5 // pred_check_branch
        %321 = sbr.rel (%p319) target = $region36
      $region35: #{tpu_custom_call.1} parent=5 // pred_region
        // Predicated region
        $region37: #{tpu_custom_call.1} parent=35 // pred_check
          %p322 = pneg %p49
        $region38: #{tpu_custom_call.1} parent=35 // pred_check_branch
          %324 = sbr.rel (%p322) target = $region40
        $region39: #{tpu_custom_call.1} parent=35 // pred_region
          %s325 = sand.u32 %s39, 1
          %s326 = scalar_lea.sflag [#allocation3], %s325
          %s327 = sand.u32 %s39, 1
          %s328 = smul.addr %s327, 16
          %s329 = scalar_lea.vmem [#allocation2], %s328
          %s330 = smul.u32 2, %s29
          %s332 = ssub.s32 256, 256
          %333 = vsyncadd %s326, %s332
          %s334 = smul.addr %s330, 128
          %s335 = scalar_lea.hbm %s0, %s334
          %s336 = sshll.u32 %s329, 4
          %s337 = int_to_ptr.vmem [resolvable:$true] %s336
          %342 = dma.hbm_to_vmem [thread:$0]  %s335, 256, %s337, %s326, 128, 128, 8
        $region40: #{tpu_custom_call.1} parent=35 // pred_fallthru
          _
        // Predicated region
        $region41: #{tpu_custom_call.1} parent=35 // pred_check
          %p343 = pneg %p75
        $region42: #{tpu_custom_call.1} parent=35 // pred_check_branch
          %345 = sbr.rel (%p343) target = $region44
        $region43: #{tpu_custom_call.1} parent=35 // pred_region
          %s346 = sand.u32 %s29, 1
          %s347 = scalar_lea.sflag [#allocation6], %s346
          %s348 = sand.u32 %s65, 1
          %s349 = smul.addr %s348, 16
          %s350 = scalar_lea.vmem [#allocation5], %s349
          %s351 = smul.u32 2, %s29
          %s353 = ssub.s32 256, 256
          %354 = vsyncadd %s347, %s353
          %s355 = smul.addr %s351, 128
          %s356 = scalar_lea.hbm %s1, %s355
          %s357 = sshll.u32 %s350, 4
          %s358 = int_to_ptr.vmem [resolvable:$true] %s357
          %363 = dma.hbm_to_vmem [thread:$0]  %s356, 256, %s358, %s347, 128, 128, 8
        $region44: #{tpu_custom_call.1} parent=35 // pred_fallthru
          _
      $region36: #{tpu_custom_call.1} parent=5 // pred_fallthru
        _
      %p364 = scmp.le.s32.totalorder 1, %s29
      %p365 = scmp.lt.s32.totalorder %s29, 4
      %p366 = pnand %p364, %p365
      %p367 = pneg %p366
      // Predicated region
      $region45: #{tpu_custom_call.1} parent=5 // pred_check
        _
      $region46: #{tpu_custom_call.1} parent=5 // pred_check_branch
        %369 = sbr.rel (%p366) target = $region48
      $region47: #{tpu_custom_call.1} parent=5 // pred_region
        %s370 = ssub.s32 %s29, 1
        %s371 = sand.u32 %s42, 1
        %s372 = scalar_lea.sflag [#allocation3], %s371
        %s373 = sand.u32 %s42, 1
        %s374 = smul.addr %s373, 16
        %s375 = scalar_lea.vmem [#allocation2], %s374
        // Predicated region
        $region49: #{tpu_custom_call.1} parent=47 // pred_check
          %p376 = pneg %p55
        $region50: #{tpu_custom_call.1} parent=47 // pred_check_branch
          %378 = sbr.rel (%p376) target = $region52
        $region51: #{tpu_custom_call.1} parent=47 // pred_region
          %379 = dma.done %s372, 256
        $region52: #{tpu_custom_call.1} parent=47 // pred_fallthru
          _
        %s380 = sand.u32 %s34, 1
        %s381 = scalar_lea.sflag [#allocation6], %s380
        %s382 = sand.u32 %s68, 1
        %s383 = smul.addr %s382, 16
        %s384 = scalar_lea.vmem [#allocation5], %s383
        // Predicated region
        $region53: #{tpu_custom_call.1} parent=47 // pred_check
          %p385 = pneg %p81
        $region54: #{tpu_custom_call.1} parent=47 // pred_check_branch
          %387 = sbr.rel (%p385) target = $region56
        $region55: #{tpu_custom_call.1} parent=47 // pred_region
          %388 = dma.done %s381, 256
        $region56: #{tpu_custom_call.1} parent=47 // pred_fallthru
          _
        // Predicated region
        $region57: #{tpu_custom_call.1} parent=47 // pred_check
          %p389 = pneg %p102
        $region58: #{tpu_custom_call.1} parent=47 // pred_check_branch
          %391 = sbr.rel (%p389) target = $region60
        $region59: #{tpu_custom_call.1} parent=47 // pred_region
          %392 = dma.done [#allocation6], 5120
        $region60: #{tpu_custom_call.1} parent=47 // pred_fallthru
          _
        // Predicated region
        $region61: #{tpu_custom_call.1} parent=47 // pred_check
          %p393 = pneg %p123
        $region62: #{tpu_custom_call.1} parent=47 // pred_check_branch
          %395 = sbr.rel (%p393) target = $region64
        $region63: #{tpu_custom_call.1} parent=47 // pred_region
          %396 = dma.done [#allocation9], 24576
        $region64: #{tpu_custom_call.1} parent=47 // pred_fallthru
          _
        // Predicated region
        $region65: #{tpu_custom_call.1} parent=47 // pred_check
          %p397 = pneg %p144
        $region66: #{tpu_custom_call.1} parent=47 // pred_check_branch
          %399 = sbr.rel (%p397) target = $region68
        $region67: #{tpu_custom_call.1} parent=47 // pred_region
          %400 = dma.done [#allocation9], 18432
        $region68: #{tpu_custom_call.1} parent=47 // pred_fallthru
          _
        // Predicated region
        $region69: #{tpu_custom_call.1} parent=47 // pred_check
          %p401 = pneg %p165
        $region70: #{tpu_custom_call.1} parent=47 // pred_check_branch
          %403 = sbr.rel (%p401) target = $region72
        $region71: #{tpu_custom_call.1} parent=47 // pred_region
          %404 = dma.done [#allocation12], 16384
        $region72: #{tpu_custom_call.1} parent=47 // pred_fallthru
          _
        // Predicated region
        $region73: #{tpu_custom_call.1} parent=47 // pred_check
          %p405 = pneg %p186
        $region74: #{tpu_custom_call.1} parent=47 // pred_check_branch
          %407 = sbr.rel (%p405) target = $region76
        $region75: #{tpu_custom_call.1} parent=47 // pred_region
          %408 = dma.done [#allocation12], 1024
        $region76: #{tpu_custom_call.1} parent=47 // pred_fallthru
          _
        %s409 = sand.u32 %s42, 1
        %s410 = scalar_lea.sflag [#allocation3], %s409
        %s411 = sand.u32 %s42, 1
        %s412 = smul.addr %s411, 16
        %s413 = scalar_lea.vmem [#allocation2], %s412
        %p414 = pneg %p55
        %p415 = pneg %p52
        %s416 = sand.u32 %s34, 1
        %s417 = scalar_lea.sflag [#allocation6], %s416
        %s418 = sand.u32 %s68, 1
        %s419 = smul.addr %s418, 16
        %s420 = scalar_lea.vmem [#allocation5], %s419
        %p421 = pneg %p81
        %p422 = pneg %p78
        %p423 = pneg %p102
        %p424 = pneg %p99
        %p425 = pneg %p123
        %p426 = pneg %p120
        %p427 = pneg %p144
        %p428 = pneg %p141
        %p429 = pneg %p165
        %p430 = pneg %p162
        %p431 = pneg %p186
        %p432 = pneg %p183
        %p433 = pneg %p212
        %p434 = pneg %p209
        %s435 = sand.u32 %s199, 1
        %s436 = scalar_lea.sflag [#allocation4], %s435
        %s437 = sand.u32 %s199, 1
        %s438 = smul.addr %s437, 16
        %s439 = scalar_lea.vmem [#allocation14], %s438
        %p440 = pneg %p238
        %p441 = pneg %p235
        %s442 = sand.u32 %s225, 1
        %s443 = scalar_lea.sflag [#allocation16], %s442
        %s444 = sand.u32 %s225, 1
        %s445 = scalar_lea.vmem [#allocation15], %s444
        %s446 = smul.u32 2, %s34
        %s447 = smul.u32 2, %s34
        %s448 = smul.u32 2, %s34
        %v450 = vld [vmem:[%s375] sm:$0xff]
        %v451 = vld [vmem:[%s375 + $0x8] sm:$0xff]
        %v452 = vpack.c.bf16 %v451, %v450
        %v453 = vld [vmem:[#allocation11] sm:$0xff]
        %v454 = vld [vmem:[#allocation11 + $0x8] sm:$0xff]
        %v455 = vld [vmem:[#allocation11 + $0x10] sm:$0xff]
        %v456 = vld [vmem:[#allocation11 + $0x18] sm:$0xff]
        %v457 = vld [vmem:[#allocation11 + $0x20] sm:$0xff]
        %v458 = vld [vmem:[#allocation11 + $0x28] sm:$0xff]
        %v459 = vld [vmem:[#allocation11 + $0x30] sm:$0xff]
        %v460 = vld [vmem:[#allocation11 + $0x38] sm:$0xff]
        %v461 = vld [vmem:[#allocation11 + $0x40] sm:$0xff]
        %v462 = vld [vmem:[#allocation11 + $0x48] sm:$0xff]
        %v463 = vld [vmem:[#allocation11 + $0x50] sm:$0xff]
        %v464 = vld [vmem:[#allocation11 + $0x58] sm:$0xff]
        %v465 = vld [vmem:[#allocation11 + $0x60] sm:$0xff]
        %v466 = vld [vmem:[#allocation11 + $0x68] sm:$0xff]
        %v467 = vld [vmem:[#allocation11 + $0x70] sm:$0xff]
        %v468 = vld [vmem:[#allocation11 + $0x78] sm:$0xff]
        %v469 = vld [vmem:[#allocation11 + $0x80] sm:$0xff]
        %v470 = vld [vmem:[#allocation11 + $0x88] sm:$0xff]
        %v471 = vld [vmem:[#allocation11 + $0x90] sm:$0xff]
        %v472 = vld [vmem:[#allocation11 + $0x98] sm:$0xff]
        %v473 = vld [vmem:[#allocation11 + $0xa0] sm:$0xff]
        %v474 = vld [vmem:[#allocation11 + $0xa8] sm:$0xff]
        %v475 = vld [vmem:[#allocation11 + $0xb0] sm:$0xff]
        %v476 = vld [vmem:[#allocation11 + $0xb8] sm:$0xff]
        %v477 = vld [vmem:[#allocation11 + $0xc0] sm:$0xff]
        %v478 = vld [vmem:[#allocation11 + $0xc8] sm:$0xff]
        %v479 = vld [vmem:[#allocation11 + $0xd0] sm:$0xff]
        %v480 = vld [vmem:[#allocation11 + $0xd8] sm:$0xff]
        %v481 = vld [vmem:[#allocation11 + $0xe0] sm:$0xff]
        %v482 = vld [vmem:[#allocation11 + $0xe8] sm:$0xff]
        %v483 = vld [vmem:[#allocation11 + $0xf0] sm:$0xff]
        %v484 = vld [vmem:[#allocation11 + $0xf8] sm:$0xff]
        %v485 = vld [vmem:[#allocation13] ss:$8 sm:$0xf]
        %v487 = vlaneseq
        %v488 = vshrl.u32 %v487, 7
        %v489 = vsub.s32 0, %v488
        %v490 = vrot.slane %v485, %v489
        %v491 = vlaneseq
        %v492 = vshrl.u32 %v491, 7
        %v493 = vsub.s32 1, %v492
        %v494 = vrot.slane %v485, %v493
        %v495 = vlaneseq
        %v496 = vshrl.u32 %v495, 7
        %v497 = vsub.s32 2, %v496
        %v498 = vrot.slane %v485, %v497
        %v499 = vlaneseq
        %v500 = vshrl.u32 %v499, 7
        %v501 = vsub.s32 3, %v500
        %v502 = vrot.slane %v485, %v501
        %v539 = vunpack.c.l.b16 %v453
        %v540 = vunpack.c.h.b16 %v453
        %v541 = vunpack.c.l.b16 %v454
        %v542 = vunpack.c.h.b16 %v454
        %v543 = vunpack.c.l.b16 %v455
        %v544 = vunpack.c.h.b16 %v455
        %v545 = vunpack.c.l.b16 %v456
        %v546 = vunpack.c.h.b16 %v456
        %v547 = vunpack.c.l.b16 %v457
        %v548 = vunpack.c.h.b16 %v457
        %v549 = vunpack.c.l.b16 %v458
        %v550 = vunpack.c.h.b16 %v458
        %v551 = vunpack.c.l.b16 %v459
        %v552 = vunpack.c.h.b16 %v459
        %v553 = vunpack.c.l.b16 %v460
        %v554 = vunpack.c.h.b16 %v460
        %v555 = vunpack.c.l.b16 %v461
        %v556 = vunpack.c.h.b16 %v461
        %v557 = vunpack.c.l.b16 %v462
        %v558 = vunpack.c.h.b16 %v462
        %v559 = vunpack.c.l.b16 %v463
        %v560 = vunpack.c.h.b16 %v463
        %v561 = vunpack.c.l.b16 %v464
        %v562 = vunpack.c.h.b16 %v464
        %v563 = vunpack.c.l.b16 %v465
        %v564 = vunpack.c.h.b16 %v465
        %v565 = vunpack.c.l.b16 %v466
        %v566 = vunpack.c.h.b16 %v466
        %v567 = vunpack.c.l.b16 %v467
        %v568 = vunpack.c.h.b16 %v467
        %v569 = vunpack.c.l.b16 %v468
        %v570 = vunpack.c.h.b16 %v468
        %v571 = vunpack.c.l.b16 %v469
        %v572 = vunpack.c.h.b16 %v469
        %v573 = vunpack.c.l.b16 %v470
        %v574 = vunpack.c.h.b16 %v470
        %v575 = vunpack.c.l.b16 %v471
        %v576 = vunpack.c.h.b16 %v471
        %v577 = vunpack.c.l.b16 %v472
        %v578 = vunpack.c.h.b16 %v472
        %v579 = vunpack.c.l.b16 %v473
        %v580 = vunpack.c.h.b16 %v473
        %v581 = vunpack.c.l.b16 %v474
        %v582 = vunpack.c.h.b16 %v474
        %v583 = vunpack.c.l.b16 %v475
        %v584 = vunpack.c.h.b16 %v475
        %v585 = vunpack.c.l.b16 %v476
        %v586 = vunpack.c.h.b16 %v476
        %v587 = vunpack.c.l.b16 %v477
        %v588 = vunpack.c.h.b16 %v477
        %v589 = vunpack.c.l.b16 %v478
        %v590 = vunpack.c.h.b16 %v478
        %v591 = vunpack.c.l.b16 %v479
        %v592 = vunpack.c.h.b16 %v479
        %v593 = vunpack.c.l.b16 %v480
        %v594 = vunpack.c.h.b16 %v480
        %v595 = vunpack.c.l.b16 %v481
        %v596 = vunpack.c.h.b16 %v481
        %v597 = vunpack.c.l.b16 %v482
        %v598 = vunpack.c.h.b16 %v482
        %v599 = vunpack.c.l.b16 %v483
        %v600 = vunpack.c.h.b16 %v483
        %v601 = vunpack.c.l.b16 %v484
        %v602 = vunpack.c.h.b16 %v484
        %v603 = vpack.c.b16 %v543, %v539
        %v604 = vpack.c.b16 %v544, %v540
        %v605 = vpack.c.b16 %v545, %v541
        %v606 = vpack.c.b16 %v546, %v542
        %v607 = vpack.c.b16 %v551, %v547
        %v608 = vpack.c.b16 %v552, %v548
        %v609 = vpack.c.b16 %v553, %v549
        %v610 = vpack.c.b16 %v554, %v550
        %v611 = vpack.c.b16 %v559, %v555
        %v612 = vpack.c.b16 %v560, %v556
        %v613 = vpack.c.b16 %v561, %v557
        %v614 = vpack.c.b16 %v562, %v558
        %v615 = vpack.c.b16 %v567, %v563
        %v616 = vpack.c.b16 %v568, %v564
        %v617 = vpack.c.b16 %v569, %v565
        %v618 = vpack.c.b16 %v570, %v566
        %v619 = vpack.c.b16 %v575, %v571
        %v620 = vpack.c.b16 %v576, %v572
        %v621 = vpack.c.b16 %v577, %v573
        %v622 = vpack.c.b16 %v578, %v574
        %v623 = vpack.c.b16 %v583, %v579
        %v624 = vpack.c.b16 %v584, %v580
        %v625 = vpack.c.b16 %v585, %v581
        %v626 = vpack.c.b16 %v586, %v582
        %v627 = vpack.c.b16 %v591, %v587
        %v628 = vpack.c.b16 %v592, %v588
        %v629 = vpack.c.b16 %v593, %v589
        %v630 = vpack.c.b16 %v594, %v590
        %v631 = vpack.c.b16 %v599, %v595
        %v632 = vpack.c.b16 %v600, %v596
        %v633 = vpack.c.b16 %v601, %v597
        %v634 = vpack.c.b16 %v602, %v598
        %667 = vmatprep.subr.bf16.mxu0 %v604
        %668 = vmatpush1.bf16.msra.mxu0 %v603
        %669 = vmatprep.subr.bf16.mxu0 %v608
        %670 = vmatpush1.bf16.msra.mxu0 %v607
        %671 = vmatprep.subr.bf16.mxu0 %v612
        %672 = vmatpush1.bf16.msra.mxu0 %v611
        %673 = vmatprep.subr.bf16.mxu0 %v616
        %674 = vmatpush1.bf16.msra.mxu0 %v615
        %675 = vmatprep.subr.bf16.mxu0 %v620
        %676 = vmatpush1.bf16.msra.mxu0 %v619
        %677 = vmatprep.subr.bf16.mxu0 %v624
        %678 = vmatpush1.bf16.msra.mxu0 %v623
        %679 = vmatprep.subr.bf16.mxu0 %v628
        %680 = vmatpush1.bf16.msra.mxu0 %v627
        %681 = vmatprep.subr.bf16.mxu0 %v632
        %682 = vmatpush1.bf16.msra.mxu0 %v631
        %683 = vmatprep.subr.bf16.mxu0 0
        %684 = vmatpush1.bf16.msra.mxu0 0
        %685 = vmatprep.subr.bf16.mxu0 0
        %686 = vmatpush1.bf16.msra.mxu0 0
        %687 = vmatprep.subr.bf16.mxu0 0
        %688 = vmatpush1.bf16.msra.mxu0 0
        %689 = vmatprep.subr.bf16.mxu0 0
        %690 = vmatpush1.bf16.msra.mxu0 0
        %691 = vmatprep.subr.bf16.mxu0 0
        %692 = vmatpush1.bf16.msra.mxu0 0
        %693 = vmatprep.subr.bf16.mxu0 0
        %694 = vmatpush1.bf16.msra.mxu0 0
        %695 = vmatprep.subr.bf16.mxu0 0
        %696 = vmatpush1.bf16.msra.mxu0 0
        %697 = vmatprep.subr.bf16.mxu0 0
        %698 = vmatpush1.bf16.msra.mxu0 0
        %699 = vmatprep.mubr.bf16.mxu0 0
        %700 = vmatmul.mubr.bf16.gmra.mrb[0].mxu0 %v452
        %v701 = vpop.f32.mrb[0].mxu0
        %v702 = vadd.f32 %v490, %v701
        %v703 = vpop.f32.mrb[0].mxu0
        %v704 = vadd.f32 %v494, %v703
        %v705 = vpop.f32.mrb[0].mxu0
        %v706 = vadd.f32 %v490, %v705
        %v707 = vpop.f32.mrb[0].mxu0
        %v708 = vadd.f32 %v494, %v707
        %709 = vdwg.mxu0
        %710 = vmatprep.subr.bf16.mxu0 %v606
        %711 = vmatpush1.bf16.msra.mxu0 %v605
        %712 = vmatprep.subr.bf16.mxu0 %v610
        %713 = vmatpush1.bf16.msra.mxu0 %v609
        %714 = vmatprep.subr.bf16.mxu0 %v614
        %715 = vmatpush1.bf16.msra.mxu0 %v613
        %716 = vmatprep.subr.bf16.mxu0 %v618
        %717 = vmatpush1.bf16.msra.mxu0 %v617
        %718 = vmatprep.subr.bf16.mxu0 %v622
        %719 = vmatpush1.bf16.msra.mxu0 %v621
        %720 = vmatprep.subr.bf16.mxu0 %v626
        %721 = vmatpush1.bf16.msra.mxu0 %v625
        %722 = vmatprep.subr.bf16.mxu0 %v630
        %723 = vmatpush1.bf16.msra.mxu0 %v629
        %724 = vmatprep.subr.bf16.mxu0 %v634
        %725 = vmatpush1.bf16.msra.mxu0 %v633
        %726 = vmatprep.subr.bf16.mxu0 0
        %727 = vmatpush1.bf16.msra.mxu0 0
        %728 = vmatprep.subr.bf16.mxu0 0
        %729 = vmatpush1.bf16.msra.mxu0 0
        %730 = vmatprep.subr.bf16.mxu0 0
        %731 = vmatpush1.bf16.msra.mxu0 0
        %732 = vmatprep.subr.bf16.mxu0 0
        %733 = vmatpush1.bf16.msra.mxu0 0
        %734 = vmatprep.subr.bf16.mxu0 0
        %735 = vmatpush1.bf16.msra.mxu0 0
        %736 = vmatprep.subr.bf16.mxu0 0
        %737 = vmatpush1.bf16.msra.mxu0 0
        %738 = vmatprep.subr.bf16.mxu0 0
        %739 = vmatpush1.bf16.msra.mxu0 0
        %740 = vmatprep.subr.bf16.mxu0 0
        %741 = vmatpush1.bf16.msra.mxu0 0
        %742 = vmatprep.mubr.bf16.mxu0 0
        %743 = vmatmul.mubr.bf16.gmra.mrb[0].mxu0 %v452
        %v744 = vpop.f32.mrb[0].mxu0
        %v745 = vadd.f32 %v498, %v744
        %v746 = vpop.f32.mrb[0].mxu0
        %v747 = vadd.f32 %v502, %v746
        %v748 = vpop.f32.mrb[0].mxu0
        %v749 = vadd.f32 %v498, %v748
        %v750 = vpop.f32.mrb[0].mxu0
        %v751 = vadd.f32 %v502, %v750
        %752 = vdwg.mxu0
        %v753 = vmax.f32 %v702, 0.0
        %v754 = vmax.f32 %v704, 0.0
        %v755 = vmax.f32 %v745, 0.0
        %v756 = vmax.f32 %v747, 0.0
        %v757 = vmax.f32 %v706, 0.0
        %v758 = vmax.f32 %v708, 0.0
        %v759 = vmax.f32 %v749, 0.0
        %v760 = vmax.f32 %v751, 0.0
        %v761 = vpack.c.bf16 %v757, %v753
        %v762 = vpack.c.bf16 %v758, %v754
        %v763 = vpack.c.bf16 %v759, %v755
        %v764 = vpack.c.bf16 %v760, %v756
        %v765 = vld [vmem:[#allocation10] sm:$0xff]
        %v766 = vld [vmem:[#allocation10 + $0x8] sm:$0xf]
        %v767 = vld [vmem:[#allocation10 + $0xc] sm:$0xff]
        %v768 = vld [vmem:[#allocation10 + $0x14] sm:$0xf]
        %v769 = vld [vmem:[#allocation10 + $0x18] sm:$0xff]
        %v770 = vld [vmem:[#allocation10 + $0x20] sm:$0xf]
        %v771 = vld [vmem:[#allocation10 + $0x24] sm:$0xff]
        %v772 = vld [vmem:[#allocation10 + $0x2c] sm:$0xf]
        %v773 = vld [vmem:[#allocation10 + $0x30] sm:$0xff]
        %v774 = vld [vmem:[#allocation10 + $0x38] sm:$0xf]
        %v775 = vld [vmem:[#allocation10 + $0x3c] sm:$0xff]
        %v776 = vld [vmem:[#allocation10 + $0x44] sm:$0xf]
        %v777 = vld [vmem:[#allocation10 + $0x48] sm:$0xff]
        %v778 = vld [vmem:[#allocation10 + $0x50] sm:$0xf]
        %v779 = vld [vmem:[#allocation10 + $0x54] sm:$0xff]
        %v780 = vld [vmem:[#allocation10 + $0x5c] sm:$0xf]
        %v781 = vld [vmem:[#allocation10 + $0x60] sm:$0xff]
        %v782 = vld [vmem:[#allocation10 + $0x68] sm:$0xf]
        %v783 = vld [vmem:[#allocation10 + $0x6c] sm:$0xff]
        %v784 = vld [vmem:[#allocation10 + $0x74] sm:$0xf]
        %v785 = vld [vmem:[#allocation10 + $0x78] sm:$0xff]
        %v786 = vld [vmem:[#allocation10 + $0x80] sm:$0xf]
        %v787 = vld [vmem:[#allocation10 + $0x84] sm:$0xff]
        %v788 = vld [vmem:[#allocation10 + $0x8c] sm:$0xf]
        %v789 = vld [vmem:[#allocation10 + $0x90] sm:$0xff]
        %v790 = vld [vmem:[#allocation10 + $0x98] sm:$0xf]
        %v791 = vld [vmem:[#allocation10 + $0x9c] sm:$0xff]
        %v792 = vld [vmem:[#allocation10 + $0xa4] sm:$0xf]
        %v793 = vld [vmem:[#allocation10 + $0xa8] sm:$0xff]
        %v794 = vld [vmem:[#allocation10 + $0xb0] sm:$0xf]
        %v795 = vld [vmem:[#allocation10 + $0xb4] sm:$0xff]
        %v796 = vld [vmem:[#allocation10 + $0xbc] sm:$0xf]
        %v797 = vld [vmem:[#allocation10 + $0xc0] sm:$0xff]
        %v798 = vld [vmem:[#allocation10 + $0xc8] sm:$0xf]
        %v799 = vld [vmem:[#allocation10 + $0xcc] sm:$0xff]
        %v800 = vld [vmem:[#allocation10 + $0xd4] sm:$0xf]
        %v801 = vld [vmem:[#allocation10 + $0xd8] sm:$0xff]
        %v802 = vld [vmem:[#allocation10 + $0xe0] sm:$0xf]
        %v803 = vld [vmem:[#allocation10 + $0xe4] sm:$0xff]
        %v804 = vld [vmem:[#allocation10 + $0xec] sm:$0xf]
        %v805 = vld [vmem:[#allocation10 + $0xf0] sm:$0xff]
        %v806 = vld [vmem:[#allocation10 + $0xf8] sm:$0xf]
        %v807 = vld [vmem:[#allocation10 + $0xfc] sm:$0xff]
        %v808 = vld [vmem:[#allocation10 + $0x104] sm:$0xf]
        %v809 = vld [vmem:[#allocation10 + $0x108] sm:$0xff]
        %v810 = vld [vmem:[#allocation10 + $0x110] sm:$0xf]
        %v811 = vld [vmem:[#allocation10 + $0x114] sm:$0xff]
        %v812 = vld [vmem:[#allocation10 + $0x11c] sm:$0xf]
        %v813 = vld [vmem:[#allocation10 + $0x120] sm:$0xff]
        %v814 = vld [vmem:[#allocation10 + $0x128] sm:$0xf]
        %v815 = vld [vmem:[#allocation10 + $0x12c] sm:$0xff]
        %v816 = vld [vmem:[#allocation10 + $0x134] sm:$0xf]
        %v817 = vld [vmem:[#allocation10 + $0x138] sm:$0xff]
        %v818 = vld [vmem:[#allocation10 + $0x140] sm:$0xf]
        %v819 = vld [vmem:[#allocation10 + $0x144] sm:$0xff]
        %v820 = vld [vmem:[#allocation10 + $0x14c] sm:$0xf]
        %v821 = vld [vmem:[#allocation10 + $0x150] sm:$0xff]
        %v822 = vld [vmem:[#allocation10 + $0x158] sm:$0xf]
        %v823 = vld [vmem:[#allocation10 + $0x15c] sm:$0xff]
        %v824 = vld [vmem:[#allocation10 + $0x164] sm:$0xf]
        %v825 = vld [vmem:[#allocation10 + $0x168] sm:$0xff]
        %v826 = vld [vmem:[#allocation10 + $0x170] sm:$0xf]
        %v827 = vld [vmem:[#allocation10 + $0x174] sm:$0xff]
        %v828 = vld [vmem:[#allocation10 + $0x17c] sm:$0xf]
        %v829 = vld [vmem:[#allocation10 + $0x180] sm:$0xff]
        %v830 = vld [vmem:[#allocation10 + $0x188] sm:$0xf]
        %v831 = vld [vmem:[#allocation10 + $0x18c] sm:$0xff]
        %v832 = vld [vmem:[#allocation10 + $0x194] sm:$0xf]
        %v833 = vld [vmem:[#allocation10 + $0x198] sm:$0xff]
        %v834 = vld [vmem:[#allocation10 + $0x1a0] sm:$0xf]
        %v835 = vld [vmem:[#allocation10 + $0x1a4] sm:$0xff]
        %v836 = vld [vmem:[#allocation10 + $0x1ac] sm:$0xf]
        %v837 = vld [vmem:[#allocation10 + $0x1b0] sm:$0xff]
        %v838 = vld [vmem:[#allocation10 + $0x1b8] sm:$0xf]
        %v839 = vld [vmem:[#allocation10 + $0x1bc] sm:$0xff]
        %v840 = vld [vmem:[#allocation10 + $0x1c4] sm:$0xf]
        %v841 = vld [vmem:[#allocation10 + $0x1c8] sm:$0xff]
        %v842 = vld [vmem:[#allocation10 + $0x1d0] sm:$0xf]
        %v843 = vld [vmem:[#allocation10 + $0x1d4] sm:$0xff]
        %v844 = vld [vmem:[#allocation10 + $0x1dc] sm:$0xf]
        %v845 = vld [vmem:[#allocation10 + $0x1e0] sm:$0xff]
        %v846 = vld [vmem:[#allocation10 + $0x1e8] sm:$0xf]
        %v847 = vld [vmem:[#allocation10 + $0x1ec] sm:$0xff]
        %v848 = vld [vmem:[#allocation10 + $0x1f4] sm:$0xf]
        %v849 = vld [vmem:[#allocation10 + $0x1f8] sm:$0xff]
        %v850 = vld [vmem:[#allocation10 + $0x200] sm:$0xf]
        %v851 = vld [vmem:[#allocation10 + $0x204] sm:$0xff]
        %v852 = vld [vmem:[#allocation10 + $0x20c] sm:$0xf]
        %v853 = vld [vmem:[#allocation10 + $0x210] sm:$0xff]
        %v854 = vld [vmem:[#allocation10 + $0x218] sm:$0xf]
        %v855 = vld [vmem:[#allocation10 + $0x21c] sm:$0xff]
        %v856 = vld [vmem:[#allocation10 + $0x224] sm:$0xf]
        %v857 = vld [vmem:[#allocation10 + $0x228] sm:$0xff]
        %v858 = vld [vmem:[#allocation10 + $0x230] sm:$0xf]
        %v859 = vld [vmem:[#allocation10 + $0x234] sm:$0xff]
        %v860 = vld [vmem:[#allocation10 + $0x23c] sm:$0xf]
        %v861 = vld [vmem:[#allocation10 + $0x240] sm:$0xff]
        %v862 = vld [vmem:[#allocation10 + $0x248] sm:$0xf]
        %v863 = vld [vmem:[#allocation10 + $0x24c] sm:$0xff]
        %v864 = vld [vmem:[#allocation10 + $0x254] sm:$0xf]
        %v865 = vld [vmem:[#allocation10 + $0x258] sm:$0xff]
        %v866 = vld [vmem:[#allocation10 + $0x260] sm:$0xf]
        %v867 = vld [vmem:[#allocation10 + $0x264] sm:$0xff]
        %v868 = vld [vmem:[#allocation10 + $0x26c] sm:$0xf]
        %v869 = vld [vmem:[#allocation10 + $0x270] sm:$0xff]
        %v870 = vld [vmem:[#allocation10 + $0x278] sm:$0xf]
        %v871 = vld [vmem:[#allocation10 + $0x27c] sm:$0xff]
        %v872 = vld [vmem:[#allocation10 + $0x284] sm:$0xf]
        %v873 = vld [vmem:[#allocation10 + $0x288] sm:$0xff]
        %v874 = vld [vmem:[#allocation10 + $0x290] sm:$0xf]
        %v875 = vld [vmem:[#allocation10 + $0x294] sm:$0xff]
        %v876 = vld [vmem:[#allocation10 + $0x29c] sm:$0xf]
        %v877 = vld [vmem:[#allocation10 + $0x2a0] sm:$0xff]
        %v878 = vld [vmem:[#allocation10 + $0x2a8] sm:$0xf]
        %v879 = vld [vmem:[#allocation10 + $0x2ac] sm:$0xff]
        %v880 = vld [vmem:[#allocation10 + $0x2b4] sm:$0xf]
        %v881 = vld [vmem:[#allocation10 + $0x2b8] sm:$0xff]
        %v882 = vld [vmem:[#allocation10 + $0x2c0] sm:$0xf]
        %v883 = vld [vmem:[#allocation10 + $0x2c4] sm:$0xff]
        %v884 = vld [vmem:[#allocation10 + $0x2cc] sm:$0xf]
        %v885 = vld [vmem:[#allocation10 + $0x2d0] sm:$0xff]
        %v886 = vld [vmem:[#allocation10 + $0x2d8] sm:$0xf]
        %v887 = vld [vmem:[#allocation10 + $0x2dc] sm:$0xff]
        %v888 = vld [vmem:[#allocation10 + $0x2e4] sm:$0xf]
        %v889 = vld [vmem:[#allocation10 + $0x2e8] sm:$0xff]
        %v890 = vld [vmem:[#allocation10 + $0x2f0] sm:$0xf]
        %v891 = vld [vmem:[#allocation10 + $0x2f4] sm:$0xff]
        %v892 = vld [vmem:[#allocation10 + $0x2fc] sm:$0xf]
        %s893 = scalar_lea.vmem [#allocation13], 1
        %v894 = vld [vmem:[%s893] ss:$8 sm:$0x7]
        %v896 = vlaneseq
        %v897 = vshrl.u32 %v896, 7
        %v898 = vsub.s32 0, %v897
        %v899 = vrot.slane %v894, %v898
        %v900 = vlaneseq
        %v901 = vshrl.u32 %v900, 7
        %v902 = vsub.s32 1, %v901
        %v903 = vrot.slane %v894, %v902
        %v904 = vlaneseq
        %v905 = vshrl.u32 %v904, 7
        %v906 = vsub.s32 2, %v905
        %v907 = vrot.slane %v894, %v906
        %v1039 = vunpack.c.l.b16 %v765
        %v1040 = vunpack.c.h.b16 %v765
        %v1041 = vunpack.c.l.b16 %v766
        %v1042 = vunpack.c.l.b16 %v767
        %v1043 = vunpack.c.h.b16 %v767
        %v1044 = vunpack.c.l.b16 %v768
        %v1045 = vunpack.c.l.b16 %v769
        %v1046 = vunpack.c.h.b16 %v769
        %v1047 = vunpack.c.l.b16 %v770
        %v1048 = vunpack.c.l.b16 %v771
        %v1049 = vunpack.c.h.b16 %v771
        %v1050 = vunpack.c.l.b16 %v772
        %v1051 = vunpack.c.l.b16 %v773
        %v1052 = vunpack.c.h.b16 %v773
        %v1053 = vunpack.c.l.b16 %v774
        %v1054 = vunpack.c.l.b16 %v775
        %v1055 = vunpack.c.h.b16 %v775
        %v1056 = vunpack.c.l.b16 %v776
        %v1057 = vunpack.c.l.b16 %v777
        %v1058 = vunpack.c.h.b16 %v777
        %v1059 = vunpack.c.l.b16 %v778
        %v1060 = vunpack.c.l.b16 %v779
        %v1061 = vunpack.c.h.b16 %v779
        %v1062 = vunpack.c.l.b16 %v780
        %v1063 = vunpack.c.l.b16 %v781
        %v1064 = vunpack.c.h.b16 %v781
        %v1065 = vunpack.c.l.b16 %v782
        %v1066 = vunpack.c.l.b16 %v783
        %v1067 = vunpack.c.h.b16 %v783
        %v1068 = vunpack.c.l.b16 %v784
        %v1069 = vunpack.c.l.b16 %v785
        %v1070 = vunpack.c.h.b16 %v785
        %v1071 = vunpack.c.l.b16 %v786
        %v1072 = vunpack.c.l.b16 %v787
        %v1073 = vunpack.c.h.b16 %v787
        %v1074 = vunpack.c.l.b16 %v788
        %v1075 = vunpack.c.l.b16 %v789
        %v1076 = vunpack.c.h.b16 %v789
        %v1077 = vunpack.c.l.b16 %v790
        %v1078 = vunpack.c.l.b16 %v791
        %v1079 = vunpack.c.h.b16 %v791
        %v1080 = vunpack.c.l.b16 %v792
        %v1081 = vunpack.c.l.b16 %v793
        %v1082 = vunpack.c.h.b16 %v793
        %v1083 = vunpack.c.l.b16 %v794
        %v1084 = vunpack.c.l.b16 %v795
        %v1085 = vunpack.c.h.b16 %v795
        %v1086 = vunpack.c.l.b16 %v796
        %v1087 = vunpack.c.l.b16 %v797
        %v1088 = vunpack.c.h.b16 %v797
        %v1089 = vunpack.c.l.b16 %v798
        %v1090 = vunpack.c.l.b16 %v799
        %v1091 = vunpack.c.h.b16 %v799
        %v1092 = vunpack.c.l.b16 %v800
        %v1093 = vunpack.c.l.b16 %v801
        %v1094 = vunpack.c.h.b16 %v801
        %v1095 = vunpack.c.l.b16 %v802
        %v1096 = vunpack.c.l.b16 %v803
        %v1097 = vunpack.c.h.b16 %v803
        %v1098 = vunpack.c.l.b16 %v804
        %v1099 = vunpack.c.l.b16 %v805
        %v1100 = vunpack.c.h.b16 %v805
        %v1101 = vunpack.c.l.b16 %v806
        %v1102 = vunpack.c.l.b16 %v807
        %v1103 = vunpack.c.h.b16 %v807
        %v1104 = vunpack.c.l.b16 %v808
        %v1105 = vunpack.c.l.b16 %v809
        %v1106 = vunpack.c.h.b16 %v809
        %v1107 = vunpack.c.l.b16 %v810
        %v1108 = vunpack.c.l.b16 %v811
        %v1109 = vunpack.c.h.b16 %v811
        %v1110 = vunpack.c.l.b16 %v812
        %v1111 = vunpack.c.l.b16 %v813
        %v1112 = vunpack.c.h.b16 %v813
        %v1113 = vunpack.c.l.b16 %v814
        %v1114 = vunpack.c.l.b16 %v815
        %v1115 = vunpack.c.h.b16 %v815
        %v1116 = vunpack.c.l.b16 %v816
        %v1117 = vunpack.c.l.b16 %v817
        %v1118 = vunpack.c.h.b16 %v817
        %v1119 = vunpack.c.l.b16 %v818
        %v1120 = vunpack.c.l.b16 %v819
        %v1121 = vunpack.c.h.b16 %v819
        %v1122 = vunpack.c.l.b16 %v820
        %v1123 = vunpack.c.l.b16 %v821
        %v1124 = vunpack.c.h.b16 %v821
        %v1125 = vunpack.c.l.b16 %v822
        %v1126 = vunpack.c.l.b16 %v823
        %v1127 = vunpack.c.h.b16 %v823
        %v1128 = vunpack.c.l.b16 %v824
        %v1129 = vunpack.c.l.b16 %v825
        %v1130 = vunpack.c.h.b16 %v825
        %v1131 = vunpack.c.l.b16 %v826
        %v1132 = vunpack.c.l.b16 %v827
        %v1133 = vunpack.c.h.b16 %v827
        %v1134 = vunpack.c.l.b16 %v828
        %v1135 = vunpack.c.l.b16 %v829
        %v1136 = vunpack.c.h.b16 %v829
        %v1137 = vunpack.c.l.b16 %v830
        %v1138 = vunpack.c.l.b16 %v831
        %v1139 = vunpack.c.h.b16 %v831
        %v1140 = vunpack.c.l.b16 %v832
        %v1141 = vunpack.c.l.b16 %v833
        %v1142 = vunpack.c.h.b16 %v833
        %v1143 = vunpack.c.l.b16 %v834
        %v1144 = vunpack.c.l.b16 %v835
        %v1145 = vunpack.c.h.b16 %v835
        %v1146 = vunpack.c.l.b16 %v836
        %v1147 = vunpack.c.l.b16 %v837
        %v1148 = vunpack.c.h.b16 %v837
        %v1149 = vunpack.c.l.b16 %v838
        %v1150 = vunpack.c.l.b16 %v839
        %v1151 = vunpack.c.h.b16 %v839
        %v1152 = vunpack.c.l.b16 %v840
        %v1153 = vunpack.c.l.b16 %v841
        %v1154 = vunpack.c.h.b16 %v841
        %v1155 = vunpack.c.l.b16 %v842
        %v1156 = vunpack.c.l.b16 %v843
        %v1157 = vunpack.c.h.b16 %v843
        %v1158 = vunpack.c.l.b16 %v844
        %v1159 = vunpack.c.l.b16 %v845
        %v1160 = vunpack.c.h.b16 %v845
        %v1161 = vunpack.c.l.b16 %v846
        %v1162 = vunpack.c.l.b16 %v847
        %v1163 = vunpack.c.h.b16 %v847
        %v1164 = vunpack.c.l.b16 %v848
        %v1165 = vunpack.c.l.b16 %v849
        %v1166 = vunpack.c.h.b16 %v849
        %v1167 = vunpack.c.l.b16 %v850
        %v1168 = vunpack.c.l.b16 %v851
        %v1169 = vunpack.c.h.b16 %v851
        %v1170 = vunpack.c.l.b16 %v852
        %v1171 = vunpack.c.l.b16 %v853
        %v1172 = vunpack.c.h.b16 %v853
        %v1173 = vunpack.c.l.b16 %v854
        %v1174 = vunpack.c.l.b16 %v855
        %v1175 = vunpack.c.h.b16 %v855
        %v1176 = vunpack.c.l.b16 %v856
        %v1177 = vunpack.c.l.b16 %v857
        %v1178 = vunpack.c.h.b16 %v857
        %v1179 = vunpack.c.l.b16 %v858
        %v1180 = vunpack.c.l.b16 %v859
        %v1181 = vunpack.c.h.b16 %v859
        %v1182 = vunpack.c.l.b16 %v860
        %v1183 = vunpack.c.l.b16 %v861
        %v1184 = vunpack.c.h.b16 %v861
        %v1185 = vunpack.c.l.b16 %v862
        %v1186 = vunpack.c.l.b16 %v863
        %v1187 = vunpack.c.h.b16 %v863
        %v1188 = vunpack.c.l.b16 %v864
        %v1189 = vunpack.c.l.b16 %v865
        %v1190 = vunpack.c.h.b16 %v865
        %v1191 = vunpack.c.l.b16 %v866
        %v1192 = vunpack.c.l.b16 %v867
        %v1193 = vunpack.c.h.b16 %v867
        %v1194 = vunpack.c.l.b16 %v868
        %v1195 = vunpack.c.l.b16 %v869
        %v1196 = vunpack.c.h.b16 %v869
        %v1197 = vunpack.c.l.b16 %v870
        %v1198 = vunpack.c.l.b16 %v871
        %v1199 = vunpack.c.h.b16 %v871
        %v1200 = vunpack.c.l.b16 %v872
        %v1201 = vunpack.c.l.b16 %v873
        %v1202 = vunpack.c.h.b16 %v873
        %v1203 = vunpack.c.l.b16 %v874
        %v1204 = vunpack.c.l.b16 %v875
        %v1205 = vunpack.c.h.b16 %v875
        %v1206 = vunpack.c.l.b16 %v876
        %v1207 = vunpack.c.l.b16 %v877
        %v1208 = vunpack.c.h.b16 %v877
        %v1209 = vunpack.c.l.b16 %v878
        %v1210 = vunpack.c.l.b16 %v879
        %v1211 = vunpack.c.h.b16 %v879
        %v1212 = vunpack.c.l.b16 %v880
        %v1213 = vunpack.c.l.b16 %v881
        %v1214 = vunpack.c.h.b16 %v881
        %v1215 = vunpack.c.l.b16 %v882
        %v1216 = vunpack.c.l.b16 %v883
        %v1217 = vunpack.c.h.b16 %v883
        %v1218 = vunpack.c.l.b16 %v884
        %v1219 = vunpack.c.l.b16 %v885
        %v1220 = vunpack.c.h.b16 %v885
        %v1221 = vunpack.c.l.b16 %v886
        %v1222 = vunpack.c.l.b16 %v887
        %v1223 = vunpack.c.h.b16 %v887
        %v1224 = vunpack.c.l.b16 %v888
        %v1225 = vunpack.c.l.b16 %v889
        %v1226 = vunpack.c.h.b16 %v889
        %v1227 = vunpack.c.l.b16 %v890
        %v1228 = vunpack.c.l.b16 %v891
        %v1229 = vunpack.c.h.b16 %v891
        %v1230 = vunpack.c.l.b16 %v892
        %v1231 = vpack.c.b16 %v1042, %v1039
        %v1232 = vpack.c.b16 %v1043, %v1040
        %v1233 = vpack.c.b16 %v1044, %v1041
        %v1234 = vpack.c.b16 %v1048, %v1045
        %v1235 = vpack.c.b16 %v1049, %v1046
        %v1236 = vpack.c.b16 %v1050, %v1047
        %v1237 = vpack.c.b16 %v1054, %v1051
        %v1238 = vpack.c.b16 %v1055, %v1052
        %v1239 = vpack.c.b16 %v1056, %v1053
        %v1240 = vpack.c.b16 %v1060, %v1057
        %v1241 = vpack.c.b16 %v1061, %v1058
        %v1242 = vpack.c.b16 %v1062, %v1059
        %v1243 = vpack.c.b16 %v1066, %v1063
        %v1244 = vpack.c.b16 %v1067, %v1064
        %v1245 = vpack.c.b16 %v1068, %v1065
        %v1246 = vpack.c.b16 %v1072, %v1069
        %v1247 = vpack.c.b16 %v1073, %v1070
        %v1248 = vpack.c.b16 %v1074, %v1071
        %v1249 = vpack.c.b16 %v1078, %v1075
        %v1250 = vpack.c.b16 %v1079, %v1076
        %v1251 = vpack.c.b16 %v1080, %v1077
        %v1252 = vpack.c.b16 %v1084, %v1081
        %v1253 = vpack.c.b16 %v1085, %v1082
        %v1254 = vpack.c.b16 %v1086, %v1083
        %v1255 = vpack.c.b16 %v1090, %v1087
        %v1256 = vpack.c.b16 %v1091, %v1088
        %v1257 = vpack.c.b16 %v1092, %v1089
        %v1258 = vpack.c.b16 %v1096, %v1093
        %v1259 = vpack.c.b16 %v1097, %v1094
        %v1260 = vpack.c.b16 %v1098, %v1095
        %v1261 = vpack.c.b16 %v1102, %v1099
        %v1262 = vpack.c.b16 %v1103, %v1100
        %v1263 = vpack.c.b16 %v1104, %v1101
        %v1264 = vpack.c.b16 %v1108, %v1105
        %v1265 = vpack.c.b16 %v1109, %v1106
        %v1266 = vpack.c.b16 %v1110, %v1107
        %v1267 = vpack.c.b16 %v1114, %v1111
        %v1268 = vpack.c.b16 %v1115, %v1112
        %v1269 = vpack.c.b16 %v1116, %v1113
        %v1270 = vpack.c.b16 %v1120, %v1117
        %v1271 = vpack.c.b16 %v1121, %v1118
        %v1272 = vpack.c.b16 %v1122, %v1119
        %v1273 = vpack.c.b16 %v1126, %v1123
        %v1274 = vpack.c.b16 %v1127, %v1124
        %v1275 = vpack.c.b16 %v1128, %v1125
        %v1276 = vpack.c.b16 %v1132, %v1129
        %v1277 = vpack.c.b16 %v1133, %v1130
        %v1278 = vpack.c.b16 %v1134, %v1131
        %v1279 = vpack.c.b16 %v1138, %v1135
        %v1280 = vpack.c.b16 %v1139, %v1136
        %v1281 = vpack.c.b16 %v1140, %v1137
        %v1282 = vpack.c.b16 %v1144, %v1141
        %v1283 = vpack.c.b16 %v1145, %v1142
        %v1284 = vpack.c.b16 %v1146, %v1143
        %v1285 = vpack.c.b16 %v1150, %v1147
        %v1286 = vpack.c.b16 %v1151, %v1148
        %v1287 = vpack.c.b16 %v1152, %v1149
        %v1288 = vpack.c.b16 %v1156, %v1153
        %v1289 = vpack.c.b16 %v1157, %v1154
        %v1290 = vpack.c.b16 %v1158, %v1155
        %v1291 = vpack.c.b16 %v1162, %v1159
        %v1292 = vpack.c.b16 %v1163, %v1160
        %v1293 = vpack.c.b16 %v1164, %v1161
        %v1294 = vpack.c.b16 %v1168, %v1165
        %v1295 = vpack.c.b16 %v1169, %v1166
        %v1296 = vpack.c.b16 %v1170, %v1167
        %v1297 = vpack.c.b16 %v1174, %v1171
        %v1298 = vpack.c.b16 %v1175, %v1172
        %v1299 = vpack.c.b16 %v1176, %v1173
        %v1300 = vpack.c.b16 %v1180, %v1177
        %v1301 = vpack.c.b16 %v1181, %v1178
        %v1302 = vpack.c.b16 %v1182, %v1179
        %v1303 = vpack.c.b16 %v1186, %v1183
        %v1304 = vpack.c.b16 %v1187, %v1184
        %v1305 = vpack.c.b16 %v1188, %v1185
        %v1306 = vpack.c.b16 %v1192, %v1189
        %v1307 = vpack.c.b16 %v1193, %v1190
        %v1308 = vpack.c.b16 %v1194, %v1191
        %v1309 = vpack.c.b16 %v1198, %v1195
        %v1310 = vpack.c.b16 %v1199, %v1196
        %v1311 = vpack.c.b16 %v1200, %v1197
        %v1312 = vpack.c.b16 %v1204, %v1201
        %v1313 = vpack.c.b16 %v1205, %v1202
        %v1314 = vpack.c.b16 %v1206, %v1203
        %v1315 = vpack.c.b16 %v1210, %v1207
        %v1316 = vpack.c.b16 %v1211, %v1208
        %v1317 = vpack.c.b16 %v1212, %v1209
        %v1318 = vpack.c.b16 %v1216, %v1213
        %v1319 = vpack.c.b16 %v1217, %v1214
        %v1320 = vpack.c.b16 %v1218, %v1215
        %v1321 = vpack.c.b16 %v1222, %v1219
        %v1322 = vpack.c.b16 %v1223, %v1220
        %v1323 = vpack.c.b16 %v1224, %v1221
        %v1324 = vpack.c.b16 %v1228, %v1225
        %v1325 = vpack.c.b16 %v1229, %v1226
        %v1326 = vpack.c.b16 %v1230, %v1227
        %1423 = vmatprep.subr.bf16.mxu0 %v1232
        %1424 = vmatpush1.bf16.msra.mxu0 %v1231
        %1425 = vmatprep.subr.bf16.mxu0 %v1235
        %1426 = vmatpush1.bf16.msra.mxu0 %v1234
        %1427 = vmatprep.subr.bf16.mxu0 %v1238
        %1428 = vmatpush1.bf16.msra.mxu0 %v1237
        %1429 = vmatprep.subr.bf16.mxu0 %v1241
        %1430 = vmatpush1.bf16.msra.mxu0 %v1240
        %1431 = vmatprep.subr.bf16.mxu0 %v1244
        %1432 = vmatpush1.bf16.msra.mxu0 %v1243
        %1433 = vmatprep.subr.bf16.mxu0 %v1247
        %1434 = vmatpush1.bf16.msra.mxu0 %v1246
        %1435 = vmatprep.subr.bf16.mxu0 %v1250
        %1436 = vmatpush1.bf16.msra.mxu0 %v1249
        %1437 = vmatprep.subr.bf16.mxu0 %v1253
        %1438 = vmatpush1.bf16.msra.mxu0 %v1252
        %1439 = vmatprep.subr.bf16.mxu0 %v1256
        %1440 = vmatpush1.bf16.msra.mxu0 %v1255
        %1441 = vmatprep.subr.bf16.mxu0 %v1259
        %1442 = vmatpush1.bf16.msra.mxu0 %v1258
        %1443 = vmatprep.subr.bf16.mxu0 %v1262
        %1444 = vmatpush1.bf16.msra.mxu0 %v1261
        %1445 = vmatprep.subr.bf16.mxu0 %v1265
        %1446 = vmatpush1.bf16.msra.mxu0 %v1264
        %1447 = vmatprep.subr.bf16.mxu0 %v1268
        %1448 = vmatpush1.bf16.msra.mxu0 %v1267
        %1449 = vmatprep.subr.bf16.mxu0 %v1271
        %1450 = vmatpush1.bf16.msra.mxu0 %v1270
        %1451 = vmatprep.subr.bf16.mxu0 %v1274
        %1452 = vmatpush1.bf16.msra.mxu0 %v1273
        %1453 = vmatprep.subr.bf16.mxu0 %v1277
        %1454 = vmatpush1.bf16.msra.mxu0 %v1276
        %1455 = vmatprep.mubr.bf16.mxu0 %v762
        %1456 = vmatmul.mubr.bf16.gmra.mrb[0].mxu0 %v761
        %v1457 = vpop.f32.mrb[0].mxu0
        %v1458 = vadd.f32 %v899, %v1457
        %v1459 = vpop.f32.mrb[0].mxu0
        %v1460 = vadd.f32 %v903, %v1459
        %v1461 = vpop.f32.mrb[0].mxu0
        %v1462 = vadd.f32 %v899, %v1461
        %v1463 = vpop.f32.mrb[0].mxu0
        %v1464 = vadd.f32 %v903, %v1463
        %1465 = vdwg.mxu0
        %1466 = vmatprep.subr.bf16.mxu0 %v1280
        %1467 = vmatpush1.bf16.msra.mxu0 %v1279
        %1468 = vmatprep.subr.bf16.mxu0 %v1283
        %1469 = vmatpush1.bf16.msra.mxu0 %v1282
        %1470 = vmatprep.subr.bf16.mxu0 %v1286
        %1471 = vmatpush1.bf16.msra.mxu0 %v1285
        %1472 = vmatprep.subr.bf16.mxu0 %v1289
        %1473 = vmatpush1.bf16.msra.mxu0 %v1288
        %1474 = vmatprep.subr.bf16.mxu0 %v1292
        %1475 = vmatpush1.bf16.msra.mxu0 %v1291
        %1476 = vmatprep.subr.bf16.mxu0 %v1295
        %1477 = vmatpush1.bf16.msra.mxu0 %v1294
        %1478 = vmatprep.subr.bf16.mxu0 %v1298
        %1479 = vmatpush1.bf16.msra.mxu0 %v1297
        %1480 = vmatprep.subr.bf16.mxu0 %v1301
        %1481 = vmatpush1.bf16.msra.mxu0 %v1300
        %1482 = vmatprep.subr.bf16.mxu0 %v1304
        %1483 = vmatpush1.bf16.msra.mxu0 %v1303
        %1484 = vmatprep.subr.bf16.mxu0 %v1307
        %1485 = vmatpush1.bf16.msra.mxu0 %v1306
        %1486 = vmatprep.subr.bf16.mxu0 %v1310
        %1487 = vmatpush1.bf16.msra.mxu0 %v1309
        %1488 = vmatprep.subr.bf16.mxu0 %v1313
        %1489 = vmatpush1.bf16.msra.mxu0 %v1312
        %1490 = vmatprep.subr.bf16.mxu0 %v1316
        %1491 = vmatpush1.bf16.msra.mxu0 %v1315
        %1492 = vmatprep.subr.bf16.mxu0 %v1319
        %1493 = vmatpush1.bf16.msra.mxu0 %v1318
        %1494 = vmatprep.subr.bf16.mxu0 %v1322
        %1495 = vmatpush1.bf16.msra.mxu0 %v1321
        %1496 = vmatprep.subr.bf16.mxu0 %v1325
        %1497 = vmatpush1.bf16.msra.mxu0 %v1324
        %1498 = vmatprep.mubr.bf16.mxu0 %v764
        %1499 = vmatmul.mubr.bf16.gmra.mrb[0].mxu0 %v763
        %v1500 = vpop.f32.mrb[0].mxu0
        %v1501 = vadd.f32 %v1458, %v1500
        %v1502 = vpop.f32.mrb[0].mxu0
        %v1503 = vadd.f32 %v1460, %v1502
        %v1504 = vpop.f32.mrb[0].mxu0
        %v1505 = vadd.f32 %v1462, %v1504
        %v1506 = vpop.f32.mrb[0].mxu0
        %v1507 = vadd.f32 %v1464, %v1506
        %1508 = vdwg.mxu0
        %1509 = vmatprep.subr.bf16.mxu0 0
        %1510 = vmatpush1.bf16.msra.mxu0 %v1233
        %1511 = vmatprep.subr.bf16.mxu0 0
        %1512 = vmatpush1.bf16.msra.mxu0 %v1236
        %1513 = vmatprep.subr.bf16.mxu0 0
        %1514 = vmatpush1.bf16.msra.mxu0 %v1239
        %1515 = vmatprep.subr.bf16.mxu0 0
        %1516 = vmatpush1.bf16.msra.mxu0 %v1242
        %1517 = vmatprep.subr.bf16.mxu0 0
        %1518 = vmatpush1.bf16.msra.mxu0 %v1245
        %1519 = vmatprep.subr.bf16.mxu0 0
        %1520 = vmatpush1.bf16.msra.mxu0 %v1248
        %1521 = vmatprep.subr.bf16.mxu0 0
        %1522 = vmatpush1.bf16.msra.mxu0 %v1251
        %1523 = vmatprep.subr.bf16.mxu0 0
        %1524 = vmatpush1.bf16.msra.mxu0 %v1254
        %1525 = vmatprep.subr.bf16.mxu0 0
        %1526 = vmatpush1.bf16.msra.mxu0 %v1257
        %1527 = vmatprep.subr.bf16.mxu0 0
        %1528 = vmatpush1.bf16.msra.mxu0 %v1260
        %1529 = vmatprep.subr.bf16.mxu0 0
        %1530 = vmatpush1.bf16.msra.mxu0 %v1263
        %1531 = vmatprep.subr.bf16.mxu0 0
        %1532 = vmatpush1.bf16.msra.mxu0 %v1266
        %1533 = vmatprep.subr.bf16.mxu0 0
        %1534 = vmatpush1.bf16.msra.mxu0 %v1269
        %1535 = vmatprep.subr.bf16.mxu0 0
        %1536 = vmatpush1.bf16.msra.mxu0 %v1272
        %1537 = vmatprep.subr.bf16.mxu0 0
        %1538 = vmatpush1.bf16.msra.mxu0 %v1275
        %1539 = vmatprep.subr.bf16.mxu0 0
        %1540 = vmatpush1.bf16.msra.mxu0 %v1278
        %1541 = vmatprep.mubr.bf16.mxu0 %v762
        %1542 = vmatmul.mubr.bf16.gmra.mrb[0].mxu0 %v761
        %v1543 = vpop.f32.mrb[0].mxu0
        %v1544 = vadd.f32 %v907, %v1543
        %v1545 = vpop.f32.mrb[0].mxu0
        %v1546 = vpop.f32.mrb[0].mxu0
        %v1547 = vadd.f32 %v907, %v1546
        %v1548 = vpop.f32.mrb[0].mxu0
        %1549 = vdwg.mxu0
        %1550 = vmatprep.subr.bf16.mxu0 0
        %1551 = vmatpush1.bf16.msra.mxu0 %v1281
        %1552 = vmatprep.subr.bf16.mxu0 0
        %1553 = vmatpush1.bf16.msra.mxu0 %v1284
        %1554 = vmatprep.subr.bf16.mxu0 0
        %1555 = vmatpush1.bf16.msra.mxu0 %v1287
        %1556 = vmatprep.subr.bf16.mxu0 0
        %1557 = vmatpush1.bf16.msra.mxu0 %v1290
        %1558 = vmatprep.subr.bf16.mxu0 0
        %1559 = vmatpush1.bf16.msra.mxu0 %v1293
        %1560 = vmatprep.subr.bf16.mxu0 0
        %1561 = vmatpush1.bf16.msra.mxu0 %v1296
        %1562 = vmatprep.subr.bf16.mxu0 0
        %1563 = vmatpush1.bf16.msra.mxu0 %v1299
        %1564 = vmatprep.subr.bf16.mxu0 0
        %1565 = vmatpush1.bf16.msra.mxu0 %v1302
        %1566 = vmatprep.subr.bf16.mxu0 0
        %1567 = vmatpush1.bf16.msra.mxu0 %v1305
        %1568 = vmatprep.subr.bf16.mxu0 0
        %1569 = vmatpush1.bf16.msra.mxu0 %v1308
        %1570 = vmatprep.subr.bf16.mxu0 0
        %1571 = vmatpush1.bf16.msra.mxu0 %v1311
        %1572 = vmatprep.subr.bf16.mxu0 0
        %1573 = vmatpush1.bf16.msra.mxu0 %v1314
        %1574 = vmatprep.subr.bf16.mxu0 0
        %1575 = vmatpush1.bf16.msra.mxu0 %v1317
        %1576 = vmatprep.subr.bf16.mxu0 0
        %1577 = vmatpush1.bf16.msra.mxu0 %v1320
        %1578 = vmatprep.subr.bf16.mxu0 0
        %1579 = vmatpush1.bf16.msra.mxu0 %v1323
        %1580 = vmatprep.subr.bf16.mxu0 0
        %1581 = vmatpush1.bf16.msra.mxu0 %v1326
        %1582 = vmatprep.mubr.bf16.mxu0 %v764
        %1583 = vmatmul.mubr.bf16.gmra.mrb[0].mxu0 %v763
        %v1584 = vpop.f32.mrb[0].mxu0
        %v1585 = vadd.f32 %v1544, %v1584
        %v1586 = vpop.f32.mrb[0].mxu0
        %v1587 = vpop.f32.mrb[0].mxu0
        %v1588 = vadd.f32 %v1547, %v1587
        %v1589 = vpop.f32.mrb[0].mxu0
        %1590 = vdwg.mxu0
        %v1591 = vmax.f32 %v1501, 0.0
        %v1592 = vmax.f32 %v1503, 0.0
        %v1593 = vmax.f32 %v1585, 0.0
        %v1594 = vmax.f32 %v1505, 0.0
        %v1595 = vmax.f32 %v1507, 0.0
        %v1596 = vmax.f32 %v1588, 0.0
        %v1597 = vpack.c.bf16 %v1594, %v1591
        %v1598 = vpack.c.bf16 %v1595, %v1592
        %v1599 = vpack.c.bf16 %v1596, %v1593
        %v1600 = vld [vmem:[#allocation8] sm:$0xff]
        %v1601 = vld [vmem:[#allocation8 + $0x8] sm:$0xff]
        %v1602 = vld [vmem:[#allocation8 + $0x10] sm:$0xff]
        %v1603 = vld [vmem:[#allocation8 + $0x18] sm:$0xff]
        %v1604 = vld [vmem:[#allocation8 + $0x20] sm:$0xff]
        %v1605 = vld [vmem:[#allocation8 + $0x28] sm:$0xff]
        %v1606 = vld [vmem:[#allocation8 + $0x30] sm:$0xff]
        %v1607 = vld [vmem:[#allocation8 + $0x38] sm:$0xff]
        %v1608 = vld [vmem:[#allocation8 + $0x40] sm:$0xff]
        %v1609 = vld [vmem:[#allocation8 + $0x48] sm:$0xff]
        %v1610 = vld [vmem:[#allocation8 + $0x50] sm:$0xff]
        %v1611 = vld [vmem:[#allocation8 + $0x58] sm:$0xff]
        %v1612 = vld [vmem:[#allocation8 + $0x60] sm:$0xff]
        %v1613 = vld [vmem:[#allocation8 + $0x68] sm:$0xff]
        %v1614 = vld [vmem:[#allocation8 + $0x70] sm:$0xff]
        %v1615 = vld [vmem:[#allocation8 + $0x78] sm:$0xff]
        %v1616 = vld [vmem:[#allocation8 + $0x80] sm:$0xff]
        %v1617 = vld [vmem:[#allocation8 + $0x88] sm:$0xff]
        %v1618 = vld [vmem:[#allocation8 + $0x90] sm:$0xff]
        %v1619 = vld [vmem:[#allocation8 + $0x98] sm:$0xff]
        %v1620 = vld [vmem:[#allocation8 + $0xa0] sm:$0xff]
        %v1621 = vld [vmem:[#allocation8 + $0xa8] sm:$0xff]
        %v1622 = vld [vmem:[#allocation8 + $0xb0] sm:$0xff]
        %v1623 = vld [vmem:[#allocation8 + $0xb8] sm:$0xff]
        %v1624 = vld [vmem:[#allocation8 + $0xc0] sm:$0xff]
        %v1625 = vld [vmem:[#allocation8 + $0xc8] sm:$0xff]
        %v1626 = vld [vmem:[#allocation8 + $0xd0] sm:$0xff]
        %v1627 = vld [vmem:[#allocation8 + $0xd8] sm:$0xff]
        %v1628 = vld [vmem:[#allocation8 + $0xe0] sm:$0xff]
        %v1629 = vld [vmem:[#allocation8 + $0xe8] sm:$0xff]
        %v1630 = vld [vmem:[#allocation8 + $0xf0] sm:$0xff]
        %v1631 = vld [vmem:[#allocation8 + $0xf8] sm:$0xff]
        %v1632 = vld [vmem:[#allocation8 + $0x100] sm:$0xff]
        %v1633 = vld [vmem:[#allocation8 + $0x108] sm:$0xff]
        %v1634 = vld [vmem:[#allocation8 + $0x110] sm:$0xff]
        %v1635 = vld [vmem:[#allocation8 + $0x118] sm:$0xff]
        %v1636 = vld [vmem:[#allocation8 + $0x120] sm:$0xff]
        %v1637 = vld [vmem:[#allocation8 + $0x128] sm:$0xff]
        %v1638 = vld [vmem:[#allocation8 + $0x130] sm:$0xff]
        %v1639 = vld [vmem:[#allocation8 + $0x138] sm:$0xff]
        %v1640 = vld [vmem:[#allocation8 + $0x140] sm:$0xff]
        %v1641 = vld [vmem:[#allocation8 + $0x148] sm:$0xff]
        %v1642 = vld [vmem:[#allocation8 + $0x150] sm:$0xff]
        %v1643 = vld [vmem:[#allocation8 + $0x158] sm:$0xff]
        %v1644 = vld [vmem:[#allocation8 + $0x160] sm:$0xff]
        %v1645 = vld [vmem:[#allocation8 + $0x168] sm:$0xff]
        %v1646 = vld [vmem:[#allocation8 + $0x170] sm:$0xff]
        %v1647 = vld [vmem:[#allocation8 + $0x178] sm:$0xff]
        %s1648 = scalar_lea.vmem [#allocation13], 2
        %v1649 = vld [vmem:[%s1648] ss:$8 sm:$0x3]
        %v1651 = vlaneseq
        %v1652 = vshrl.u32 %v1651, 7
        %v1653 = vsub.s32 0, %v1652
        %v1654 = vrot.slane %v1649, %v1653
        %v1655 = vlaneseq
        %v1656 = vshrl.u32 %v1655, 7
        %v1657 = vsub.s32 1, %v1656
        %v1658 = vrot.slane %v1649, %v1657
        %v1709 = vunpack.c.l.b16 %v1600
        %v1710 = vunpack.c.h.b16 %v1600
        %v1711 = vunpack.c.l.b16 %v1601
        %v1712 = vunpack.c.h.b16 %v1601
        %v1713 = vunpack.c.l.b16 %v1602
        %v1714 = vunpack.c.h.b16 %v1602
        %v1715 = vunpack.c.l.b16 %v1603
        %v1716 = vunpack.c.h.b16 %v1603
        %v1717 = vunpack.c.l.b16 %v1604
        %v1718 = vunpack.c.h.b16 %v1604
        %v1719 = vunpack.c.l.b16 %v1605
        %v1720 = vunpack.c.h.b16 %v1605
        %v1721 = vunpack.c.l.b16 %v1606
        %v1722 = vunpack.c.h.b16 %v1606
        %v1723 = vunpack.c.l.b16 %v1607
        %v1724 = vunpack.c.h.b16 %v1607
        %v1725 = vunpack.c.l.b16 %v1608
        %v1726 = vunpack.c.h.b16 %v1608
        %v1727 = vunpack.c.l.b16 %v1609
        %v1728 = vunpack.c.h.b16 %v1609
        %v1729 = vunpack.c.l.b16 %v1610
        %v1730 = vunpack.c.h.b16 %v1610
        %v1731 = vunpack.c.l.b16 %v1611
        %v1732 = vunpack.c.h.b16 %v1611
        %v1733 = vunpack.c.l.b16 %v1612
        %v1734 = vunpack.c.h.b16 %v1612
        %v1735 = vunpack.c.l.b16 %v1613
        %v1736 = vunpack.c.h.b16 %v1613
        %v1737 = vunpack.c.l.b16 %v1614
        %v1738 = vunpack.c.h.b16 %v1614
        %v1739 = vunpack.c.l.b16 %v1615
        %v1740 = vunpack.c.h.b16 %v1615
        %v1741 = vunpack.c.l.b16 %v1616
        %v1742 = vunpack.c.h.b16 %v1616
        %v1743 = vunpack.c.l.b16 %v1617
        %v1744 = vunpack.c.h.b16 %v1617
        %v1745 = vunpack.c.l.b16 %v1618
        %v1746 = vunpack.c.h.b16 %v1618
        %v1747 = vunpack.c.l.b16 %v1619
        %v1748 = vunpack.c.h.b16 %v1619
        %v1749 = vunpack.c.l.b16 %v1620
        %v1750 = vunpack.c.h.b16 %v1620
        %v1751 = vunpack.c.l.b16 %v1621
        %v1752 = vunpack.c.h.b16 %v1621
        %v1753 = vunpack.c.l.b16 %v1622
        %v1754 = vunpack.c.h.b16 %v1622
        %v1755 = vunpack.c.l.b16 %v1623
        %v1756 = vunpack.c.h.b16 %v1623
        %v1757 = vunpack.c.l.b16 %v1624
        %v1758 = vunpack.c.h.b16 %v1624
        %v1759 = vunpack.c.l.b16 %v1625
        %v1760 = vunpack.c.h.b16 %v1625
        %v1761 = vunpack.c.l.b16 %v1626
        %v1762 = vunpack.c.h.b16 %v1626
        %v1763 = vunpack.c.l.b16 %v1627
        %v1764 = vunpack.c.h.b16 %v1627
        %v1765 = vunpack.c.l.b16 %v1628
        %v1766 = vunpack.c.h.b16 %v1628
        %v1767 = vunpack.c.l.b16 %v1629
        %v1768 = vunpack.c.h.b16 %v1629
        %v1769 = vunpack.c.l.b16 %v1630
        %v1770 = vunpack.c.h.b16 %v1630
        %v1771 = vunpack.c.l.b16 %v1631
        %v1772 = vunpack.c.h.b16 %v1631
        %v1773 = vunpack.c.l.b16 %v1632
        %v1774 = vunpack.c.h.b16 %v1632
        %v1775 = vunpack.c.l.b16 %v1633
        %v1776 = vunpack.c.h.b16 %v1633
        %v1777 = vunpack.c.l.b16 %v1634
        %v1778 = vunpack.c.h.b16 %v1634
        %v1779 = vunpack.c.l.b16 %v1635
        %v1780 = vunpack.c.h.b16 %v1635
        %v1781 = vunpack.c.l.b16 %v1636
        %v1782 = vunpack.c.h.b16 %v1636
        %v1783 = vunpack.c.l.b16 %v1637
        %v1784 = vunpack.c.h.b16 %v1637
        %v1785 = vunpack.c.l.b16 %v1638
        %v1786 = vunpack.c.h.b16 %v1638
        %v1787 = vunpack.c.l.b16 %v1639
        %v1788 = vunpack.c.h.b16 %v1639
        %v1789 = vunpack.c.l.b16 %v1640
        %v1790 = vunpack.c.h.b16 %v1640
        %v1791 = vunpack.c.l.b16 %v1641
        %v1792 = vunpack.c.h.b16 %v1641
        %v1793 = vunpack.c.l.b16 %v1642
        %v1794 = vunpack.c.h.b16 %v1642
        %v1795 = vunpack.c.l.b16 %v1643
        %v1796 = vunpack.c.h.b16 %v1643
        %v1797 = vunpack.c.l.b16 %v1644
        %v1798 = vunpack.c.h.b16 %v1644
        %v1799 = vunpack.c.l.b16 %v1645
        %v1800 = vunpack.c.h.b16 %v1645
        %v1801 = vunpack.c.l.b16 %v1646
        %v1802 = vunpack.c.h.b16 %v1646
        %v1803 = vunpack.c.l.b16 %v1647
        %v1804 = vunpack.c.h.b16 %v1647
        %v1805 = vpack.c.b16 %v1711, %v1709
        %v1806 = vpack.c.b16 %v1712, %v1710
        %v1807 = vpack.c.b16 %v1715, %v1713
        %v1808 = vpack.c.b16 %v1716, %v1714
        %v1809 = vpack.c.b16 %v1719, %v1717
        %v1810 = vpack.c.b16 %v1720, %v1718
        %v1811 = vpack.c.b16 %v1723, %v1721
        %v1812 = vpack.c.b16 %v1724, %v1722
        %v1813 = vpack.c.b16 %v1727, %v1725
        %v1814 = vpack.c.b16 %v1728, %v1726
        %v1815 = vpack.c.b16 %v1731, %v1729
        %v1816 = vpack.c.b16 %v1732, %v1730
        %v1817 = vpack.c.b16 %v1735, %v1733
        %v1818 = vpack.c.b16 %v1736, %v1734
        %v1819 = vpack.c.b16 %v1739, %v1737
        %v1820 = vpack.c.b16 %v1740, %v1738
        %v1821 = vpack.c.b16 %v1743, %v1741
        %v1822 = vpack.c.b16 %v1744, %v1742
        %v1823 = vpack.c.b16 %v1747, %v1745
        %v1824 = vpack.c.b16 %v1748, %v1746
        %v1825 = vpack.c.b16 %v1751, %v1749
        %v1826 = vpack.c.b16 %v1752, %v1750
        %v1827 = vpack.c.b16 %v1755, %v1753
        %v1828 = vpack.c.b16 %v1756, %v1754
        %v1829 = vpack.c.b16 %v1759, %v1757
        %v1830 = vpack.c.b16 %v1760, %v1758
        %v1831 = vpack.c.b16 %v1763, %v1761
        %v1832 = vpack.c.b16 %v1764, %v1762
        %v1833 = vpack.c.b16 %v1767, %v1765
        %v1834 = vpack.c.b16 %v1768, %v1766
        %v1835 = vpack.c.b16 %v1771, %v1769
        %v1836 = vpack.c.b16 %v1772, %v1770
        %v1837 = vpack.c.b16 %v1775, %v1773
        %v1838 = vpack.c.b16 %v1776, %v1774
        %v1839 = vpack.c.b16 %v1779, %v1777
        %v1840 = vpack.c.b16 %v1780, %v1778
        %v1841 = vpack.c.b16 %v1783, %v1781
        %v1842 = vpack.c.b16 %v1784, %v1782
        %v1843 = vpack.c.b16 %v1787, %v1785
        %v1844 = vpack.c.b16 %v1788, %v1786
        %v1845 = vpack.c.b16 %v1791, %v1789
        %v1846 = vpack.c.b16 %v1792, %v1790
        %v1847 = vpack.c.b16 %v1795, %v1793
        %v1848 = vpack.c.b16 %v1796, %v1794
        %v1849 = vpack.c.b16 %v1799, %v1797
        %v1850 = vpack.c.b16 %v1800, %v1798
        %v1851 = vpack.c.b16 %v1803, %v1801
        %v1852 = vpack.c.b16 %v1804, %v1802
        %1901 = vmatprep.subr.bf16.mxu0 %v1806
        %1902 = vmatpush1.bf16.msra.mxu0 %v1805
        %1903 = vmatprep.subr.bf16.mxu0 %v1808
        %1904 = vmatpush1.bf16.msra.mxu0 %v1807
        %1905 = vmatprep.subr.bf16.mxu0 %v1810
        %1906 = vmatpush1.bf16.msra.mxu0 %v1809
        %1907 = vmatprep.subr.bf16.mxu0 %v1812
        %1908 = vmatpush1.bf16.msra.mxu0 %v1811
        %1909 = vmatprep.subr.bf16.mxu0 %v1814
        %1910 = vmatpush1.bf16.msra.mxu0 %v1813
        %1911 = vmatprep.subr.bf16.mxu0 %v1816
        %1912 = vmatpush1.bf16.msra.mxu0 %v1815
        %1913 = vmatprep.subr.bf16.mxu0 %v1818
        %1914 = vmatpush1.bf16.msra.mxu0 %v1817
        %1915 = vmatprep.subr.bf16.mxu0 %v1820
        %1916 = vmatpush1.bf16.msra.mxu0 %v1819
        %1917 = vmatprep.subr.bf16.mxu0 %v1822
        %1918 = vmatpush1.bf16.msra.mxu0 %v1821
        %1919 = vmatprep.subr.bf16.mxu0 %v1824
        %1920 = vmatpush1.bf16.msra.mxu0 %v1823
        %1921 = vmatprep.subr.bf16.mxu0 %v1826
        %1922 = vmatpush1.bf16.msra.mxu0 %v1825
        %1923 = vmatprep.subr.bf16.mxu0 %v1828
        %1924 = vmatpush1.bf16.msra.mxu0 %v1827
        %1925 = vmatprep.subr.bf16.mxu0 %v1830
        %1926 = vmatpush1.bf16.msra.mxu0 %v1829
        %1927 = vmatprep.subr.bf16.mxu0 %v1832
        %1928 = vmatpush1.bf16.msra.mxu0 %v1831
        %1929 = vmatprep.subr.bf16.mxu0 %v1834
        %1930 = vmatpush1.bf16.msra.mxu0 %v1833
        %1931 = vmatprep.subr.bf16.mxu0 %v1836
        %1932 = vmatpush1.bf16.msra.mxu0 %v1835
        %1933 = vmatprep.mubr.bf16.mxu0 %v1598
        %1934 = vmatmul.mubr.bf16.gmra.mrb[0].mxu0 %v1597
        %v1935 = vpop.f32.mrb[0].mxu0
        %v1936 = vadd.f32 %v1654, %v1935
        %v1937 = vpop.f32.mrb[0].mxu0
        %v1938 = vadd.f32 %v1658, %v1937
        %v1939 = vpop.f32.mrb[0].mxu0
        %v1940 = vadd.f32 %v1654, %v1939
        %v1941 = vpop.f32.mrb[0].mxu0
        %v1942 = vadd.f32 %v1658, %v1941
        %1943 = vdwg.mxu0
        %1944 = vmatprep.subr.bf16.mxu0 %v1838
        %1945 = vmatpush1.bf16.msra.mxu0 %v1837
        %1946 = vmatprep.subr.bf16.mxu0 %v1840
        %1947 = vmatpush1.bf16.msra.mxu0 %v1839
        %1948 = vmatprep.subr.bf16.mxu0 %v1842
        %1949 = vmatpush1.bf16.msra.mxu0 %v1841
        %1950 = vmatprep.subr.bf16.mxu0 %v1844
        %1951 = vmatpush1.bf16.msra.mxu0 %v1843
        %1952 = vmatprep.subr.bf16.mxu0 %v1846
        %1953 = vmatpush1.bf16.msra.mxu0 %v1845
        %1954 = vmatprep.subr.bf16.mxu0 %v1848
        %1955 = vmatpush1.bf16.msra.mxu0 %v1847
        %1956 = vmatprep.subr.bf16.mxu0 %v1850
        %1957 = vmatpush1.bf16.msra.mxu0 %v1849
        %1958 = vmatprep.subr.bf16.mxu0 %v1852
        %1959 = vmatpush1.bf16.msra.mxu0 %v1851
        %1960 = vmatprep.subr.bf16.mxu0 0
        %1961 = vmatpush1.bf16.msra.mxu0 0
        %1962 = vmatprep.subr.bf16.mxu0 0
        %1963 = vmatpush1.bf16.msra.mxu0 0
        %1964 = vmatprep.subr.bf16.mxu0 0
        %1965 = vmatpush1.bf16.msra.mxu0 0
        %1966 = vmatprep.subr.bf16.mxu0 0
        %1967 = vmatpush1.bf16.msra.mxu0 0
        %1968 = vmatprep.subr.bf16.mxu0 0
        %1969 = vmatpush1.bf16.msra.mxu0 0
        %1970 = vmatprep.subr.bf16.mxu0 0
        %1971 = vmatpush1.bf16.msra.mxu0 0
        %1972 = vmatprep.subr.bf16.mxu0 0
        %1973 = vmatpush1.bf16.msra.mxu0 0
        %1974 = vmatprep.subr.bf16.mxu0 0
        %1975 = vmatpush1.bf16.msra.mxu0 0
        %1976 = vmatprep.mubr.bf16.mxu0 0
        %1977 = vmatmul.mubr.bf16.gmra.mrb[0].mxu0 %v1599
        %v1978 = vpop.f32.mrb[0].mxu0
        %v1979 = vadd.f32 %v1936, %v1978
        %v1980 = vpop.f32.mrb[0].mxu0
        %v1981 = vadd.f32 %v1938, %v1980
        %v1982 = vpop.f32.mrb[0].mxu0
        %v1983 = vadd.f32 %v1940, %v1982
        %v1984 = vpop.f32.mrb[0].mxu0
        %v1985 = vadd.f32 %v1942, %v1984
        %1986 = vdwg.mxu0
        %v1987 = vmax.f32 %v1979, 0.0
        %v1988 = vmax.f32 %v1981, 0.0
        %v1989 = vmax.f32 %v1983, 0.0
        %v1990 = vmax.f32 %v1985, 0.0
        %v1991 = vpack.c.bf16 %v1989, %v1987
        %v1992 = vpack.c.bf16 %v1990, %v1988
        %v1993 = vld [vmem:[#allocation8 + $0x180] sm:$0xff]
        %v1994 = vld [vmem:[#allocation8 + $0x188] sm:$0xff]
        %v1995 = vld [vmem:[#allocation8 + $0x190] sm:$0xff]
        %v1996 = vld [vmem:[#allocation8 + $0x198] sm:$0xff]
        %v1997 = vld [vmem:[#allocation8 + $0x1a0] sm:$0xff]
        %v1998 = vld [vmem:[#allocation8 + $0x1a8] sm:$0xff]
        %v1999 = vld [vmem:[#allocation8 + $0x1b0] sm:$0xff]
        %v2000 = vld [vmem:[#allocation8 + $0x1b8] sm:$0xff]
        %v2001 = vld [vmem:[#allocation8 + $0x1c0] sm:$0xff]
        %v2002 = vld [vmem:[#allocation8 + $0x1c8] sm:$0xff]
        %v2003 = vld [vmem:[#allocation8 + $0x1d0] sm:$0xff]
        %v2004 = vld [vmem:[#allocation8 + $0x1d8] sm:$0xff]
        %v2005 = vld [vmem:[#allocation8 + $0x1e0] sm:$0xff]
        %v2006 = vld [vmem:[#allocation8 + $0x1e8] sm:$0xff]
        %v2007 = vld [vmem:[#allocation8 + $0x1f0] sm:$0xff]
        %v2008 = vld [vmem:[#allocation8 + $0x1f8] sm:$0xff]
        %v2009 = vld [vmem:[#allocation8 + $0x200] sm:$0xff]
        %v2010 = vld [vmem:[#allocation8 + $0x208] sm:$0xff]
        %v2011 = vld [vmem:[#allocation8 + $0x210] sm:$0xff]
        %v2012 = vld [vmem:[#allocation8 + $0x218] sm:$0xff]
        %v2013 = vld [vmem:[#allocation8 + $0x220] sm:$0xff]
        %v2014 = vld [vmem:[#allocation8 + $0x228] sm:$0xff]
        %v2015 = vld [vmem:[#allocation8 + $0x230] sm:$0xff]
        %v2016 = vld [vmem:[#allocation8 + $0x238] sm:$0xff]
        %v2017 = vld [vmem:[#allocation8 + $0x240] sm:$0xff]
        %v2018 = vld [vmem:[#allocation8 + $0x248] sm:$0xff]
        %v2019 = vld [vmem:[#allocation8 + $0x250] sm:$0xff]
        %v2020 = vld [vmem:[#allocation8 + $0x258] sm:$0xff]
        %v2021 = vld [vmem:[#allocation8 + $0x260] sm:$0xff]
        %v2022 = vld [vmem:[#allocation8 + $0x268] sm:$0xff]
        %v2023 = vld [vmem:[#allocation8 + $0x270] sm:$0xff]
        %v2024 = vld [vmem:[#allocation8 + $0x278] sm:$0xff]
        %s2025 = scalar_lea.vmem [#allocation13], 3
        %v2026 = vld [vmem:[%s2025] ss:$8 sm:$0x3]
        %v2028 = vlaneseq
        %v2029 = vshrl.u32 %v2028, 7
        %v2030 = vsub.s32 0, %v2029
        %v2031 = vrot.slane %v2026, %v2030
        %v2032 = vlaneseq
        %v2033 = vshrl.u32 %v2032, 7
        %v2034 = vsub.s32 1, %v2033
        %v2035 = vrot.slane %v2026, %v2034
        %v2070 = vunpack.c.l.b16 %v1993
        %v2071 = vunpack.c.h.b16 %v1993
        %v2072 = vunpack.c.l.b16 %v1994
        %v2073 = vunpack.c.h.b16 %v1994
        %v2074 = vunpack.c.l.b16 %v1995
        %v2075 = vunpack.c.h.b16 %v1995
        %v2076 = vunpack.c.l.b16 %v1996
        %v2077 = vunpack.c.h.b16 %v1996
        %v2078 = vunpack.c.l.b16 %v1997
        %v2079 = vunpack.c.h.b16 %v1997
        %v2080 = vunpack.c.l.b16 %v1998
        %v2081 = vunpack.c.h.b16 %v1998
        %v2082 = vunpack.c.l.b16 %v1999
        %v2083 = vunpack.c.h.b16 %v1999
        %v2084 = vunpack.c.l.b16 %v2000
        %v2085 = vunpack.c.h.b16 %v2000
        %v2086 = vunpack.c.l.b16 %v2001
        %v2087 = vunpack.c.h.b16 %v2001
        %v2088 = vunpack.c.l.b16 %v2002
        %v2089 = vunpack.c.h.b16 %v2002
        %v2090 = vunpack.c.l.b16 %v2003
        %v2091 = vunpack.c.h.b16 %v2003
        %v2092 = vunpack.c.l.b16 %v2004
        %v2093 = vunpack.c.h.b16 %v2004
        %v2094 = vunpack.c.l.b16 %v2005
        %v2095 = vunpack.c.h.b16 %v2005
        %v2096 = vunpack.c.l.b16 %v2006
        %v2097 = vunpack.c.h.b16 %v2006
        %v2098 = vunpack.c.l.b16 %v2007
        %v2099 = vunpack.c.h.b16 %v2007
        %v2100 = vunpack.c.l.b16 %v2008
        %v2101 = vunpack.c.h.b16 %v2008
        %v2102 = vunpack.c.l.b16 %v2009
        %v2103 = vunpack.c.h.b16 %v2009
        %v2104 = vunpack.c.l.b16 %v2010
        %v2105 = vunpack.c.h.b16 %v2010
        %v2106 = vunpack.c.l.b16 %v2011
        %v2107 = vunpack.c.h.b16 %v2011
        %v2108 = vunpack.c.l.b16 %v2012
        %v2109 = vunpack.c.h.b16 %v2012
        %v2110 = vunpack.c.l.b16 %v2013
        %v2111 = vunpack.c.h.b16 %v2013
        %v2112 = vunpack.c.l.b16 %v2014
        %v2113 = vunpack.c.h.b16 %v2014
        %v2114 = vunpack.c.l.b16 %v2015
        %v2115 = vunpack.c.h.b16 %v2015
        %v2116 = vunpack.c.l.b16 %v2016
        %v2117 = vunpack.c.h.b16 %v2016
        %v2118 = vunpack.c.l.b16 %v2017
        %v2119 = vunpack.c.h.b16 %v2017
        %v2120 = vunpack.c.l.b16 %v2018
        %v2121 = vunpack.c.h.b16 %v2018
        %v2122 = vunpack.c.l.b16 %v2019
        %v2123 = vunpack.c.h.b16 %v2019
        %v2124 = vunpack.c.l.b16 %v2020
        %v2125 = vunpack.c.h.b16 %v2020
        %v2126 = vunpack.c.l.b16 %v2021
        %v2127 = vunpack.c.h.b16 %v2021
        %v2128 = vunpack.c.l.b16 %v2022
        %v2129 = vunpack.c.h.b16 %v2022
        %v2130 = vunpack.c.l.b16 %v2023
        %v2131 = vunpack.c.h.b16 %v2023
        %v2132 = vunpack.c.l.b16 %v2024
        %v2133 = vunpack.c.h.b16 %v2024
        %v2134 = vpack.c.b16 %v2072, %v2070
        %v2135 = vpack.c.b16 %v2073, %v2071
        %v2136 = vpack.c.b16 %v2076, %v2074
        %v2137 = vpack.c.b16 %v2077, %v2075
        %v2138 = vpack.c.b16 %v2080, %v2078
        %v2139 = vpack.c.b16 %v2081, %v2079
        %v2140 = vpack.c.b16 %v2084, %v2082
        %v2141 = vpack.c.b16 %v2085, %v2083
        %v2142 = vpack.c.b16 %v2088, %v2086
        %v2143 = vpack.c.b16 %v2089, %v2087
        %v2144 = vpack.c.b16 %v2092, %v2090
        %v2145 = vpack.c.b16 %v2093, %v2091
        %v2146 = vpack.c.b16 %v2096, %v2094
        %v2147 = vpack.c.b16 %v2097, %v2095
        %v2148 = vpack.c.b16 %v2100, %v2098
        %v2149 = vpack.c.b16 %v2101, %v2099
        %v2150 = vpack.c.b16 %v2104, %v2102
        %v2151 = vpack.c.b16 %v2105, %v2103
        %v2152 = vpack.c.b16 %v2108, %v2106
        %v2153 = vpack.c.b16 %v2109, %v2107
        %v2154 = vpack.c.b16 %v2112, %v2110
        %v2155 = vpack.c.b16 %v2113, %v2111
        %v2156 = vpack.c.b16 %v2116, %v2114
        %v2157 = vpack.c.b16 %v2117, %v2115
        %v2158 = vpack.c.b16 %v2120, %v2118
        %v2159 = vpack.c.b16 %v2121, %v2119
        %v2160 = vpack.c.b16 %v2124, %v2122
        %v2161 = vpack.c.b16 %v2125, %v2123
        %v2162 = vpack.c.b16 %v2128, %v2126
        %v2163 = vpack.c.b16 %v2129, %v2127
        %v2164 = vpack.c.b16 %v2132, %v2130
        %v2165 = vpack.c.b16 %v2133, %v2131
        %2198 = vmatprep.subr.bf16.mxu0 %v2135
        %2199 = vmatpush1.bf16.msra.mxu0 %v2134
        %2200 = vmatprep.subr.bf16.mxu0 %v2137
        %2201 = vmatpush1.bf16.msra.mxu0 %v2136
        %2202 = vmatprep.subr.bf16.mxu0 %v2139
        %2203 = vmatpush1.bf16.msra.mxu0 %v2138
        %2204 = vmatprep.subr.bf16.mxu0 %v2141
        %2205 = vmatpush1.bf16.msra.mxu0 %v2140
        %2206 = vmatprep.subr.bf16.mxu0 %v2143
        %2207 = vmatpush1.bf16.msra.mxu0 %v2142
        %2208 = vmatprep.subr.bf16.mxu0 %v2145
        %2209 = vmatpush1.bf16.msra.mxu0 %v2144
        %2210 = vmatprep.subr.bf16.mxu0 %v2147
        %2211 = vmatpush1.bf16.msra.mxu0 %v2146
        %2212 = vmatprep.subr.bf16.mxu0 %v2149
        %2213 = vmatpush1.bf16.msra.mxu0 %v2148
        %2214 = vmatprep.subr.bf16.mxu0 %v2151
        %2215 = vmatpush1.bf16.msra.mxu0 %v2150
        %2216 = vmatprep.subr.bf16.mxu0 %v2153
        %2217 = vmatpush1.bf16.msra.mxu0 %v2152
        %2218 = vmatprep.subr.bf16.mxu0 %v2155
        %2219 = vmatpush1.bf16.msra.mxu0 %v2154
        %2220 = vmatprep.subr.bf16.mxu0 %v2157
        %2221 = vmatpush1.bf16.msra.mxu0 %v2156
        %2222 = vmatprep.subr.bf16.mxu0 %v2159
        %2223 = vmatpush1.bf16.msra.mxu0 %v2158
        %2224 = vmatprep.subr.bf16.mxu0 %v2161
        %2225 = vmatpush1.bf16.msra.mxu0 %v2160
        %2226 = vmatprep.subr.bf16.mxu0 %v2163
        %2227 = vmatpush1.bf16.msra.mxu0 %v2162
        %2228 = vmatprep.subr.bf16.mxu0 %v2165
        %2229 = vmatpush1.bf16.msra.mxu0 %v2164
        %2230 = vmatprep.mubr.bf16.mxu0 %v1992
        %2231 = vmatmul.mubr.bf16.gmra.mrb[0].mxu0 %v1991
        %v2232 = vpop.f32.mrb[0].mxu0
        %v2233 = vadd.f32 %v2031, %v2232
        %v2234 = vpop.f32.mrb[0].mxu0
        %v2235 = vadd.f32 %v2035, %v2234
        %v2236 = vpop.f32.mrb[0].mxu0
        %v2237 = vadd.f32 %v2031, %v2236
        %v2238 = vpop.f32.mrb[0].mxu0
        %v2239 = vadd.f32 %v2035, %v2238
        %2240 = vdwg.mxu0
        %v2241 = vmax.f32 %v2233, 0.0
        %v2242 = vmax.f32 %v2235, 0.0
        %v2243 = vmax.f32 %v2237, 0.0
        %v2244 = vmax.f32 %v2239, 0.0
        %v2245 = vpack.c.bf16 %v2243, %v2241
        %v2246 = vpack.c.bf16 %v2244, %v2242
        %v2247 = vld [vmem:[#allocation8 + $0x280] sm:$0xff]
        %v2248 = vld [vmem:[#allocation8 + $0x288] sm:$0xff]
        %v2249 = vld [vmem:[#allocation8 + $0x290] sm:$0xff]
        %v2250 = vld [vmem:[#allocation8 + $0x298] sm:$0xff]
        %v2251 = vld [vmem:[#allocation8 + $0x2a0] sm:$0xff]
        %v2252 = vld [vmem:[#allocation8 + $0x2a8] sm:$0xff]
        %v2253 = vld [vmem:[#allocation8 + $0x2b0] sm:$0xff]
        %v2254 = vld [vmem:[#allocation8 + $0x2b8] sm:$0xff]
        %v2255 = vld [vmem:[#allocation8 + $0x2c0] sm:$0xff]
        %v2256 = vld [vmem:[#allocation8 + $0x2c8] sm:$0xff]
        %v2257 = vld [vmem:[#allocation8 + $0x2d0] sm:$0xff]
        %v2258 = vld [vmem:[#allocation8 + $0x2d8] sm:$0xff]
        %v2259 = vld [vmem:[#allocation8 + $0x2e0] sm:$0xff]
        %v2260 = vld [vmem:[#allocation8 + $0x2e8] sm:$0xff]
        %v2261 = vld [vmem:[#allocation8 + $0x2f0] sm:$0xff]
        %v2262 = vld [vmem:[#allocation8 + $0x2f8] sm:$0xff]
        %v2263 = vld [vmem:[#allocation8 + $0x300] sm:$0xff]
        %v2264 = vld [vmem:[#allocation8 + $0x308] sm:$0xff]
        %v2265 = vld [vmem:[#allocation8 + $0x310] sm:$0xff]
        %v2266 = vld [vmem:[#allocation8 + $0x318] sm:$0xff]
        %v2267 = vld [vmem:[#allocation8 + $0x320] sm:$0xff]
        %v2268 = vld [vmem:[#allocation8 + $0x328] sm:$0xff]
        %v2269 = vld [vmem:[#allocation8 + $0x330] sm:$0xff]
        %v2270 = vld [vmem:[#allocation8 + $0x338] sm:$0xff]
        %v2271 = vld [vmem:[#allocation8 + $0x340] sm:$0xff]
        %v2272 = vld [vmem:[#allocation8 + $0x348] sm:$0xff]
        %v2273 = vld [vmem:[#allocation8 + $0x350] sm:$0xff]
        %v2274 = vld [vmem:[#allocation8 + $0x358] sm:$0xff]
        %v2275 = vld [vmem:[#allocation8 + $0x360] sm:$0xff]
        %v2276 = vld [vmem:[#allocation8 + $0x368] sm:$0xff]
        %v2277 = vld [vmem:[#allocation8 + $0x370] sm:$0xff]
        %v2278 = vld [vmem:[#allocation8 + $0x378] sm:$0xff]
        %s2279 = scalar_lea.vmem [#allocation13], 4
        %v2280 = vld [vmem:[%s2279] ss:$8 sm:$0x3]
        %v2282 = vlaneseq
        %v2283 = vshrl.u32 %v2282, 7
        %v2284 = vsub.s32 0, %v2283
        %v2285 = vrot.slane %v2280, %v2284
        %v2286 = vlaneseq
        %v2287 = vshrl.u32 %v2286, 7
        %v2288 = vsub.s32 1, %v2287
        %v2289 = vrot.slane %v2280, %v2288
        %v2324 = vunpack.c.l.b16 %v2247
        %v2325 = vunpack.c.h.b16 %v2247
        %v2326 = vunpack.c.l.b16 %v2248
        %v2327 = vunpack.c.h.b16 %v2248
        %v2328 = vunpack.c.l.b16 %v2249
        %v2329 = vunpack.c.h.b16 %v2249
        %v2330 = vunpack.c.l.b16 %v2250
        %v2331 = vunpack.c.h.b16 %v2250
        %v2332 = vunpack.c.l.b16 %v2251
        %v2333 = vunpack.c.h.b16 %v2251
        %v2334 = vunpack.c.l.b16 %v2252
        %v2335 = vunpack.c.h.b16 %v2252
        %v2336 = vunpack.c.l.b16 %v2253
        %v2337 = vunpack.c.h.b16 %v2253
        %v2338 = vunpack.c.l.b16 %v2254
        %v2339 = vunpack.c.h.b16 %v2254
        %v2340 = vunpack.c.l.b16 %v2255
        %v2341 = vunpack.c.h.b16 %v2255
        %v2342 = vunpack.c.l.b16 %v2256
        %v2343 = vunpack.c.h.b16 %v2256
        %v2344 = vunpack.c.l.b16 %v2257
        %v2345 = vunpack.c.h.b16 %v2257
        %v2346 = vunpack.c.l.b16 %v2258
        %v2347 = vunpack.c.h.b16 %v2258
        %v2348 = vunpack.c.l.b16 %v2259
        %v2349 = vunpack.c.h.b16 %v2259
        %v2350 = vunpack.c.l.b16 %v2260
        %v2351 = vunpack.c.h.b16 %v2260
        %v2352 = vunpack.c.l.b16 %v2261
        %v2353 = vunpack.c.h.b16 %v2261
        %v2354 = vunpack.c.l.b16 %v2262
        %v2355 = vunpack.c.h.b16 %v2262
        %v2356 = vunpack.c.l.b16 %v2263
        %v2357 = vunpack.c.h.b16 %v2263
        %v2358 = vunpack.c.l.b16 %v2264
        %v2359 = vunpack.c.h.b16 %v2264
        %v2360 = vunpack.c.l.b16 %v2265
        %v2361 = vunpack.c.h.b16 %v2265
        %v2362 = vunpack.c.l.b16 %v2266
        %v2363 = vunpack.c.h.b16 %v2266
        %v2364 = vunpack.c.l.b16 %v2267
        %v2365 = vunpack.c.h.b16 %v2267
        %v2366 = vunpack.c.l.b16 %v2268
        %v2367 = vunpack.c.h.b16 %v2268
        %v2368 = vunpack.c.l.b16 %v2269
        %v2369 = vunpack.c.h.b16 %v2269
        %v2370 = vunpack.c.l.b16 %v2270
        %v2371 = vunpack.c.h.b16 %v2270
        %v2372 = vunpack.c.l.b16 %v2271
        %v2373 = vunpack.c.h.b16 %v2271
        %v2374 = vunpack.c.l.b16 %v2272
        %v2375 = vunpack.c.h.b16 %v2272
        %v2376 = vunpack.c.l.b16 %v2273
        %v2377 = vunpack.c.h.b16 %v2273
        %v2378 = vunpack.c.l.b16 %v2274
        %v2379 = vunpack.c.h.b16 %v2274
        %v2380 = vunpack.c.l.b16 %v2275
        %v2381 = vunpack.c.h.b16 %v2275
        %v2382 = vunpack.c.l.b16 %v2276
        %v2383 = vunpack.c.h.b16 %v2276
        %v2384 = vunpack.c.l.b16 %v2277
        %v2385 = vunpack.c.h.b16 %v2277
        %v2386 = vunpack.c.l.b16 %v2278
        %v2387 = vunpack.c.h.b16 %v2278
        %v2388 = vpack.c.b16 %v2326, %v2324
        %v2389 = vpack.c.b16 %v2327, %v2325
        %v2390 = vpack.c.b16 %v2330, %v2328
        %v2391 = vpack.c.b16 %v2331, %v2329
        %v2392 = vpack.c.b16 %v2334, %v2332
        %v2393 = vpack.c.b16 %v2335, %v2333
        %v2394 = vpack.c.b16 %v2338, %v2336
        %v2395 = vpack.c.b16 %v2339, %v2337
        %v2396 = vpack.c.b16 %v2342, %v2340
        %v2397 = vpack.c.b16 %v2343, %v2341
        %v2398 = vpack.c.b16 %v2346, %v2344
        %v2399 = vpack.c.b16 %v2347, %v2345
        %v2400 = vpack.c.b16 %v2350, %v2348
        %v2401 = vpack.c.b16 %v2351, %v2349
        %v2402 = vpack.c.b16 %v2354, %v2352
        %v2403 = vpack.c.b16 %v2355, %v2353
        %v2404 = vpack.c.b16 %v2358, %v2356
        %v2405 = vpack.c.b16 %v2359, %v2357
        %v2406 = vpack.c.b16 %v2362, %v2360
        %v2407 = vpack.c.b16 %v2363, %v2361
        %v2408 = vpack.c.b16 %v2366, %v2364
        %v2409 = vpack.c.b16 %v2367, %v2365
        %v2410 = vpack.c.b16 %v2370, %v2368
        %v2411 = vpack.c.b16 %v2371, %v2369
        %v2412 = vpack.c.b16 %v2374, %v2372
        %v2413 = vpack.c.b16 %v2375, %v2373
        %v2414 = vpack.c.b16 %v2378, %v2376
        %v2415 = vpack.c.b16 %v2379, %v2377
        %v2416 = vpack.c.b16 %v2382, %v2380
        %v2417 = vpack.c.b16 %v2383, %v2381
        %v2418 = vpack.c.b16 %v2386, %v2384
        %v2419 = vpack.c.b16 %v2387, %v2385
        %2452 = vmatprep.subr.bf16.mxu0 %v2389
        %2453 = vmatpush1.bf16.msra.mxu0 %v2388
        %2454 = vmatprep.subr.bf16.mxu0 %v2391
        %2455 = vmatpush1.bf16.msra.mxu0 %v2390
        %2456 = vmatprep.subr.bf16.mxu0 %v2393
        %2457 = vmatpush1.bf16.msra.mxu0 %v2392
        %2458 = vmatprep.subr.bf16.mxu0 %v2395
        %2459 = vmatpush1.bf16.msra.mxu0 %v2394
        %2460 = vmatprep.subr.bf16.mxu0 %v2397
        %2461 = vmatpush1.bf16.msra.mxu0 %v2396
        %2462 = vmatprep.subr.bf16.mxu0 %v2399
        %2463 = vmatpush1.bf16.msra.mxu0 %v2398
        %2464 = vmatprep.subr.bf16.mxu0 %v2401
        %2465 = vmatpush1.bf16.msra.mxu0 %v2400
        %2466 = vmatprep.subr.bf16.mxu0 %v2403
        %2467 = vmatpush1.bf16.msra.mxu0 %v2402
        %2468 = vmatprep.subr.bf16.mxu0 %v2405
        %2469 = vmatpush1.bf16.msra.mxu0 %v2404
        %2470 = vmatprep.subr.bf16.mxu0 %v2407
        %2471 = vmatpush1.bf16.msra.mxu0 %v2406
        %2472 = vmatprep.subr.bf16.mxu0 %v2409
        %2473 = vmatpush1.bf16.msra.mxu0 %v2408
        %2474 = vmatprep.subr.bf16.mxu0 %v2411
        %2475 = vmatpush1.bf16.msra.mxu0 %v2410
        %2476 = vmatprep.subr.bf16.mxu0 %v2413
        %2477 = vmatpush1.bf16.msra.mxu0 %v2412
        %2478 = vmatprep.subr.bf16.mxu0 %v2415
        %2479 = vmatpush1.bf16.msra.mxu0 %v2414
        %2480 = vmatprep.subr.bf16.mxu0 %v2417
        %2481 = vmatpush1.bf16.msra.mxu0 %v2416
        %2482 = vmatprep.subr.bf16.mxu0 %v2419
        %2483 = vmatpush1.bf16.msra.mxu0 %v2418
        %2484 = vmatprep.mubr.bf16.mxu0 %v2246
        %2485 = vmatmul.mubr.bf16.gmra.mrb[0].mxu0 %v2245
        %v2486 = vpop.f32.mrb[0].mxu0
        %v2487 = vadd.f32 %v2285, %v2486
        %v2488 = vpop.f32.mrb[0].mxu0
        %v2489 = vadd.f32 %v2289, %v2488
        %v2490 = vpop.f32.mrb[0].mxu0
        %v2491 = vadd.f32 %v2285, %v2490
        %v2492 = vpop.f32.mrb[0].mxu0
        %v2493 = vadd.f32 %v2289, %v2492
        %2494 = vdwg.mxu0
        %v2495 = vmax.f32 %v2487, 0.0
        %v2496 = vmax.f32 %v2489, 0.0
        %v2497 = vmax.f32 %v2491, 0.0
        %v2498 = vmax.f32 %v2493, 0.0
        %v2499 = vpack.c.bf16 %v2497, %v2495
        %v2500 = vpack.c.bf16 %v2498, %v2496
        %v2501 = vld [vmem:[#allocation8 + $0x380] sm:$0xff]
        %v2502 = vld [vmem:[#allocation8 + $0x388] sm:$0xff]
        %v2503 = vld [vmem:[#allocation8 + $0x390] sm:$0xff]
        %v2504 = vld [vmem:[#allocation8 + $0x398] sm:$0xff]
        %v2505 = vld [vmem:[#allocation8 + $0x3a0] sm:$0xff]
        %v2506 = vld [vmem:[#allocation8 + $0x3a8] sm:$0xff]
        %v2507 = vld [vmem:[#allocation8 + $0x3b0] sm:$0xff]
        %v2508 = vld [vmem:[#allocation8 + $0x3b8] sm:$0xff]
        %v2509 = vld [vmem:[#allocation8 + $0x3c0] sm:$0xff]
        %v2510 = vld [vmem:[#allocation8 + $0x3c8] sm:$0xff]
        %v2511 = vld [vmem:[#allocation8 + $0x3d0] sm:$0xff]
        %v2512 = vld [vmem:[#allocation8 + $0x3d8] sm:$0xff]
        %v2513 = vld [vmem:[#allocation8 + $0x3e0] sm:$0xff]
        %v2514 = vld [vmem:[#allocation8 + $0x3e8] sm:$0xff]
        %v2515 = vld [vmem:[#allocation8 + $0x3f0] sm:$0xff]
        %v2516 = vld [vmem:[#allocation8 + $0x3f8] sm:$0xff]
        %v2517 = vld [vmem:[#allocation8 + $0x400] sm:$0xff]
        %v2518 = vld [vmem:[#allocation8 + $0x408] sm:$0xff]
        %v2519 = vld [vmem:[#allocation8 + $0x410] sm:$0xff]
        %v2520 = vld [vmem:[#allocation8 + $0x418] sm:$0xff]
        %v2521 = vld [vmem:[#allocation8 + $0x420] sm:$0xff]
        %v2522 = vld [vmem:[#allocation8 + $0x428] sm:$0xff]
        %v2523 = vld [vmem:[#allocation8 + $0x430] sm:$0xff]
        %v2524 = vld [vmem:[#allocation8 + $0x438] sm:$0xff]
        %v2525 = vld [vmem:[#allocation8 + $0x440] sm:$0xff]
        %v2526 = vld [vmem:[#allocation8 + $0x448] sm:$0xff]
        %v2527 = vld [vmem:[#allocation8 + $0x450] sm:$0xff]
        %v2528 = vld [vmem:[#allocation8 + $0x458] sm:$0xff]
        %v2529 = vld [vmem:[#allocation8 + $0x460] sm:$0xff]
        %v2530 = vld [vmem:[#allocation8 + $0x468] sm:$0xff]
        %v2531 = vld [vmem:[#allocation8 + $0x470] sm:$0xff]
        %v2532 = vld [vmem:[#allocation8 + $0x478] sm:$0xff]
        %s2533 = scalar_lea.vmem [#allocation13], 5
        %v2534 = vld [vmem:[%s2533] ss:$8 sm:$0x3]
        %v2536 = vlaneseq
        %v2537 = vshrl.u32 %v2536, 7
        %v2538 = vsub.s32 0, %v2537
        %v2539 = vrot.slane %v2534, %v2538
        %v2540 = vlaneseq
        %v2541 = vshrl.u32 %v2540, 7
        %v2542 = vsub.s32 1, %v2541
        %v2543 = vrot.slane %v2534, %v2542
        %v2578 = vunpack.c.l.b16 %v2501
        %v2579 = vunpack.c.h.b16 %v2501
        %v2580 = vunpack.c.l.b16 %v2502
        %v2581 = vunpack.c.h.b16 %v2502
        %v2582 = vunpack.c.l.b16 %v2503
        %v2583 = vunpack.c.h.b16 %v2503
        %v2584 = vunpack.c.l.b16 %v2504
        %v2585 = vunpack.c.h.b16 %v2504
        %v2586 = vunpack.c.l.b16 %v2505
        %v2587 = vunpack.c.h.b16 %v2505
        %v2588 = vunpack.c.l.b16 %v2506
        %v2589 = vunpack.c.h.b16 %v2506
        %v2590 = vunpack.c.l.b16 %v2507
        %v2591 = vunpack.c.h.b16 %v2507
        %v2592 = vunpack.c.l.b16 %v2508
        %v2593 = vunpack.c.h.b16 %v2508
        %v2594 = vunpack.c.l.b16 %v2509
        %v2595 = vunpack.c.h.b16 %v2509
        %v2596 = vunpack.c.l.b16 %v2510
        %v2597 = vunpack.c.h.b16 %v2510
        %v2598 = vunpack.c.l.b16 %v2511
        %v2599 = vunpack.c.h.b16 %v2511
        %v2600 = vunpack.c.l.b16 %v2512
        %v2601 = vunpack.c.h.b16 %v2512
        %v2602 = vunpack.c.l.b16 %v2513
        %v2603 = vunpack.c.h.b16 %v2513
        %v2604 = vunpack.c.l.b16 %v2514
        %v2605 = vunpack.c.h.b16 %v2514
        %v2606 = vunpack.c.l.b16 %v2515
        %v2607 = vunpack.c.h.b16 %v2515
        %v2608 = vunpack.c.l.b16 %v2516
        %v2609 = vunpack.c.h.b16 %v2516
        %v2610 = vunpack.c.l.b16 %v2517
        %v2611 = vunpack.c.h.b16 %v2517
        %v2612 = vunpack.c.l.b16 %v2518
        %v2613 = vunpack.c.h.b16 %v2518
        %v2614 = vunpack.c.l.b16 %v2519
        %v2615 = vunpack.c.h.b16 %v2519
        %v2616 = vunpack.c.l.b16 %v2520
        %v2617 = vunpack.c.h.b16 %v2520
        %v2618 = vunpack.c.l.b16 %v2521
        %v2619 = vunpack.c.h.b16 %v2521
        %v2620 = vunpack.c.l.b16 %v2522
        %v2621 = vunpack.c.h.b16 %v2522
        %v2622 = vunpack.c.l.b16 %v2523
        %v2623 = vunpack.c.h.b16 %v2523
        %v2624 = vunpack.c.l.b16 %v2524
        %v2625 = vunpack.c.h.b16 %v2524
        %v2626 = vunpack.c.l.b16 %v2525
        %v2627 = vunpack.c.h.b16 %v2525
        %v2628 = vunpack.c.l.b16 %v2526
        %v2629 = vunpack.c.h.b16 %v2526
        %v2630 = vunpack.c.l.b16 %v2527
        %v2631 = vunpack.c.h.b16 %v2527
        %v2632 = vunpack.c.l.b16 %v2528
        %v2633 = vunpack.c.h.b16 %v2528
        %v2634 = vunpack.c.l.b16 %v2529
        %v2635 = vunpack.c.h.b16 %v2529
        %v2636 = vunpack.c.l.b16 %v2530
        %v2637 = vunpack.c.h.b16 %v2530
        %v2638 = vunpack.c.l.b16 %v2531
        %v2639 = vunpack.c.h.b16 %v2531
        %v2640 = vunpack.c.l.b16 %v2532
        %v2641 = vunpack.c.h.b16 %v2532
        %v2642 = vpack.c.b16 %v2580, %v2578
        %v2643 = vpack.c.b16 %v2581, %v2579
        %v2644 = vpack.c.b16 %v2584, %v2582
        %v2645 = vpack.c.b16 %v2585, %v2583
        %v2646 = vpack.c.b16 %v2588, %v2586
        %v2647 = vpack.c.b16 %v2589, %v2587
        %v2648 = vpack.c.b16 %v2592, %v2590
        %v2649 = vpack.c.b16 %v2593, %v2591
        %v2650 = vpack.c.b16 %v2596, %v2594
        %v2651 = vpack.c.b16 %v2597, %v2595
        %v2652 = vpack.c.b16 %v2600, %v2598
        %v2653 = vpack.c.b16 %v2601, %v2599
        %v2654 = vpack.c.b16 %v2604, %v2602
        %v2655 = vpack.c.b16 %v2605, %v2603
        %v2656 = vpack.c.b16 %v2608, %v2606
        %v2657 = vpack.c.b16 %v2609, %v2607
        %v2658 = vpack.c.b16 %v2612, %v2610
        %v2659 = vpack.c.b16 %v2613, %v2611
        %v2660 = vpack.c.b16 %v2616, %v2614
        %v2661 = vpack.c.b16 %v2617, %v2615
        %v2662 = vpack.c.b16 %v2620, %v2618
        %v2663 = vpack.c.b16 %v2621, %v2619
        %v2664 = vpack.c.b16 %v2624, %v2622
        %v2665 = vpack.c.b16 %v2625, %v2623
        %v2666 = vpack.c.b16 %v2628, %v2626
        %v2667 = vpack.c.b16 %v2629, %v2627
        %v2668 = vpack.c.b16 %v2632, %v2630
        %v2669 = vpack.c.b16 %v2633, %v2631
        %v2670 = vpack.c.b16 %v2636, %v2634
        %v2671 = vpack.c.b16 %v2637, %v2635
        %v2672 = vpack.c.b16 %v2640, %v2638
        %v2673 = vpack.c.b16 %v2641, %v2639
        %2706 = vmatprep.subr.bf16.mxu0 %v2643
        %2707 = vmatpush1.bf16.msra.mxu0 %v2642
        %2708 = vmatprep.subr.bf16.mxu0 %v2645
        %2709 = vmatpush1.bf16.msra.mxu0 %v2644
        %2710 = vmatprep.subr.bf16.mxu0 %v2647
        %2711 = vmatpush1.bf16.msra.mxu0 %v2646
        %2712 = vmatprep.subr.bf16.mxu0 %v2649
        %2713 = vmatpush1.bf16.msra.mxu0 %v2648
        %2714 = vmatprep.subr.bf16.mxu0 %v2651
        %2715 = vmatpush1.bf16.msra.mxu0 %v2650
        %2716 = vmatprep.subr.bf16.mxu0 %v2653
        %2717 = vmatpush1.bf16.msra.mxu0 %v2652
        %2718 = vmatprep.subr.bf16.mxu0 %v2655
        %2719 = vmatpush1.bf16.msra.mxu0 %v2654
        %2720 = vmatprep.subr.bf16.mxu0 %v2657
        %2721 = vmatpush1.bf16.msra.mxu0 %v2656
        %2722 = vmatprep.subr.bf16.mxu0 %v2659
        %2723 = vmatpush1.bf16.msra.mxu0 %v2658
        %2724 = vmatprep.subr.bf16.mxu0 %v2661
        %2725 = vmatpush1.bf16.msra.mxu0 %v2660
        %2726 = vmatprep.subr.bf16.mxu0 %v2663
        %2727 = vmatpush1.bf16.msra.mxu0 %v2662
        %2728 = vmatprep.subr.bf16.mxu0 %v2665
        %2729 = vmatpush1.bf16.msra.mxu0 %v2664
        %2730 = vmatprep.subr.bf16.mxu0 %v2667
        %2731 = vmatpush1.bf16.msra.mxu0 %v2666
        %2732 = vmatprep.subr.bf16.mxu0 %v2669
        %2733 = vmatpush1.bf16.msra.mxu0 %v2668
        %2734 = vmatprep.subr.bf16.mxu0 %v2671
        %2735 = vmatpush1.bf16.msra.mxu0 %v2670
        %2736 = vmatprep.subr.bf16.mxu0 %v2673
        %2737 = vmatpush1.bf16.msra.mxu0 %v2672
        %2738 = vmatprep.mubr.bf16.mxu0 %v2500
        %2739 = vmatmul.mubr.bf16.gmra.mrb[0].mxu0 %v2499
        %v2740 = vpop.f32.mrb[0].mxu0
        %v2741 = vadd.f32 %v2539, %v2740
        %v2742 = vpop.f32.mrb[0].mxu0
        %v2743 = vadd.f32 %v2543, %v2742
        %v2744 = vpop.f32.mrb[0].mxu0
        %v2745 = vadd.f32 %v2539, %v2744
        %v2746 = vpop.f32.mrb[0].mxu0
        %v2747 = vadd.f32 %v2543, %v2746
        %2748 = vdwg.mxu0
        %v2749 = vmul.f32 %v2743, 1.442695
        %v2750 = vpow.pop %v2749
        %v2751 = vmul.f32 %v2747, 1.442695
        %v2752 = vpow.pop %v2751
        %v2753 = vld [vmem:[%s384] sm:$0xff]
        %v2754 = vld [vmem:[%s384 + $0x8] sm:$0xff]
        %v2755 = vmul.f32 %v2750, %v2753
        %v2756 = vmul.f32 %v2752, %v2754
        %v2757 = vadd.f32 %v2741, %v2755
        %v2758 = vadd.f32 %v2745, %v2756
        %v2759 = vmul.f32 %v2750, %v2750
        %v2760 = vmul.f32 %v2752, %v2752
        %v2761 = vmul.f32 %v2741, %v2741
        %v2762 = vmul.f32 %v2745, %v2745
        %v2763 = vadd.f32 %v2759, %v2761
        %v2764 = vadd.f32 %v2760, %v2762
        %v2765 = vsub.f32 %v2763, %v2743
        %v2766 = vsub.f32 %v2764, %v2747
        %v2767 = vsub.f32 %v2765, 0.5
        %v2768 = vsub.f32 %v2766, 0.5
        %v2769 = vlaneseq
        %v2770 = vand.u32 %v2769, 127
        %vm2771 = vcmp.lt.s32.totalorder %v2770, 16
        %s2772 = smul.u32 %s34, 16
        %v2773 = vlaneseq
        %v2774 = vshrl.u32 %v2773, 7
        %v2775 = vadd.s32 %v2774, 8
        %v2776 = vstv %s2772
        %v2777 = vadd.s32 %v2776, %v2774
        %v2778 = vadd.s32 %v2776, %v2775
        %vm2779 = vcmp.lt.s32.totalorder %v2777, 40
        %vm2780 = vcmp.lt.s32.totalorder %v2778, 40
        %v2781 = vsel %vm2771, 1, 0
        %vm2782 = vcmp.eq.s32.totalorder %v2781, 1
        %v2783 = vsel %vm2779, 1, 0
        %v2784 = vsel %vm2780, 1, 0
        %vm2785 = vcmp.eq.s32.totalorder %v2783, 1
        %vm2786 = vcmp.eq.s32.totalorder %v2784, 1
        %vm2787 = vmand %vm2782, %vm2785
        %vm2788 = vmand %vm2782, %vm2786
        %v2789 = vsel %vm2787, %v2767, 0.0
        %v2790 = vsel %vm2788, %v2768, 0.0
        %v2791 = vadd.f32 %v2789, %v2790
        %v2792 = vrot.slane %v2791, 4
        %v2793 = vadd.f32 %v2791, %v2792
        %v2794 = vrot.slane %v2793, 2
        %v2795 = vadd.f32 %v2793, %v2794
        %v2796 = vrot.slane %v2795, 1
        %v2797 = vadd.f32 %v2795, %v2796
        %2798 = vst [vmem:[%s445] sm:$0x1] %v2797
        %v2799 = vpack.c.bf16 %v2758, %v2757
        %v2800 = vld [vmem:[#allocation7] sm:$0xf]
        %v2801 = vld [vmem:[#allocation7 + $0x4] sm:$0xf]
        %v2802 = vld [vmem:[#allocation7 + $0x8] sm:$0xf]
        %v2803 = vld [vmem:[#allocation7 + $0xc] sm:$0xf]
        %v2804 = vld [vmem:[#allocation7 + $0x10] sm:$0xf]
        %v2805 = vld [vmem:[#allocation7 + $0x14] sm:$0xf]
        %v2806 = vld [vmem:[#allocation7 + $0x18] sm:$0xf]
        %v2807 = vld [vmem:[#allocation7 + $0x1c] sm:$0xf]
        %v2808 = vld [vmem:[#allocation7 + $0x20] sm:$0xf]
        %v2809 = vld [vmem:[#allocation7 + $0x24] sm:$0xf]
        %v2810 = vld [vmem:[#allocation7 + $0x28] sm:$0xf]
        %v2811 = vld [vmem:[#allocation7 + $0x2c] sm:$0xf]
        %v2812 = vld [vmem:[#allocation7 + $0x30] sm:$0xf]
        %v2813 = vld [vmem:[#allocation7 + $0x34] sm:$0xf]
        %v2814 = vld [vmem:[#allocation7 + $0x38] sm:$0xf]
        %v2815 = vld [vmem:[#allocation7 + $0x3c] sm:$0xf]
        %v2816 = vld [vmem:[#allocation13 + $0x6] ss:$0 sm:$0xff]
        %v2833 = vunpack.c.l.b16 %v2800
        %v2834 = vunpack.c.l.b16 %v2801
        %v2835 = vunpack.c.l.b16 %v2802
        %v2836 = vunpack.c.l.b16 %v2803
        %v2837 = vunpack.c.l.b16 %v2804
        %v2838 = vunpack.c.l.b16 %v2805
        %v2839 = vunpack.c.l.b16 %v2806
        %v2840 = vunpack.c.l.b16 %v2807
        %v2841 = vunpack.c.l.b16 %v2808
        %v2842 = vunpack.c.l.b16 %v2809
        %v2843 = vunpack.c.l.b16 %v2810
        %v2844 = vunpack.c.l.b16 %v2811
        %v2845 = vunpack.c.l.b16 %v2812
        %v2846 = vunpack.c.l.b16 %v2813
        %v2847 = vunpack.c.l.b16 %v2814
        %v2848 = vunpack.c.l.b16 %v2815
        %v2849 = vpack.c.b16 %v2834, %v2833
        %v2850 = vpack.c.b16 %v2836, %v2835
        %v2851 = vpack.c.b16 %v2838, %v2837
        %v2852 = vpack.c.b16 %v2840, %v2839
        %v2853 = vpack.c.b16 %v2842, %v2841
        %v2854 = vpack.c.b16 %v2844, %v2843
        %v2855 = vpack.c.b16 %v2846, %v2845
        %v2856 = vpack.c.b16 %v2848, %v2847
        %2865 = vmatprep.subr.bf16.mxu0 0
        %2866 = vmatpush1.bf16.msra.mxu0 %v2849
        %2867 = vmatprep.subr.bf16.mxu0 0
        %2868 = vmatpush1.bf16.msra.mxu0 %v2850
        %2869 = vmatprep.subr.bf16.mxu0 0
        %2870 = vmatpush1.bf16.msra.mxu0 %v2851
        %2871 = vmatprep.subr.bf16.mxu0 0
        %2872 = vmatpush1.bf16.msra.mxu0 %v2852
        %2873 = vmatprep.subr.bf16.mxu0 0
        %2874 = vmatpush1.bf16.msra.mxu0 %v2853
        %2875 = vmatprep.subr.bf16.mxu0 0
        %2876 = vmatpush1.bf16.msra.mxu0 %v2854
        %2877 = vmatprep.subr.bf16.mxu0 0
        %2878 = vmatpush1.bf16.msra.mxu0 %v2855
        %2879 = vmatprep.subr.bf16.mxu0 0
        %2880 = vmatpush1.bf16.msra.mxu0 %v2856
        %2881 = vmatprep.subr.bf16.mxu0 0
        %2882 = vmatpush1.bf16.msra.mxu0 0
        %2883 = vmatprep.subr.bf16.mxu0 0
        %2884 = vmatpush1.bf16.msra.mxu0 0
        %2885 = vmatprep.subr.bf16.mxu0 0
        %2886 = vmatpush1.bf16.msra.mxu0 0
        %2887 = vmatprep.subr.bf16.mxu0 0
        %2888 = vmatpush1.bf16.msra.mxu0 0
        %2889 = vmatprep.subr.bf16.mxu0 0
        %2890 = vmatpush1.bf16.msra.mxu0 0
        %2891 = vmatprep.subr.bf16.mxu0 0
        %2892 = vmatpush1.bf16.msra.mxu0 0
        %2893 = vmatprep.subr.bf16.mxu0 0
        %2894 = vmatpush1.bf16.msra.mxu0 0
        %2895 = vmatprep.subr.bf16.mxu0 0
        %2896 = vmatpush1.bf16.msra.mxu0 0
        %2897 = vmatprep.mubr.bf16.mxu0 0
        %2898 = vmatmul.mubr.bf16.gmra.mrb[0].mxu0 %v2799
        %v2899 = vpop.f32.mrb[0].mxu0
        %v2900 = vadd.f32 %v2816, %v2899
        %v2901 = vpop.f32.mrb[0].mxu0
        %v2902 = vpop.f32.mrb[0].mxu0
        %v2903 = vadd.f32 %v2816, %v2902
        %v2904 = vpop.f32.mrb[0].mxu0
        %2905 = vdwg.mxu0
        %v2906 = vmax.f32 %v2900, 0.0
        %v2907 = vmax.f32 %v2903, 0.0
        %v2908 = vpack.c.bf16 %v2907, %v2906
        %v2909 = vld [vmem:[#allocation8 + $0x480] sm:$0xff]
        %v2910 = vld [vmem:[#allocation8 + $0x488] sm:$0xff]
        %v2911 = vld [vmem:[#allocation8 + $0x490] sm:$0xff]
        %v2912 = vld [vmem:[#allocation8 + $0x498] sm:$0xff]
        %v2913 = vld [vmem:[#allocation8 + $0x4a0] sm:$0xff]
        %v2914 = vld [vmem:[#allocation8 + $0x4a8] sm:$0xff]
        %v2915 = vld [vmem:[#allocation8 + $0x4b0] sm:$0xff]
        %v2916 = vld [vmem:[#allocation8 + $0x4b8] sm:$0xff]
        %v2917 = vld [vmem:[#allocation8 + $0x4c0] sm:$0xff]
        %v2918 = vld [vmem:[#allocation8 + $0x4c8] sm:$0xff]
        %v2919 = vld [vmem:[#allocation8 + $0x4d0] sm:$0xff]
        %v2920 = vld [vmem:[#allocation8 + $0x4d8] sm:$0xff]
        %v2921 = vld [vmem:[#allocation8 + $0x4e0] sm:$0xff]
        %v2922 = vld [vmem:[#allocation8 + $0x4e8] sm:$0xff]
        %v2923 = vld [vmem:[#allocation8 + $0x4f0] sm:$0xff]
        %v2924 = vld [vmem:[#allocation8 + $0x4f8] sm:$0xff]
        %s2925 = scalar_lea.vmem [#allocation13], 7
        %v2926 = vld [vmem:[%s2925] ss:$8 sm:$0x3]
        %v2928 = vlaneseq
        %v2929 = vshrl.u32 %v2928, 7
        %v2930 = vsub.s32 0, %v2929
        %v2931 = vrot.slane %v2926, %v2930
        %v2932 = vlaneseq
        %v2933 = vshrl.u32 %v2932, 7
        %v2934 = vsub.s32 1, %v2933
        %v2935 = vrot.slane %v2926, %v2934
        %v2954 = vunpack.c.l.b16 %v2909
        %v2955 = vunpack.c.h.b16 %v2909
        %v2956 = vunpack.c.l.b16 %v2910
        %v2957 = vunpack.c.h.b16 %v2910
        %v2958 = vunpack.c.l.b16 %v2911
        %v2959 = vunpack.c.h.b16 %v2911
        %v2960 = vunpack.c.l.b16 %v2912
        %v2961 = vunpack.c.h.b16 %v2912
        %v2962 = vunpack.c.l.b16 %v2913
        %v2963 = vunpack.c.h.b16 %v2913
        %v2964 = vunpack.c.l.b16 %v2914
        %v2965 = vunpack.c.h.b16 %v2914
        %v2966 = vunpack.c.l.b16 %v2915
        %v2967 = vunpack.c.h.b16 %v2915
        %v2968 = vunpack.c.l.b16 %v2916
        %v2969 = vunpack.c.h.b16 %v2916
        %v2970 = vunpack.c.l.b16 %v2917
        %v2971 = vunpack.c.h.b16 %v2917
        %v2972 = vunpack.c.l.b16 %v2918
        %v2973 = vunpack.c.h.b16 %v2918
        %v2974 = vunpack.c.l.b16 %v2919
        %v2975 = vunpack.c.h.b16 %v2919
        %v2976 = vunpack.c.l.b16 %v2920
        %v2977 = vunpack.c.h.b16 %v2920
        %v2978 = vunpack.c.l.b16 %v2921
        %v2979 = vunpack.c.h.b16 %v2921
        %v2980 = vunpack.c.l.b16 %v2922
        %v2981 = vunpack.c.h.b16 %v2922
        %v2982 = vunpack.c.l.b16 %v2923
        %v2983 = vunpack.c.h.b16 %v2923
        %v2984 = vunpack.c.l.b16 %v2924
        %v2985 = vunpack.c.h.b16 %v2924
        %v2986 = vpack.c.b16 %v2956, %v2954
        %v2987 = vpack.c.b16 %v2957, %v2955
        %v2988 = vpack.c.b16 %v2960, %v2958
        %v2989 = vpack.c.b16 %v2961, %v2959
        %v2990 = vpack.c.b16 %v2964, %v2962
        %v2991 = vpack.c.b16 %v2965, %v2963
        %v2992 = vpack.c.b16 %v2968, %v2966
        %v2993 = vpack.c.b16 %v2969, %v2967
        %v2994 = vpack.c.b16 %v2972, %v2970
        %v2995 = vpack.c.b16 %v2973, %v2971
        %v2996 = vpack.c.b16 %v2976, %v2974
        %v2997 = vpack.c.b16 %v2977, %v2975
        %v2998 = vpack.c.b16 %v2980, %v2978
        %v2999 = vpack.c.b16 %v2981, %v2979
        %v3000 = vpack.c.b16 %v2984, %v2982
        %v3001 = vpack.c.b16 %v2985, %v2983
        %3018 = vmatprep.subr.bf16.mxu0 %v2987
        %3019 = vmatpush1.bf16.msra.mxu0 %v2986
        %3020 = vmatprep.subr.bf16.mxu0 %v2989
        %3021 = vmatpush1.bf16.msra.mxu0 %v2988
        %3022 = vmatprep.subr.bf16.mxu0 %v2991
        %3023 = vmatpush1.bf16.msra.mxu0 %v2990
        %3024 = vmatprep.subr.bf16.mxu0 %v2993
        %3025 = vmatpush1.bf16.msra.mxu0 %v2992
        %3026 = vmatprep.subr.bf16.mxu0 %v2995
        %3027 = vmatpush1.bf16.msra.mxu0 %v2994
        %3028 = vmatprep.subr.bf16.mxu0 %v2997
        %3029 = vmatpush1.bf16.msra.mxu0 %v2996
        %3030 = vmatprep.subr.bf16.mxu0 %v2999
        %3031 = vmatpush1.bf16.msra.mxu0 %v2998
        %3032 = vmatprep.subr.bf16.mxu0 %v3001
        %3033 = vmatpush1.bf16.msra.mxu0 %v3000
        %3034 = vmatprep.subr.bf16.mxu0 0
        %3035 = vmatpush1.bf16.msra.mxu0 0
        %3036 = vmatprep.subr.bf16.mxu0 0
        %3037 = vmatpush1.bf16.msra.mxu0 0
        %3038 = vmatprep.subr.bf16.mxu0 0
        %3039 = vmatpush1.bf16.msra.mxu0 0
        %3040 = vmatprep.subr.bf16.mxu0 0
        %3041 = vmatpush1.bf16.msra.mxu0 0
        %3042 = vmatprep.subr.bf16.mxu0 0
        %3043 = vmatpush1.bf16.msra.mxu0 0
        %3044 = vmatprep.subr.bf16.mxu0 0
        %3045 = vmatpush1.bf16.msra.mxu0 0
        %3046 = vmatprep.subr.bf16.mxu0 0
        %3047 = vmatpush1.bf16.msra.mxu0 0
        %3048 = vmatprep.subr.bf16.mxu0 0
        %3049 = vmatpush1.bf16.msra.mxu0 0
        %3050 = vmatprep.mubr.bf16.mxu0 0
        %3051 = vmatmul.mubr.bf16.gmra.mrb[0].mxu0 %v2908
        %v3052 = vpop.f32.mrb[0].mxu0
        %v3053 = vadd.f32 %v2931, %v3052
        %v3054 = vpop.f32.mrb[0].mxu0
        %v3055 = vadd.f32 %v2935, %v3054
        %v3056 = vpop.f32.mrb[0].mxu0
        %v3057 = vadd.f32 %v2931, %v3056
        %v3058 = vpop.f32.mrb[0].mxu0
        %v3059 = vadd.f32 %v2935, %v3058
        %3060 = vdwg.mxu0
        %v3061 = vmax.f32 %v3053, 0.0
        %v3062 = vmax.f32 %v3055, 0.0
        %v3063 = vmax.f32 %v3057, 0.0
        %v3064 = vmax.f32 %v3059, 0.0
        %v3065 = vpack.c.bf16 %v3063, %v3061
        %v3066 = vpack.c.bf16 %v3064, %v3062
        %v3067 = vld [vmem:[#allocation8 + $0x500] sm:$0xff]
        %v3068 = vld [vmem:[#allocation8 + $0x508] sm:$0xff]
        %v3069 = vld [vmem:[#allocation8 + $0x510] sm:$0xff]
        %v3070 = vld [vmem:[#allocation8 + $0x518] sm:$0xff]
        %v3071 = vld [vmem:[#allocation8 + $0x520] sm:$0xff]
        %v3072 = vld [vmem:[#allocation8 + $0x528] sm:$0xff]
        %v3073 = vld [vmem:[#allocation8 + $0x530] sm:$0xff]
        %v3074 = vld [vmem:[#allocation8 + $0x538] sm:$0xff]
        %v3075 = vld [vmem:[#allocation8 + $0x540] sm:$0xff]
        %v3076 = vld [vmem:[#allocation8 + $0x548] sm:$0xff]
        %v3077 = vld [vmem:[#allocation8 + $0x550] sm:$0xff]
        %v3078 = vld [vmem:[#allocation8 + $0x558] sm:$0xff]
        %v3079 = vld [vmem:[#allocation8 + $0x560] sm:$0xff]
        %v3080 = vld [vmem:[#allocation8 + $0x568] sm:$0xff]
        %v3081 = vld [vmem:[#allocation8 + $0x570] sm:$0xff]
        %v3082 = vld [vmem:[#allocation8 + $0x578] sm:$0xff]
        %v3083 = vld [vmem:[#allocation8 + $0x580] sm:$0xff]
        %v3084 = vld [vmem:[#allocation8 + $0x588] sm:$0xff]
        %v3085 = vld [vmem:[#allocation8 + $0x590] sm:$0xff]
        %v3086 = vld [vmem:[#allocation8 + $0x598] sm:$0xff]
        %v3087 = vld [vmem:[#allocation8 + $0x5a0] sm:$0xff]
        %v3088 = vld [vmem:[#allocation8 + $0x5a8] sm:$0xff]
        %v3089 = vld [vmem:[#allocation8 + $0x5b0] sm:$0xff]
        %v3090 = vld [vmem:[#allocation8 + $0x5b8] sm:$0xff]
        %v3091 = vld [vmem:[#allocation8 + $0x5c0] sm:$0xff]
        %v3092 = vld [vmem:[#allocation8 + $0x5c8] sm:$0xff]
        %v3093 = vld [vmem:[#allocation8 + $0x5d0] sm:$0xff]
        %v3094 = vld [vmem:[#allocation8 + $0x5d8] sm:$0xff]
        %v3095 = vld [vmem:[#allocation8 + $0x5e0] sm:$0xff]
        %v3096 = vld [vmem:[#allocation8 + $0x5e8] sm:$0xff]
        %v3097 = vld [vmem:[#allocation8 + $0x5f0] sm:$0xff]
        %v3098 = vld [vmem:[#allocation8 + $0x5f8] sm:$0xff]
        %s3099 = scalar_lea.vmem [#allocation13], 32
        %v3100 = vld [vmem:[%s3099] ss:$8 sm:$0x3]
        %v3102 = vlaneseq
        %v3103 = vshrl.u32 %v3102, 7
        %v3104 = vsub.s32 0, %v3103
        %v3105 = vrot.slane %v3100, %v3104
        %v3106 = vlaneseq
        %v3107 = vshrl.u32 %v3106, 7
        %v3108 = vsub.s32 1, %v3107
        %v3109 = vrot.slane %v3100, %v3108
        %v3144 = vunpack.c.l.b16 %v3067
        %v3145 = vunpack.c.h.b16 %v3067
        %v3146 = vunpack.c.l.b16 %v3068
        %v3147 = vunpack.c.h.b16 %v3068
        %v3148 = vunpack.c.l.b16 %v3069
        %v3149 = vunpack.c.h.b16 %v3069
        %v3150 = vunpack.c.l.b16 %v3070
        %v3151 = vunpack.c.h.b16 %v3070
        %v3152 = vunpack.c.l.b16 %v3071
        %v3153 = vunpack.c.h.b16 %v3071
        %v3154 = vunpack.c.l.b16 %v3072
        %v3155 = vunpack.c.h.b16 %v3072
        %v3156 = vunpack.c.l.b16 %v3073
        %v3157 = vunpack.c.h.b16 %v3073
        %v3158 = vunpack.c.l.b16 %v3074
        %v3159 = vunpack.c.h.b16 %v3074
        %v3160 = vunpack.c.l.b16 %v3075
        %v3161 = vunpack.c.h.b16 %v3075
        %v3162 = vunpack.c.l.b16 %v3076
        %v3163 = vunpack.c.h.b16 %v3076
        %v3164 = vunpack.c.l.b16 %v3077
        %v3165 = vunpack.c.h.b16 %v3077
        %v3166 = vunpack.c.l.b16 %v3078
        %v3167 = vunpack.c.h.b16 %v3078
        %v3168 = vunpack.c.l.b16 %v3079
        %v3169 = vunpack.c.h.b16 %v3079
        %v3170 = vunpack.c.l.b16 %v3080
        %v3171 = vunpack.c.h.b16 %v3080
        %v3172 = vunpack.c.l.b16 %v3081
        %v3173 = vunpack.c.h.b16 %v3081
        %v3174 = vunpack.c.l.b16 %v3082
        %v3175 = vunpack.c.h.b16 %v3082
        %v3176 = vunpack.c.l.b16 %v3083
        %v3177 = vunpack.c.h.b16 %v3083
        %v3178 = vunpack.c.l.b16 %v3084
        %v3179 = vunpack.c.h.b16 %v3084
        %v3180 = vunpack.c.l.b16 %v3085
        %v3181 = vunpack.c.h.b16 %v3085
        %v3182 = vunpack.c.l.b16 %v3086
        %v3183 = vunpack.c.h.b16 %v3086
        %v3184 = vunpack.c.l.b16 %v3087
        %v3185 = vunpack.c.h.b16 %v3087
        %v3186 = vunpack.c.l.b16 %v3088
        %v3187 = vunpack.c.h.b16 %v3088
        %v3188 = vunpack.c.l.b16 %v3089
        %v3189 = vunpack.c.h.b16 %v3089
        %v3190 = vunpack.c.l.b16 %v3090
        %v3191 = vunpack.c.h.b16 %v3090
        %v3192 = vunpack.c.l.b16 %v3091
        %v3193 = vunpack.c.h.b16 %v3091
        %v3194 = vunpack.c.l.b16 %v3092
        %v3195 = vunpack.c.h.b16 %v3092
        %v3196 = vunpack.c.l.b16 %v3093
        %v3197 = vunpack.c.h.b16 %v3093
        %v3198 = vunpack.c.l.b16 %v3094
        %v3199 = vunpack.c.h.b16 %v3094
        %v3200 = vunpack.c.l.b16 %v3095
        %v3201 = vunpack.c.h.b16 %v3095
        %v3202 = vunpack.c.l.b16 %v3096
        %v3203 = vunpack.c.h.b16 %v3096
        %v3204 = vunpack.c.l.b16 %v3097
        %v3205 = vunpack.c.h.b16 %v3097
        %v3206 = vunpack.c.l.b16 %v3098
        %v3207 = vunpack.c.h.b16 %v3098
        %v3208 = vpack.c.b16 %v3146, %v3144
        %v3209 = vpack.c.b16 %v3147, %v3145
        %v3210 = vpack.c.b16 %v3150, %v3148
        %v3211 = vpack.c.b16 %v3151, %v3149
        %v3212 = vpack.c.b16 %v3154, %v3152
        %v3213 = vpack.c.b16 %v3155, %v3153
        %v3214 = vpack.c.b16 %v3158, %v3156
        %v3215 = vpack.c.b16 %v3159, %v3157
        %v3216 = vpack.c.b16 %v3162, %v3160
        %v3217 = vpack.c.b16 %v3163, %v3161
        %v3218 = vpack.c.b16 %v3166, %v3164
        %v3219 = vpack.c.b16 %v3167, %v3165
        %v3220 = vpack.c.b16 %v3170, %v3168
        %v3221 = vpack.c.b16 %v3171, %v3169
        %v3222 = vpack.c.b16 %v3174, %v3172
        %v3223 = vpack.c.b16 %v3175, %v3173
        %v3224 = vpack.c.b16 %v3178, %v3176
        %v3225 = vpack.c.b16 %v3179, %v3177
        %v3226 = vpack.c.b16 %v3182, %v3180
        %v3227 = vpack.c.b16 %v3183, %v3181
        %v3228 = vpack.c.b16 %v3186, %v3184
        %v3229 = vpack.c.b16 %v3187, %v3185
        %v3230 = vpack.c.b16 %v3190, %v3188
        %v3231 = vpack.c.b16 %v3191, %v3189
        %v3232 = vpack.c.b16 %v3194, %v3192
        %v3233 = vpack.c.b16 %v3195, %v3193
        %v3234 = vpack.c.b16 %v3198, %v3196
        %v3235 = vpack.c.b16 %v3199, %v3197
        %v3236 = vpack.c.b16 %v3202, %v3200
        %v3237 = vpack.c.b16 %v3203, %v3201
        %v3238 = vpack.c.b16 %v3206, %v3204
        %v3239 = vpack.c.b16 %v3207, %v3205
        %3272 = vmatprep.subr.bf16.mxu0 %v3209
        %3273 = vmatpush1.bf16.msra.mxu0 %v3208
        %3274 = vmatprep.subr.bf16.mxu0 %v3211
        %3275 = vmatpush1.bf16.msra.mxu0 %v3210
        %3276 = vmatprep.subr.bf16.mxu0 %v3213
        %3277 = vmatpush1.bf16.msra.mxu0 %v3212
        %3278 = vmatprep.subr.bf16.mxu0 %v3215
        %3279 = vmatpush1.bf16.msra.mxu0 %v3214
        %3280 = vmatprep.subr.bf16.mxu0 %v3217
        %3281 = vmatpush1.bf16.msra.mxu0 %v3216
        %3282 = vmatprep.subr.bf16.mxu0 %v3219
        %3283 = vmatpush1.bf16.msra.mxu0 %v3218
        %3284 = vmatprep.subr.bf16.mxu0 %v3221
        %3285 = vmatpush1.bf16.msra.mxu0 %v3220
        %3286 = vmatprep.subr.bf16.mxu0 %v3223
        %3287 = vmatpush1.bf16.msra.mxu0 %v3222
        %3288 = vmatprep.subr.bf16.mxu0 %v3225
        %3289 = vmatpush1.bf16.msra.mxu0 %v3224
        %3290 = vmatprep.subr.bf16.mxu0 %v3227
        %3291 = vmatpush1.bf16.msra.mxu0 %v3226
        %3292 = vmatprep.subr.bf16.mxu0 %v3229
        %3293 = vmatpush1.bf16.msra.mxu0 %v3228
        %3294 = vmatprep.subr.bf16.mxu0 %v3231
        %3295 = vmatpush1.bf16.msra.mxu0 %v3230
        %3296 = vmatprep.subr.bf16.mxu0 %v3233
        %3297 = vmatpush1.bf16.msra.mxu0 %v3232
        %3298 = vmatprep.subr.bf16.mxu0 %v3235
        %3299 = vmatpush1.bf16.msra.mxu0 %v3234
        %3300 = vmatprep.subr.bf16.mxu0 %v3237
        %3301 = vmatpush1.bf16.msra.mxu0 %v3236
        %3302 = vmatprep.subr.bf16.mxu0 %v3239
        %3303 = vmatpush1.bf16.msra.mxu0 %v3238
        %3304 = vmatprep.mubr.bf16.mxu0 %v3066
        %3305 = vmatmul.mubr.bf16.gmra.mrb[0].mxu0 %v3065
        %v3306 = vpop.f32.mrb[0].mxu0
        %v3307 = vadd.f32 %v3105, %v3306
        %v3308 = vpop.f32.mrb[0].mxu0
        %v3309 = vadd.f32 %v3109, %v3308
        %v3310 = vpop.f32.mrb[0].mxu0
        %v3311 = vadd.f32 %v3105, %v3310
        %v3312 = vpop.f32.mrb[0].mxu0
        %v3313 = vadd.f32 %v3109, %v3312
        %3314 = vdwg.mxu0
        %v3315 = vmax.f32 %v3307, 0.0
        %v3316 = vmax.f32 %v3309, 0.0
        %v3317 = vmax.f32 %v3311, 0.0
        %v3318 = vmax.f32 %v3313, 0.0
        %v3319 = vpack.c.bf16 %v3317, %v3315
        %v3320 = vpack.c.bf16 %v3318, %v3316
        %v3321 = vld [vmem:[#allocation10 + $0x300] sm:$0xff]
        %v3322 = vld [vmem:[#allocation10 + $0x308] sm:$0xf]
        %v3323 = vld [vmem:[#allocation10 + $0x30c] sm:$0xff]
        %v3324 = vld [vmem:[#allocation10 + $0x314] sm:$0xf]
        %v3325 = vld [vmem:[#allocation10 + $0x318] sm:$0xff]
        %v3326 = vld [vmem:[#allocation10 + $0x320] sm:$0xf]
        %v3327 = vld [vmem:[#allocation10 + $0x324] sm:$0xff]
        %v3328 = vld [vmem:[#allocation10 + $0x32c] sm:$0xf]
        %v3329 = vld [vmem:[#allocation10 + $0x330] sm:$0xff]
        %v3330 = vld [vmem:[#allocation10 + $0x338] sm:$0xf]
        %v3331 = vld [vmem:[#allocation10 + $0x33c] sm:$0xff]
        %v3332 = vld [vmem:[#allocation10 + $0x344] sm:$0xf]
        %v3333 = vld [vmem:[#allocation10 + $0x348] sm:$0xff]
        %v3334 = vld [vmem:[#allocation10 + $0x350] sm:$0xf]
        %v3335 = vld [vmem:[#allocation10 + $0x354] sm:$0xff]
        %v3336 = vld [vmem:[#allocation10 + $0x35c] sm:$0xf]
        %v3337 = vld [vmem:[#allocation10 + $0x360] sm:$0xff]
        %v3338 = vld [vmem:[#allocation10 + $0x368] sm:$0xf]
        %v3339 = vld [vmem:[#allocation10 + $0x36c] sm:$0xff]
        %v3340 = vld [vmem:[#allocation10 + $0x374] sm:$0xf]
        %v3341 = vld [vmem:[#allocation10 + $0x378] sm:$0xff]
        %v3342 = vld [vmem:[#allocation10 + $0x380] sm:$0xf]
        %v3343 = vld [vmem:[#allocation10 + $0x384] sm:$0xff]
        %v3344 = vld [vmem:[#allocation10 + $0x38c] sm:$0xf]
        %v3345 = vld [vmem:[#allocation10 + $0x390] sm:$0xff]
        %v3346 = vld [vmem:[#allocation10 + $0x398] sm:$0xf]
        %v3347 = vld [vmem:[#allocation10 + $0x39c] sm:$0xff]
        %v3348 = vld [vmem:[#allocation10 + $0x3a4] sm:$0xf]
        %v3349 = vld [vmem:[#allocation10 + $0x3a8] sm:$0xff]
        %v3350 = vld [vmem:[#allocation10 + $0x3b0] sm:$0xf]
        %v3351 = vld [vmem:[#allocation10 + $0x3b4] sm:$0xff]
        %v3352 = vld [vmem:[#allocation10 + $0x3bc] sm:$0xf]
        %v3353 = vld [vmem:[#allocation10 + $0x3c0] sm:$0xff]
        %v3354 = vld [vmem:[#allocation10 + $0x3c8] sm:$0xf]
        %v3355 = vld [vmem:[#allocation10 + $0x3cc] sm:$0xff]
        %v3356 = vld [vmem:[#allocation10 + $0x3d4] sm:$0xf]
        %v3357 = vld [vmem:[#allocation10 + $0x3d8] sm:$0xff]
        %v3358 = vld [vmem:[#allocation10 + $0x3e0] sm:$0xf]
        %v3359 = vld [vmem:[#allocation10 + $0x3e4] sm:$0xff]
        %v3360 = vld [vmem:[#allocation10 + $0x3ec] sm:$0xf]
        %v3361 = vld [vmem:[#allocation10 + $0x3f0] sm:$0xff]
        %v3362 = vld [vmem:[#allocation10 + $0x3f8] sm:$0xf]
        %v3363 = vld [vmem:[#allocation10 + $0x3fc] sm:$0xff]
        %v3364 = vld [vmem:[#allocation10 + $0x404] sm:$0xf]
        %v3365 = vld [vmem:[#allocation10 + $0x408] sm:$0xff]
        %v3366 = vld [vmem:[#allocation10 + $0x410] sm:$0xf]
        %v3367 = vld [vmem:[#allocation10 + $0x414] sm:$0xff]
        %v3368 = vld [vmem:[#allocation10 + $0x41c] sm:$0xf]
        %v3369 = vld [vmem:[#allocation10 + $0x420] sm:$0xff]
        %v3370 = vld [vmem:[#allocation10 + $0x428] sm:$0xf]
        %v3371 = vld [vmem:[#allocation10 + $0x42c] sm:$0xff]
        %v3372 = vld [vmem:[#allocation10 + $0x434] sm:$0xf]
        %v3373 = vld [vmem:[#allocation10 + $0x438] sm:$0xff]
        %v3374 = vld [vmem:[#allocation10 + $0x440] sm:$0xf]
        %v3375 = vld [vmem:[#allocation10 + $0x444] sm:$0xff]
        %v3376 = vld [vmem:[#allocation10 + $0x44c] sm:$0xf]
        %v3377 = vld [vmem:[#allocation10 + $0x450] sm:$0xff]
        %v3378 = vld [vmem:[#allocation10 + $0x458] sm:$0xf]
        %v3379 = vld [vmem:[#allocation10 + $0x45c] sm:$0xff]
        %v3380 = vld [vmem:[#allocation10 + $0x464] sm:$0xf]
        %v3381 = vld [vmem:[#allocation10 + $0x468] sm:$0xff]
        %v3382 = vld [vmem:[#allocation10 + $0x470] sm:$0xf]
        %v3383 = vld [vmem:[#allocation10 + $0x474] sm:$0xff]
        %v3384 = vld [vmem:[#allocation10 + $0x47c] sm:$0xf]
        %s3385 = scalar_lea.vmem [#allocation13], 33
        %v3386 = vld [vmem:[%s3385] ss:$8 sm:$0x7]
        %v3388 = vlaneseq
        %v3389 = vshrl.u32 %v3388, 7
        %v3390 = vsub.s32 0, %v3389
        %v3391 = vrot.slane %v3386, %v3390
        %v3392 = vlaneseq
        %v3393 = vshrl.u32 %v3392, 7
        %v3394 = vsub.s32 1, %v3393
        %v3395 = vrot.slane %v3386, %v3394
        %v3396 = vlaneseq
        %v3397 = vshrl.u32 %v3396, 7
        %v3398 = vsub.s32 2, %v3397
        %v3399 = vrot.slane %v3386, %v3398
        %v3467 = vunpack.c.l.b16 %v3321
        %v3468 = vunpack.c.h.b16 %v3321
        %v3469 = vunpack.c.l.b16 %v3322
        %v3470 = vunpack.c.l.b16 %v3323
        %v3471 = vunpack.c.h.b16 %v3323
        %v3472 = vunpack.c.l.b16 %v3324
        %v3473 = vunpack.c.l.b16 %v3325
        %v3474 = vunpack.c.h.b16 %v3325
        %v3475 = vunpack.c.l.b16 %v3326
        %v3476 = vunpack.c.l.b16 %v3327
        %v3477 = vunpack.c.h.b16 %v3327
        %v3478 = vunpack.c.l.b16 %v3328
        %v3479 = vunpack.c.l.b16 %v3329
        %v3480 = vunpack.c.h.b16 %v3329
        %v3481 = vunpack.c.l.b16 %v3330
        %v3482 = vunpack.c.l.b16 %v3331
        %v3483 = vunpack.c.h.b16 %v3331
        %v3484 = vunpack.c.l.b16 %v3332
        %v3485 = vunpack.c.l.b16 %v3333
        %v3486 = vunpack.c.h.b16 %v3333
        %v3487 = vunpack.c.l.b16 %v3334
        %v3488 = vunpack.c.l.b16 %v3335
        %v3489 = vunpack.c.h.b16 %v3335
        %v3490 = vunpack.c.l.b16 %v3336
        %v3491 = vunpack.c.l.b16 %v3337
        %v3492 = vunpack.c.h.b16 %v3337
        %v3493 = vunpack.c.l.b16 %v3338
        %v3494 = vunpack.c.l.b16 %v3339
        %v3495 = vunpack.c.h.b16 %v3339
        %v3496 = vunpack.c.l.b16 %v3340
        %v3497 = vunpack.c.l.b16 %v3341
        %v3498 = vunpack.c.h.b16 %v3341
        %v3499 = vunpack.c.l.b16 %v3342
        %v3500 = vunpack.c.l.b16 %v3343
        %v3501 = vunpack.c.h.b16 %v3343
        %v3502 = vunpack.c.l.b16 %v3344
        %v3503 = vunpack.c.l.b16 %v3345
        %v3504 = vunpack.c.h.b16 %v3345
        %v3505 = vunpack.c.l.b16 %v3346
        %v3506 = vunpack.c.l.b16 %v3347
        %v3507 = vunpack.c.h.b16 %v3347
        %v3508 = vunpack.c.l.b16 %v3348
        %v3509 = vunpack.c.l.b16 %v3349
        %v3510 = vunpack.c.h.b16 %v3349
        %v3511 = vunpack.c.l.b16 %v3350
        %v3512 = vunpack.c.l.b16 %v3351
        %v3513 = vunpack.c.h.b16 %v3351
        %v3514 = vunpack.c.l.b16 %v3352
        %v3515 = vunpack.c.l.b16 %v3353
        %v3516 = vunpack.c.h.b16 %v3353
        %v3517 = vunpack.c.l.b16 %v3354
        %v3518 = vunpack.c.l.b16 %v3355
        %v3519 = vunpack.c.h.b16 %v3355
        %v3520 = vunpack.c.l.b16 %v3356
        %v3521 = vunpack.c.l.b16 %v3357
        %v3522 = vunpack.c.h.b16 %v3357
        %v3523 = vunpack.c.l.b16 %v3358
        %v3524 = vunpack.c.l.b16 %v3359
        %v3525 = vunpack.c.h.b16 %v3359
        %v3526 = vunpack.c.l.b16 %v3360
        %v3527 = vunpack.c.l.b16 %v3361
        %v3528 = vunpack.c.h.b16 %v3361
        %v3529 = vunpack.c.l.b16 %v3362
        %v3530 = vunpack.c.l.b16 %v3363
        %v3531 = vunpack.c.h.b16 %v3363
        %v3532 = vunpack.c.l.b16 %v3364
        %v3533 = vunpack.c.l.b16 %v3365
        %v3534 = vunpack.c.h.b16 %v3365
        %v3535 = vunpack.c.l.b16 %v3366
        %v3536 = vunpack.c.l.b16 %v3367
        %v3537 = vunpack.c.h.b16 %v3367
        %v3538 = vunpack.c.l.b16 %v3368
        %v3539 = vunpack.c.l.b16 %v3369
        %v3540 = vunpack.c.h.b16 %v3369
        %v3541 = vunpack.c.l.b16 %v3370
        %v3542 = vunpack.c.l.b16 %v3371
        %v3543 = vunpack.c.h.b16 %v3371
        %v3544 = vunpack.c.l.b16 %v3372
        %v3545 = vunpack.c.l.b16 %v3373
        %v3546 = vunpack.c.h.b16 %v3373
        %v3547 = vunpack.c.l.b16 %v3374
        %v3548 = vunpack.c.l.b16 %v3375
        %v3549 = vunpack.c.h.b16 %v3375
        %v3550 = vunpack.c.l.b16 %v3376
        %v3551 = vunpack.c.l.b16 %v3377
        %v3552 = vunpack.c.h.b16 %v3377
        %v3553 = vunpack.c.l.b16 %v3378
        %v3554 = vunpack.c.l.b16 %v3379
        %v3555 = vunpack.c.h.b16 %v3379
        %v3556 = vunpack.c.l.b16 %v3380
        %v3557 = vunpack.c.l.b16 %v3381
        %v3558 = vunpack.c.h.b16 %v3381
        %v3559 = vunpack.c.l.b16 %v3382
        %v3560 = vunpack.c.l.b16 %v3383
        %v3561 = vunpack.c.h.b16 %v3383
        %v3562 = vunpack.c.l.b16 %v3384
        %v3563 = vpack.c.b16 %v3470, %v3467
        %v3564 = vpack.c.b16 %v3471, %v3468
        %v3565 = vpack.c.b16 %v3472, %v3469
        %v3566 = vpack.c.b16 %v3476, %v3473
        %v3567 = vpack.c.b16 %v3477, %v3474
        %v3568 = vpack.c.b16 %v3478, %v3475
        %v3569 = vpack.c.b16 %v3482, %v3479
        %v3570 = vpack.c.b16 %v3483, %v3480
        %v3571 = vpack.c.b16 %v3484, %v3481
        %v3572 = vpack.c.b16 %v3488, %v3485
        %v3573 = vpack.c.b16 %v3489, %v3486
        %v3574 = vpack.c.b16 %v3490, %v3487
        %v3575 = vpack.c.b16 %v3494, %v3491
        %v3576 = vpack.c.b16 %v3495, %v3492
        %v3577 = vpack.c.b16 %v3496, %v3493
        %v3578 = vpack.c.b16 %v3500, %v3497
        %v3579 = vpack.c.b16 %v3501, %v3498
        %v3580 = vpack.c.b16 %v3502, %v3499
        %v3581 = vpack.c.b16 %v3506, %v3503
        %v3582 = vpack.c.b16 %v3507, %v3504
        %v3583 = vpack.c.b16 %v3508, %v3505
        %v3584 = vpack.c.b16 %v3512, %v3509
        %v3585 = vpack.c.b16 %v3513, %v3510
        %v3586 = vpack.c.b16 %v3514, %v3511
        %v3587 = vpack.c.b16 %v3518, %v3515
        %v3588 = vpack.c.b16 %v3519, %v3516
        %v3589 = vpack.c.b16 %v3520, %v3517
        %v3590 = vpack.c.b16 %v3524, %v3521
        %v3591 = vpack.c.b16 %v3525, %v3522
        %v3592 = vpack.c.b16 %v3526, %v3523
        %v3593 = vpack.c.b16 %v3530, %v3527
        %v3594 = vpack.c.b16 %v3531, %v3528
        %v3595 = vpack.c.b16 %v3532, %v3529
        %v3596 = vpack.c.b16 %v3536, %v3533
        %v3597 = vpack.c.b16 %v3537, %v3534
        %v3598 = vpack.c.b16 %v3538, %v3535
        %v3599 = vpack.c.b16 %v3542, %v3539
        %v3600 = vpack.c.b16 %v3543, %v3540
        %v3601 = vpack.c.b16 %v3544, %v3541
        %v3602 = vpack.c.b16 %v3548, %v3545
        %v3603 = vpack.c.b16 %v3549, %v3546
        %v3604 = vpack.c.b16 %v3550, %v3547
        %v3605 = vpack.c.b16 %v3554, %v3551
        %v3606 = vpack.c.b16 %v3555, %v3552
        %v3607 = vpack.c.b16 %v3556, %v3553
        %v3608 = vpack.c.b16 %v3560, %v3557
        %v3609 = vpack.c.b16 %v3561, %v3558
        %v3610 = vpack.c.b16 %v3562, %v3559
        %3659 = vmatprep.subr.bf16.mxu0 %v3564
        %3660 = vmatpush1.bf16.msra.mxu0 %v3563
        %3661 = vmatprep.subr.bf16.mxu0 %v3567
        %3662 = vmatpush1.bf16.msra.mxu0 %v3566
        %3663 = vmatprep.subr.bf16.mxu0 %v3570
        %3664 = vmatpush1.bf16.msra.mxu0 %v3569
        %3665 = vmatprep.subr.bf16.mxu0 %v3573
        %3666 = vmatpush1.bf16.msra.mxu0 %v3572
        %3667 = vmatprep.subr.bf16.mxu0 %v3576
        %3668 = vmatpush1.bf16.msra.mxu0 %v3575
        %3669 = vmatprep.subr.bf16.mxu0 %v3579
        %3670 = vmatpush1.bf16.msra.mxu0 %v3578
        %3671 = vmatprep.subr.bf16.mxu0 %v3582
        %3672 = vmatpush1.bf16.msra.mxu0 %v3581
        %3673 = vmatprep.subr.bf16.mxu0 %v3585
        %3674 = vmatpush1.bf16.msra.mxu0 %v3584
        %3675 = vmatprep.subr.bf16.mxu0 %v3588
        %3676 = vmatpush1.bf16.msra.mxu0 %v3587
        %3677 = vmatprep.subr.bf16.mxu0 %v3591
        %3678 = vmatpush1.bf16.msra.mxu0 %v3590
        %3679 = vmatprep.subr.bf16.mxu0 %v3594
        %3680 = vmatpush1.bf16.msra.mxu0 %v3593
        %3681 = vmatprep.subr.bf16.mxu0 %v3597
        %3682 = vmatpush1.bf16.msra.mxu0 %v3596
        %3683 = vmatprep.subr.bf16.mxu0 %v3600
        %3684 = vmatpush1.bf16.msra.mxu0 %v3599
        %3685 = vmatprep.subr.bf16.mxu0 %v3603
        %3686 = vmatpush1.bf16.msra.mxu0 %v3602
        %3687 = vmatprep.subr.bf16.mxu0 %v3606
        %3688 = vmatpush1.bf16.msra.mxu0 %v3605
        %3689 = vmatprep.subr.bf16.mxu0 %v3609
        %3690 = vmatpush1.bf16.msra.mxu0 %v3608
        %3691 = vmatprep.mubr.bf16.mxu0 %v3320
        %3692 = vmatmul.mubr.bf16.gmra.mrb[0].mxu0 %v3319
        %v3693 = vpop.f32.mrb[0].mxu0
        %v3694 = vadd.f32 %v3391, %v3693
        %v3695 = vpop.f32.mrb[0].mxu0
        %v3696 = vadd.f32 %v3395, %v3695
        %v3697 = vpop.f32.mrb[0].mxu0
        %v3698 = vadd.f32 %v3391, %v3697
        %v3699 = vpop.f32.mrb[0].mxu0
        %v3700 = vadd.f32 %v3395, %v3699
        %3701 = vdwg.mxu0
        %3702 = vmatprep.subr.bf16.mxu0 0
        %3703 = vmatpush1.bf16.msra.mxu0 %v3565
        %3704 = vmatprep.subr.bf16.mxu0 0
        %3705 = vmatpush1.bf16.msra.mxu0 %v3568
        %3706 = vmatprep.subr.bf16.mxu0 0
        %3707 = vmatpush1.bf16.msra.mxu0 %v3571
        %3708 = vmatprep.subr.bf16.mxu0 0
        %3709 = vmatpush1.bf16.msra.mxu0 %v3574
        %3710 = vmatprep.subr.bf16.mxu0 0
        %3711 = vmatpush1.bf16.msra.mxu0 %v3577
        %3712 = vmatprep.subr.bf16.mxu0 0
        %3713 = vmatpush1.bf16.msra.mxu0 %v3580
        %3714 = vmatprep.subr.bf16.mxu0 0
        %3715 = vmatpush1.bf16.msra.mxu0 %v3583
        %3716 = vmatprep.subr.bf16.mxu0 0
        %3717 = vmatpush1.bf16.msra.mxu0 %v3586
        %3718 = vmatprep.subr.bf16.mxu0 0
        %3719 = vmatpush1.bf16.msra.mxu0 %v3589
        %3720 = vmatprep.subr.bf16.mxu0 0
        %3721 = vmatpush1.bf16.msra.mxu0 %v3592
        %3722 = vmatprep.subr.bf16.mxu0 0
        %3723 = vmatpush1.bf16.msra.mxu0 %v3595
        %3724 = vmatprep.subr.bf16.mxu0 0
        %3725 = vmatpush1.bf16.msra.mxu0 %v3598
        %3726 = vmatprep.subr.bf16.mxu0 0
        %3727 = vmatpush1.bf16.msra.mxu0 %v3601
        %3728 = vmatprep.subr.bf16.mxu0 0
        %3729 = vmatpush1.bf16.msra.mxu0 %v3604
        %3730 = vmatprep.subr.bf16.mxu0 0
        %3731 = vmatpush1.bf16.msra.mxu0 %v3607
        %3732 = vmatprep.subr.bf16.mxu0 0
        %3733 = vmatpush1.bf16.msra.mxu0 %v3610
        %3734 = vmatprep.mubr.bf16.mxu0 %v3320
        %3735 = vmatmul.mubr.bf16.gmra.mrb[0].mxu0 %v3319
        %v3736 = vpop.f32.mrb[0].mxu0
        %v3737 = vadd.f32 %v3399, %v3736
        %v3738 = vpop.f32.mrb[0].mxu0
        %v3739 = vpop.f32.mrb[0].mxu0
        %v3740 = vadd.f32 %v3399, %v3739
        %v3741 = vpop.f32.mrb[0].mxu0
        %3742 = vdwg.mxu0
        %v3743 = vmax.f32 %v3694, 0.0
        %v3744 = vmax.f32 %v3696, 0.0
        %v3745 = vmax.f32 %v3737, 0.0
        %v3746 = vmax.f32 %v3698, 0.0
        %v3747 = vmax.f32 %v3700, 0.0
        %v3748 = vmax.f32 %v3740, 0.0
        %v3749 = vpack.c.bf16 %v3746, %v3743
        %v3750 = vpack.c.bf16 %v3747, %v3744
        %v3751 = vpack.c.bf16 %v3748, %v3745
        %v3752 = vld [vmem:[#allocation11 + $0x100] sm:$0xff]
        %v3753 = vld [vmem:[#allocation11 + $0x108] sm:$0xff]
        %v3754 = vld [vmem:[#allocation11 + $0x110] sm:$0xff]
        %v3755 = vld [vmem:[#allocation11 + $0x118] sm:$0xff]
        %v3756 = vld [vmem:[#allocation11 + $0x120] sm:$0xff]
        %v3757 = vld [vmem:[#allocation11 + $0x128] sm:$0xff]
        %v3758 = vld [vmem:[#allocation11 + $0x130] sm:$0xff]
        %v3759 = vld [vmem:[#allocation11 + $0x138] sm:$0xff]
        %v3760 = vld [vmem:[#allocation11 + $0x140] sm:$0xff]
        %v3761 = vld [vmem:[#allocation11 + $0x148] sm:$0xff]
        %v3762 = vld [vmem:[#allocation11 + $0x150] sm:$0xff]
        %v3763 = vld [vmem:[#allocation11 + $0x158] sm:$0xff]
        %v3764 = vld [vmem:[#allocation11 + $0x160] sm:$0xff]
        %v3765 = vld [vmem:[#allocation11 + $0x168] sm:$0xff]
        %v3766 = vld [vmem:[#allocation11 + $0x170] sm:$0xff]
        %v3767 = vld [vmem:[#allocation11 + $0x178] sm:$0xff]
        %v3768 = vld [vmem:[#allocation11 + $0x180] sm:$0xff]
        %v3769 = vld [vmem:[#allocation11 + $0x188] sm:$0xff]
        %v3770 = vld [vmem:[#allocation11 + $0x190] sm:$0xff]
        %v3771 = vld [vmem:[#allocation11 + $0x198] sm:$0xff]
        %v3772 = vld [vmem:[#allocation11 + $0x1a0] sm:$0xff]
        %v3773 = vld [vmem:[#allocation11 + $0x1a8] sm:$0xff]
        %v3774 = vld [vmem:[#allocation11 + $0x1b0] sm:$0xff]
        %v3775 = vld [vmem:[#allocation11 + $0x1b8] sm:$0xff]
        %v3776 = vld [vmem:[#allocation11 + $0x1c0] sm:$0xff]
        %v3777 = vld [vmem:[#allocation11 + $0x1c8] sm:$0xff]
        %v3778 = vld [vmem:[#allocation11 + $0x1d0] sm:$0xff]
        %v3779 = vld [vmem:[#allocation11 + $0x1d8] sm:$0xff]
        %v3780 = vld [vmem:[#allocation11 + $0x1e0] sm:$0xff]
        %v3781 = vld [vmem:[#allocation11 + $0x1e8] sm:$0xff]
        %v3782 = vld [vmem:[#allocation11 + $0x1f0] sm:$0xff]
        %v3783 = vld [vmem:[#allocation11 + $0x1f8] sm:$0xff]
        %v3784 = vld [vmem:[#allocation11 + $0x200] sm:$0xff]
        %v3785 = vld [vmem:[#allocation11 + $0x208] sm:$0xff]
        %v3786 = vld [vmem:[#allocation11 + $0x210] sm:$0xff]
        %v3787 = vld [vmem:[#allocation11 + $0x218] sm:$0xff]
        %v3788 = vld [vmem:[#allocation11 + $0x220] sm:$0xff]
        %v3789 = vld [vmem:[#allocation11 + $0x228] sm:$0xff]
        %v3790 = vld [vmem:[#allocation11 + $0x230] sm:$0xff]
        %v3791 = vld [vmem:[#allocation11 + $0x238] sm:$0xff]
        %v3792 = vld [vmem:[#allocation11 + $0x240] sm:$0xff]
        %v3793 = vld [vmem:[#allocation11 + $0x248] sm:$0xff]
        %v3794 = vld [vmem:[#allocation11 + $0x250] sm:$0xff]
        %v3795 = vld [vmem:[#allocation11 + $0x258] sm:$0xff]
        %v3796 = vld [vmem:[#allocation11 + $0x260] sm:$0xff]
        %v3797 = vld [vmem:[#allocation11 + $0x268] sm:$0xff]
        %v3798 = vld [vmem:[#allocation11 + $0x270] sm:$0xff]
        %v3799 = vld [vmem:[#allocation11 + $0x278] sm:$0xff]
        %v3800 = vld [vmem:[#allocation11 + $0x280] sm:$0xff]
        %v3801 = vld [vmem:[#allocation11 + $0x288] sm:$0xff]
        %v3802 = vld [vmem:[#allocation11 + $0x290] sm:$0xff]
        %v3803 = vld [vmem:[#allocation11 + $0x298] sm:$0xff]
        %v3804 = vld [vmem:[#allocation11 + $0x2a0] sm:$0xff]
        %v3805 = vld [vmem:[#allocation11 + $0x2a8] sm:$0xff]
        %v3806 = vld [vmem:[#allocation11 + $0x2b0] sm:$0xff]
        %v3807 = vld [vmem:[#allocation11 + $0x2b8] sm:$0xff]
        %v3808 = vld [vmem:[#allocation11 + $0x2c0] sm:$0xff]
        %v3809 = vld [vmem:[#allocation11 + $0x2c8] sm:$0xff]
        %v3810 = vld [vmem:[#allocation11 + $0x2d0] sm:$0xff]
        %v3811 = vld [vmem:[#allocation11 + $0x2d8] sm:$0xff]
        %v3812 = vld [vmem:[#allocation11 + $0x2e0] sm:$0xff]
        %v3813 = vld [vmem:[#allocation11 + $0x2e8] sm:$0xff]
        %v3814 = vld [vmem:[#allocation11 + $0x2f0] sm:$0xff]
        %v3815 = vld [vmem:[#allocation11 + $0x2f8] sm:$0xff]
        %v3816 = vld [vmem:[#allocation11 + $0x300] sm:$0xff]
        %v3817 = vld [vmem:[#allocation11 + $0x308] sm:$0xff]
        %v3818 = vld [vmem:[#allocation11 + $0x310] sm:$0xff]
        %v3819 = vld [vmem:[#allocation11 + $0x318] sm:$0xff]
        %v3820 = vld [vmem:[#allocation11 + $0x320] sm:$0xff]
        %v3821 = vld [vmem:[#allocation11 + $0x328] sm:$0xff]
        %v3822 = vld [vmem:[#allocation11 + $0x330] sm:$0xff]
        %v3823 = vld [vmem:[#allocation11 + $0x338] sm:$0xff]
        %v3824 = vld [vmem:[#allocation11 + $0x340] sm:$0xff]
        %v3825 = vld [vmem:[#allocation11 + $0x348] sm:$0xff]
        %v3826 = vld [vmem:[#allocation11 + $0x350] sm:$0xff]
        %v3827 = vld [vmem:[#allocation11 + $0x358] sm:$0xff]
        %v3828 = vld [vmem:[#allocation11 + $0x360] sm:$0xff]
        %v3829 = vld [vmem:[#allocation11 + $0x368] sm:$0xff]
        %v3830 = vld [vmem:[#allocation11 + $0x370] sm:$0xff]
        %v3831 = vld [vmem:[#allocation11 + $0x378] sm:$0xff]
        %v3832 = vld [vmem:[#allocation11 + $0x380] sm:$0xff]
        %v3833 = vld [vmem:[#allocation11 + $0x388] sm:$0xff]
        %v3834 = vld [vmem:[#allocation11 + $0x390] sm:$0xff]
        %v3835 = vld [vmem:[#allocation11 + $0x398] sm:$0xff]
        %v3836 = vld [vmem:[#allocation11 + $0x3a0] sm:$0xff]
        %v3837 = vld [vmem:[#allocation11 + $0x3a8] sm:$0xff]
        %v3838 = vld [vmem:[#allocation11 + $0x3b0] sm:$0xff]
        %v3839 = vld [vmem:[#allocation11 + $0x3b8] sm:$0xff]
        %v3840 = vld [vmem:[#allocation11 + $0x3c0] sm:$0xff]
        %v3841 = vld [vmem:[#allocation11 + $0x3c8] sm:$0xff]
        %v3842 = vld [vmem:[#allocation11 + $0x3d0] sm:$0xff]
        %v3843 = vld [vmem:[#allocation11 + $0x3d8] sm:$0xff]
        %v3844 = vld [vmem:[#allocation11 + $0x3e0] sm:$0xff]
        %v3845 = vld [vmem:[#allocation11 + $0x3e8] sm:$0xff]
        %v3846 = vld [vmem:[#allocation11 + $0x3f0] sm:$0xff]
        %v3847 = vld [vmem:[#allocation11 + $0x3f8] sm:$0xff]
        %s3848 = scalar_lea.vmem [#allocation13], 34
        %v3849 = vld [vmem:[%s3848] ss:$8 sm:$0xf]
        %v3851 = vlaneseq
        %v3852 = vshrl.u32 %v3851, 7
        %v3853 = vsub.s32 0, %v3852
        %v3854 = vrot.slane %v3849, %v3853
        %v3855 = vlaneseq
        %v3856 = vshrl.u32 %v3855, 7
        %v3857 = vsub.s32 1, %v3856
        %v3858 = vrot.slane %v3849, %v3857
        %v3859 = vlaneseq
        %v3860 = vshrl.u32 %v3859, 7
        %v3861 = vsub.s32 2, %v3860
        %v3862 = vrot.slane %v3849, %v3861
        %v3863 = vlaneseq
        %v3864 = vshrl.u32 %v3863, 7
        %v3865 = vsub.s32 3, %v3864
        %v3866 = vrot.slane %v3849, %v3865
        %v3967 = vunpack.c.l.b16 %v3752
        %v3968 = vunpack.c.h.b16 %v3752
        %v3969 = vunpack.c.l.b16 %v3753
        %v3970 = vunpack.c.h.b16 %v3753
        %v3971 = vunpack.c.l.b16 %v3754
        %v3972 = vunpack.c.h.b16 %v3754
        %v3973 = vunpack.c.l.b16 %v3755
        %v3974 = vunpack.c.h.b16 %v3755
        %v3975 = vunpack.c.l.b16 %v3756
        %v3976 = vunpack.c.h.b16 %v3756
        %v3977 = vunpack.c.l.b16 %v3757
        %v3978 = vunpack.c.h.b16 %v3757
        %v3979 = vunpack.c.l.b16 %v3758
        %v3980 = vunpack.c.h.b16 %v3758
        %v3981 = vunpack.c.l.b16 %v3759
        %v3982 = vunpack.c.h.b16 %v3759
        %v3983 = vunpack.c.l.b16 %v3760
        %v3984 = vunpack.c.h.b16 %v3760
        %v3985 = vunpack.c.l.b16 %v3761
        %v3986 = vunpack.c.h.b16 %v3761
        %v3987 = vunpack.c.l.b16 %v3762
        %v3988 = vunpack.c.h.b16 %v3762
        %v3989 = vunpack.c.l.b16 %v3763
        %v3990 = vunpack.c.h.b16 %v3763
        %v3991 = vunpack.c.l.b16 %v3764
        %v3992 = vunpack.c.h.b16 %v3764
        %v3993 = vunpack.c.l.b16 %v3765
        %v3994 = vunpack.c.h.b16 %v3765
        %v3995 = vunpack.c.l.b16 %v3766
        %v3996 = vunpack.c.h.b16 %v3766
        %v3997 = vunpack.c.l.b16 %v3767
        %v3998 = vunpack.c.h.b16 %v3767
        %v3999 = vunpack.c.l.b16 %v3768
        %v4000 = vunpack.c.h.b16 %v3768
        %v4001 = vunpack.c.l.b16 %v3769
        %v4002 = vunpack.c.h.b16 %v3769
        %v4003 = vunpack.c.l.b16 %v3770
        %v4004 = vunpack.c.h.b16 %v3770
        %v4005 = vunpack.c.l.b16 %v3771
        %v4006 = vunpack.c.h.b16 %v3771
        %v4007 = vunpack.c.l.b16 %v3772
        %v4008 = vunpack.c.h.b16 %v3772
        %v4009 = vunpack.c.l.b16 %v3773
        %v4010 = vunpack.c.h.b16 %v3773
        %v4011 = vunpack.c.l.b16 %v3774
        %v4012 = vunpack.c.h.b16 %v3774
        %v4013 = vunpack.c.l.b16 %v3775
        %v4014 = vunpack.c.h.b16 %v3775
        %v4015 = vunpack.c.l.b16 %v3776
        %v4016 = vunpack.c.h.b16 %v3776
        %v4017 = vunpack.c.l.b16 %v3777
        %v4018 = vunpack.c.h.b16 %v3777
        %v4019 = vunpack.c.l.b16 %v3778
        %v4020 = vunpack.c.h.b16 %v3778
        %v4021 = vunpack.c.l.b16 %v3779
        %v4022 = vunpack.c.h.b16 %v3779
        %v4023 = vunpack.c.l.b16 %v3780
        %v4024 = vunpack.c.h.b16 %v3780
        %v4025 = vunpack.c.l.b16 %v3781
        %v4026 = vunpack.c.h.b16 %v3781
        %v4027 = vunpack.c.l.b16 %v3782
        %v4028 = vunpack.c.h.b16 %v3782
        %v4029 = vunpack.c.l.b16 %v3783
        %v4030 = vunpack.c.h.b16 %v3783
        %v4031 = vunpack.c.l.b16 %v3784
        %v4032 = vunpack.c.h.b16 %v3784
        %v4033 = vunpack.c.l.b16 %v3785
        %v4034 = vunpack.c.h.b16 %v3785
        %v4035 = vunpack.c.l.b16 %v3786
        %v4036 = vunpack.c.h.b16 %v3786
        %v4037 = vunpack.c.l.b16 %v3787
        %v4038 = vunpack.c.h.b16 %v3787
        %v4039 = vunpack.c.l.b16 %v3788
        %v4040 = vunpack.c.h.b16 %v3788
        %v4041 = vunpack.c.l.b16 %v3789
        %v4042 = vunpack.c.h.b16 %v3789
        %v4043 = vunpack.c.l.b16 %v3790
        %v4044 = vunpack.c.h.b16 %v3790
        %v4045 = vunpack.c.l.b16 %v3791
        %v4046 = vunpack.c.h.b16 %v3791
        %v4047 = vunpack.c.l.b16 %v3792
        %v4048 = vunpack.c.h.b16 %v3792
        %v4049 = vunpack.c.l.b16 %v3793
        %v4050 = vunpack.c.h.b16 %v3793
        %v4051 = vunpack.c.l.b16 %v3794
        %v4052 = vunpack.c.h.b16 %v3794
        %v4053 = vunpack.c.l.b16 %v3795
        %v4054 = vunpack.c.h.b16 %v3795
        %v4055 = vunpack.c.l.b16 %v3796
        %v4056 = vunpack.c.h.b16 %v3796
        %v4057 = vunpack.c.l.b16 %v3797
        %v4058 = vunpack.c.h.b16 %v3797
        %v4059 = vunpack.c.l.b16 %v3798
        %v4060 = vunpack.c.h.b16 %v3798
        %v4061 = vunpack.c.l.b16 %v3799
        %v4062 = vunpack.c.h.b16 %v3799
        %v4063 = vunpack.c.l.b16 %v3800
        %v4064 = vunpack.c.h.b16 %v3800
        %v4065 = vunpack.c.l.b16 %v3801
        %v4066 = vunpack.c.h.b16 %v3801
        %v4067 = vunpack.c.l.b16 %v3802
        %v4068 = vunpack.c.h.b16 %v3802
        %v4069 = vunpack.c.l.b16 %v3803
        %v4070 = vunpack.c.h.b16 %v3803
        %v4071 = vunpack.c.l.b16 %v3804
        %v4072 = vunpack.c.h.b16 %v3804
        %v4073 = vunpack.c.l.b16 %v3805
        %v4074 = vunpack.c.h.b16 %v3805
        %v4075 = vunpack.c.l.b16 %v3806
        %v4076 = vunpack.c.h.b16 %v3806
        %v4077 = vunpack.c.l.b16 %v3807
        %v4078 = vunpack.c.h.b16 %v3807
        %v4079 = vunpack.c.l.b16 %v3808
        %v4080 = vunpack.c.h.b16 %v3808
        %v4081 = vunpack.c.l.b16 %v3809
        %v4082 = vunpack.c.h.b16 %v3809
        %v4083 = vunpack.c.l.b16 %v3810
        %v4084 = vunpack.c.h.b16 %v3810
        %v4085 = vunpack.c.l.b16 %v3811
        %v4086 = vunpack.c.h.b16 %v3811
        %v4087 = vunpack.c.l.b16 %v3812
        %v4088 = vunpack.c.h.b16 %v3812
        %v4089 = vunpack.c.l.b16 %v3813
        %v4090 = vunpack.c.h.b16 %v3813
        %v4091 = vunpack.c.l.b16 %v3814
        %v4092 = vunpack.c.h.b16 %v3814
        %v4093 = vunpack.c.l.b16 %v3815
        %v4094 = vunpack.c.h.b16 %v3815
        %v4095 = vunpack.c.l.b16 %v3816
        %v4096 = vunpack.c.h.b16 %v3816
        %v4097 = vunpack.c.l.b16 %v3817
        %v4098 = vunpack.c.h.b16 %v3817
        %v4099 = vunpack.c.l.b16 %v3818
        %v4100 = vunpack.c.h.b16 %v3818
        %v4101 = vunpack.c.l.b16 %v3819
        %v4102 = vunpack.c.h.b16 %v3819
        %v4103 = vunpack.c.l.b16 %v3820
        %v4104 = vunpack.c.h.b16 %v3820
        %v4105 = vunpack.c.l.b16 %v3821
        %v4106 = vunpack.c.h.b16 %v3821
        %v4107 = vunpack.c.l.b16 %v3822
        %v4108 = vunpack.c.h.b16 %v3822
        %v4109 = vunpack.c.l.b16 %v3823
        %v4110 = vunpack.c.h.b16 %v3823
        %v4111 = vunpack.c.l.b16 %v3824
        %v4112 = vunpack.c.h.b16 %v3824
        %v4113 = vunpack.c.l.b16 %v3825
        %v4114 = vunpack.c.h.b16 %v3825
        %v4115 = vunpack.c.l.b16 %v3826
        %v4116 = vunpack.c.h.b16 %v3826
        %v4117 = vunpack.c.l.b16 %v3827
        %v4118 = vunpack.c.h.b16 %v3827
        %v4119 = vunpack.c.l.b16 %v3828
        %v4120 = vunpack.c.h.b16 %v3828
        %v4121 = vunpack.c.l.b16 %v3829
        %v4122 = vunpack.c.h.b16 %v3829
        %v4123 = vunpack.c.l.b16 %v3830
        %v4124 = vunpack.c.h.b16 %v3830
        %v4125 = vunpack.c.l.b16 %v3831
        %v4126 = vunpack.c.h.b16 %v3831
        %v4127 = vunpack.c.l.b16 %v3832
        %v4128 = vunpack.c.h.b16 %v3832
        %v4129 = vunpack.c.l.b16 %v3833
        %v4130 = vunpack.c.h.b16 %v3833
        %v4131 = vunpack.c.l.b16 %v3834
        %v4132 = vunpack.c.h.b16 %v3834
        %v4133 = vunpack.c.l.b16 %v3835
        %v4134 = vunpack.c.h.b16 %v3835
        %v4135 = vunpack.c.l.b16 %v3836
        %v4136 = vunpack.c.h.b16 %v3836
        %v4137 = vunpack.c.l.b16 %v3837
        %v4138 = vunpack.c.h.b16 %v3837
        %v4139 = vunpack.c.l.b16 %v3838
        %v4140 = vunpack.c.h.b16 %v3838
        %v4141 = vunpack.c.l.b16 %v3839
        %v4142 = vunpack.c.h.b16 %v3839
        %v4143 = vunpack.c.l.b16 %v3840
        %v4144 = vunpack.c.h.b16 %v3840
        %v4145 = vunpack.c.l.b16 %v3841
        %v4146 = vunpack.c.h.b16 %v3841
        %v4147 = vunpack.c.l.b16 %v3842
        %v4148 = vunpack.c.h.b16 %v3842
        %v4149 = vunpack.c.l.b16 %v3843
        %v4150 = vunpack.c.h.b16 %v3843
        %v4151 = vunpack.c.l.b16 %v3844
        %v4152 = vunpack.c.h.b16 %v3844
        %v4153 = vunpack.c.l.b16 %v3845
        %v4154 = vunpack.c.h.b16 %v3845
        %v4155 = vunpack.c.l.b16 %v3846
        %v4156 = vunpack.c.h.b16 %v3846
        %v4157 = vunpack.c.l.b16 %v3847
        %v4158 = vunpack.c.h.b16 %v3847
        %v4159 = vpack.c.b16 %v3971, %v3967
        %v4160 = vpack.c.b16 %v3972, %v3968
        %v4161 = vpack.c.b16 %v3973, %v3969
        %v4162 = vpack.c.b16 %v3974, %v3970
        %v4163 = vpack.c.b16 %v3979, %v3975
        %v4164 = vpack.c.b16 %v3980, %v3976
        %v4165 = vpack.c.b16 %v3981, %v3977
        %v4166 = vpack.c.b16 %v3982, %v3978
        %v4167 = vpack.c.b16 %v3987, %v3983
        %v4168 = vpack.c.b16 %v3988, %v3984
        %v4169 = vpack.c.b16 %v3989, %v3985
        %v4170 = vpack.c.b16 %v3990, %v3986
        %v4171 = vpack.c.b16 %v3995, %v3991
        %v4172 = vpack.c.b16 %v3996, %v3992
        %v4173 = vpack.c.b16 %v3997, %v3993
        %v4174 = vpack.c.b16 %v3998, %v3994
        %v4175 = vpack.c.b16 %v4003, %v3999
        %v4176 = vpack.c.b16 %v4004, %v4000
        %v4177 = vpack.c.b16 %v4005, %v4001
        %v4178 = vpack.c.b16 %v4006, %v4002
        %v4179 = vpack.c.b16 %v4011, %v4007
        %v4180 = vpack.c.b16 %v4012, %v4008
        %v4181 = vpack.c.b16 %v4013, %v4009
        %v4182 = vpack.c.b16 %v4014, %v4010
        %v4183 = vpack.c.b16 %v4019, %v4015
        %v4184 = vpack.c.b16 %v4020, %v4016
        %v4185 = vpack.c.b16 %v4021, %v4017
        %v4186 = vpack.c.b16 %v4022, %v4018
        %v4187 = vpack.c.b16 %v4027, %v4023
        %v4188 = vpack.c.b16 %v4028, %v4024
        %v4189 = vpack.c.b16 %v4029, %v4025
        %v4190 = vpack.c.b16 %v4030, %v4026
        %v4191 = vpack.c.b16 %v4035, %v4031
        %v4192 = vpack.c.b16 %v4036, %v4032
        %v4193 = vpack.c.b16 %v4037, %v4033
        %v4194 = vpack.c.b16 %v4038, %v4034
        %v4195 = vpack.c.b16 %v4043, %v4039
        %v4196 = vpack.c.b16 %v4044, %v4040
        %v4197 = vpack.c.b16 %v4045, %v4041
        %v4198 = vpack.c.b16 %v4046, %v4042
        %v4199 = vpack.c.b16 %v4051, %v4047
        %v4200 = vpack.c.b16 %v4052, %v4048
        %v4201 = vpack.c.b16 %v4053, %v4049
        %v4202 = vpack.c.b16 %v4054, %v4050
        %v4203 = vpack.c.b16 %v4059, %v4055
        %v4204 = vpack.c.b16 %v4060, %v4056
        %v4205 = vpack.c.b16 %v4061, %v4057
        %v4206 = vpack.c.b16 %v4062, %v4058
        %v4207 = vpack.c.b16 %v4067, %v4063
        %v4208 = vpack.c.b16 %v4068, %v4064
        %v4209 = vpack.c.b16 %v4069, %v4065
        %v4210 = vpack.c.b16 %v4070, %v4066
        %v4211 = vpack.c.b16 %v4075, %v4071
        %v4212 = vpack.c.b16 %v4076, %v4072
        %v4213 = vpack.c.b16 %v4077, %v4073
        %v4214 = vpack.c.b16 %v4078, %v4074
        %v4215 = vpack.c.b16 %v4083, %v4079
        %v4216 = vpack.c.b16 %v4084, %v4080
        %v4217 = vpack.c.b16 %v4085, %v4081
        %v4218 = vpack.c.b16 %v4086, %v4082
        %v4219 = vpack.c.b16 %v4091, %v4087
        %v4220 = vpack.c.b16 %v4092, %v4088
        %v4221 = vpack.c.b16 %v4093, %v4089
        %v4222 = vpack.c.b16 %v4094, %v4090
        %v4223 = vpack.c.b16 %v4099, %v4095
        %v4224 = vpack.c.b16 %v4100, %v4096
        %v4225 = vpack.c.b16 %v4101, %v4097
        %v4226 = vpack.c.b16 %v4102, %v4098
        %v4227 = vpack.c.b16 %v4107, %v4103
        %v4228 = vpack.c.b16 %v4108, %v4104
        %v4229 = vpack.c.b16 %v4109, %v4105
        %v4230 = vpack.c.b16 %v4110, %v4106
        %v4231 = vpack.c.b16 %v4115, %v4111
        %v4232 = vpack.c.b16 %v4116, %v4112
        %v4233 = vpack.c.b16 %v4117, %v4113
        %v4234 = vpack.c.b16 %v4118, %v4114
        %v4235 = vpack.c.b16 %v4123, %v4119
        %v4236 = vpack.c.b16 %v4124, %v4120
        %v4237 = vpack.c.b16 %v4125, %v4121
        %v4238 = vpack.c.b16 %v4126, %v4122
        %v4239 = vpack.c.b16 %v4131, %v4127
        %v4240 = vpack.c.b16 %v4132, %v4128
        %v4241 = vpack.c.b16 %v4133, %v4129
        %v4242 = vpack.c.b16 %v4134, %v4130
        %v4243 = vpack.c.b16 %v4139, %v4135
        %v4244 = vpack.c.b16 %v4140, %v4136
        %v4245 = vpack.c.b16 %v4141, %v4137
        %v4246 = vpack.c.b16 %v4142, %v4138
        %v4247 = vpack.c.b16 %v4147, %v4143
        %v4248 = vpack.c.b16 %v4148, %v4144
        %v4249 = vpack.c.b16 %v4149, %v4145
        %v4250 = vpack.c.b16 %v4150, %v4146
        %v4251 = vpack.c.b16 %v4155, %v4151
        %v4252 = vpack.c.b16 %v4156, %v4152
        %v4253 = vpack.c.b16 %v4157, %v4153
        %v4254 = vpack.c.b16 %v4158, %v4154
        %4351 = vmatprep.subr.bf16.mxu0 %v4160
        %4352 = vmatpush1.bf16.msra.mxu0 %v4159
        %4353 = vmatprep.subr.bf16.mxu0 %v4164
        %4354 = vmatpush1.bf16.msra.mxu0 %v4163
        %4355 = vmatprep.subr.bf16.mxu0 %v4168
        %4356 = vmatpush1.bf16.msra.mxu0 %v4167
        %4357 = vmatprep.subr.bf16.mxu0 %v4172
        %4358 = vmatpush1.bf16.msra.mxu0 %v4171
        %4359 = vmatprep.subr.bf16.mxu0 %v4176
        %4360 = vmatpush1.bf16.msra.mxu0 %v4175
        %4361 = vmatprep.subr.bf16.mxu0 %v4180
        %4362 = vmatpush1.bf16.msra.mxu0 %v4179
        %4363 = vmatprep.subr.bf16.mxu0 %v4184
        %4364 = vmatpush1.bf16.msra.mxu0 %v4183
        %4365 = vmatprep.subr.bf16.mxu0 %v4188
        %4366 = vmatpush1.bf16.msra.mxu0 %v4187
        %4367 = vmatprep.subr.bf16.mxu0 %v4192
        %4368 = vmatpush1.bf16.msra.mxu0 %v4191
        %4369 = vmatprep.subr.bf16.mxu0 %v4196
        %4370 = vmatpush1.bf16.msra.mxu0 %v4195
        %4371 = vmatprep.subr.bf16.mxu0 %v4200
        %4372 = vmatpush1.bf16.msra.mxu0 %v4199
        %4373 = vmatprep.subr.bf16.mxu0 %v4204
        %4374 = vmatpush1.bf16.msra.mxu0 %v4203
        %4375 = vmatprep.subr.bf16.mxu0 %v4208
        %4376 = vmatpush1.bf16.msra.mxu0 %v4207
        %4377 = vmatprep.subr.bf16.mxu0 %v4212
        %4378 = vmatpush1.bf16.msra.mxu0 %v4211
        %4379 = vmatprep.subr.bf16.mxu0 %v4216
        %4380 = vmatpush1.bf16.msra.mxu0 %v4215
        %4381 = vmatprep.subr.bf16.mxu0 %v4220
        %4382 = vmatpush1.bf16.msra.mxu0 %v4219
        %4383 = vmatprep.mubr.bf16.mxu0 %v3750
        %4384 = vmatmul.mubr.bf16.gmra.mrb[0].mxu0 %v3749
        %v4385 = vpop.f32.mrb[0].mxu0
        %v4386 = vadd.f32 %v3854, %v4385
        %v4387 = vpop.f32.mrb[0].mxu0
        %v4388 = vadd.f32 %v3858, %v4387
        %v4389 = vpop.f32.mrb[0].mxu0
        %v4390 = vadd.f32 %v3854, %v4389
        %v4391 = vpop.f32.mrb[0].mxu0
        %v4392 = vadd.f32 %v3858, %v4391
        %4393 = vdwg.mxu0
        %4394 = vmatprep.subr.bf16.mxu0 %v4224
        %4395 = vmatpush1.bf16.msra.mxu0 %v4223
        %4396 = vmatprep.subr.bf16.mxu0 %v4228
        %4397 = vmatpush1.bf16.msra.mxu0 %v4227
        %4398 = vmatprep.subr.bf16.mxu0 %v4232
        %4399 = vmatpush1.bf16.msra.mxu0 %v4231
        %4400 = vmatprep.subr.bf16.mxu0 %v4236
        %4401 = vmatpush1.bf16.msra.mxu0 %v4235
        %4402 = vmatprep.subr.bf16.mxu0 %v4240
        %4403 = vmatpush1.bf16.msra.mxu0 %v4239
        %4404 = vmatprep.subr.bf16.mxu0 %v4244
        %4405 = vmatpush1.bf16.msra.mxu0 %v4243
        %4406 = vmatprep.subr.bf16.mxu0 %v4248
        %4407 = vmatpush1.bf16.msra.mxu0 %v4247
        %4408 = vmatprep.subr.bf16.mxu0 %v4252
        %4409 = vmatpush1.bf16.msra.mxu0 %v4251
        %4410 = vmatprep.subr.bf16.mxu0 0
        %4411 = vmatpush1.bf16.msra.mxu0 0
        %4412 = vmatprep.subr.bf16.mxu0 0
        %4413 = vmatpush1.bf16.msra.mxu0 0
        %4414 = vmatprep.subr.bf16.mxu0 0
        %4415 = vmatpush1.bf16.msra.mxu0 0
        %4416 = vmatprep.subr.bf16.mxu0 0
        %4417 = vmatpush1.bf16.msra.mxu0 0
        %4418 = vmatprep.subr.bf16.mxu0 0
        %4419 = vmatpush1.bf16.msra.mxu0 0
        %4420 = vmatprep.subr.bf16.mxu0 0
        %4421 = vmatpush1.bf16.msra.mxu0 0
        %4422 = vmatprep.subr.bf16.mxu0 0
        %4423 = vmatpush1.bf16.msra.mxu0 0
        %4424 = vmatprep.subr.bf16.mxu0 0
        %4425 = vmatpush1.bf16.msra.mxu0 0
        %4426 = vmatprep.mubr.bf16.mxu0 0
        %4427 = vmatmul.mubr.bf16.gmra.mrb[0].mxu0 %v3751
        %v4428 = vpop.f32.mrb[0].mxu0
        %v4429 = vadd.f32 %v4386, %v4428
        %v4430 = vpop.f32.mrb[0].mxu0
        %v4431 = vadd.f32 %v4388, %v4430
        %v4432 = vpop.f32.mrb[0].mxu0
        %v4433 = vadd.f32 %v4390, %v4432
        %v4434 = vpop.f32.mrb[0].mxu0
        %v4435 = vadd.f32 %v4392, %v4434
        %4436 = vdwg.mxu0
        %4437 = vmatprep.subr.bf16.mxu0 %v4162
        %4438 = vmatpush1.bf16.msra.mxu0 %v4161
        %4439 = vmatprep.subr.bf16.mxu0 %v4166
        %4440 = vmatpush1.bf16.msra.mxu0 %v4165
        %4441 = vmatprep.subr.bf16.mxu0 %v4170
        %4442 = vmatpush1.bf16.msra.mxu0 %v4169
        %4443 = vmatprep.subr.bf16.mxu0 %v4174
        %4444 = vmatpush1.bf16.msra.mxu0 %v4173
        %4445 = vmatprep.subr.bf16.mxu0 %v4178
        %4446 = vmatpush1.bf16.msra.mxu0 %v4177
        %4447 = vmatprep.subr.bf16.mxu0 %v4182
        %4448 = vmatpush1.bf16.msra.mxu0 %v4181
        %4449 = vmatprep.subr.bf16.mxu0 %v4186
        %4450 = vmatpush1.bf16.msra.mxu0 %v4185
        %4451 = vmatprep.subr.bf16.mxu0 %v4190
        %4452 = vmatpush1.bf16.msra.mxu0 %v4189
        %4453 = vmatprep.subr.bf16.mxu0 %v4194
        %4454 = vmatpush1.bf16.msra.mxu0 %v4193
        %4455 = vmatprep.subr.bf16.mxu0 %v4198
        %4456 = vmatpush1.bf16.msra.mxu0 %v4197
        %4457 = vmatprep.subr.bf16.mxu0 %v4202
        %4458 = vmatpush1.bf16.msra.mxu0 %v4201
        %4459 = vmatprep.subr.bf16.mxu0 %v4206
        %4460 = vmatpush1.bf16.msra.mxu0 %v4205
        %4461 = vmatprep.subr.bf16.mxu0 %v4210
        %4462 = vmatpush1.bf16.msra.mxu0 %v4209
        %4463 = vmatprep.subr.bf16.mxu0 %v4214
        %4464 = vmatpush1.bf16.msra.mxu0 %v4213
        %4465 = vmatprep.subr.bf16.mxu0 %v4218
        %4466 = vmatpush1.bf16.msra.mxu0 %v4217
        %4467 = vmatprep.subr.bf16.mxu0 %v4222
        %4468 = vmatpush1.bf16.msra.mxu0 %v4221
        %4469 = vmatprep.mubr.bf16.mxu0 %v3750
        %4470 = vmatmul.mubr.bf16.gmra.mrb[0].mxu0 %v3749
        %v4471 = vpop.f32.mrb[0].mxu0
        %v4472 = vadd.f32 %v3862, %v4471
        %v4473 = vpop.f32.mrb[0].mxu0
        %v4474 = vadd.f32 %v3866, %v4473
        %v4475 = vpop.f32.mrb[0].mxu0
        %v4476 = vadd.f32 %v3862, %v4475
        %v4477 = vpop.f32.mrb[0].mxu0
        %v4478 = vadd.f32 %v3866, %v4477
        %4479 = vdwg.mxu0
        %4480 = vmatprep.subr.bf16.mxu0 %v4226
        %4481 = vmatpush1.bf16.msra.mxu0 %v4225
        %4482 = vmatprep.subr.bf16.mxu0 %v4230
        %4483 = vmatpush1.bf16.msra.mxu0 %v4229
        %4484 = vmatprep.subr.bf16.mxu0 %v4234
        %4485 = vmatpush1.bf16.msra.mxu0 %v4233
        %4486 = vmatprep.subr.bf16.mxu0 %v4238
        %4487 = vmatpush1.bf16.msra.mxu0 %v4237
        %4488 = vmatprep.subr.bf16.mxu0 %v4242
        %4489 = vmatpush1.bf16.msra.mxu0 %v4241
        %4490 = vmatprep.subr.bf16.mxu0 %v4246
        %4491 = vmatpush1.bf16.msra.mxu0 %v4245
        %4492 = vmatprep.subr.bf16.mxu0 %v4250
        %4493 = vmatpush1.bf16.msra.mxu0 %v4249
        %4494 = vmatprep.subr.bf16.mxu0 %v4254
        %4495 = vmatpush1.bf16.msra.mxu0 %v4253
        %4496 = vmatprep.subr.bf16.mxu0 0
        %4497 = vmatpush1.bf16.msra.mxu0 0
        %4498 = vmatprep.subr.bf16.mxu0 0
        %4499 = vmatpush1.bf16.msra.mxu0 0
        %4500 = vmatprep.subr.bf16.mxu0 0
        %4501 = vmatpush1.bf16.msra.mxu0 0
        %4502 = vmatprep.subr.bf16.mxu0 0
        %4503 = vmatpush1.bf16.msra.mxu0 0
        %4504 = vmatprep.subr.bf16.mxu0 0
        %4505 = vmatpush1.bf16.msra.mxu0 0
        %4506 = vmatprep.subr.bf16.mxu0 0
        %4507 = vmatpush1.bf16.msra.mxu0 0
        %4508 = vmatprep.subr.bf16.mxu0 0
        %4509 = vmatpush1.bf16.msra.mxu0 0
        %4510 = vmatprep.subr.bf16.mxu0 0
        %4511 = vmatpush1.bf16.msra.mxu0 0
        %4512 = vmatprep.mubr.bf16.mxu0 0
        %4513 = vmatmul.mubr.bf16.gmra.mrb[0].mxu0 %v3751
        %v4514 = vpop.f32.mrb[0].mxu0
        %v4515 = vadd.f32 %v4472, %v4514
        %v4516 = vpop.f32.mrb[0].mxu0
        %v4517 = vadd.f32 %v4474, %v4516
        %v4518 = vpop.f32.mrb[0].mxu0
        %v4519 = vadd.f32 %v4476, %v4518
        %v4520 = vpop.f32.mrb[0].mxu0
        %v4521 = vadd.f32 %v4478, %v4520
        %4522 = vdwg.mxu0
        %v4523 = vmax.f32 %v4429, 0.0
        %v4524 = vmax.f32 %v4431, 0.0
        %v4525 = vmax.f32 %v4515, 0.0
        %v4526 = vmax.f32 %v4517, 0.0
        %v4527 = vmax.f32 %v4433, 0.0
        %v4528 = vmax.f32 %v4435, 0.0
        %v4529 = vmax.f32 %v4519, 0.0
        %v4530 = vmax.f32 %v4521, 0.0
        %v4531 = vpack.c.bf16 %v4527, %v4523
        %v4532 = vpack.c.bf16 %v4528, %v4524
        %v4533 = vpack.c.bf16 %v4529, %v4525
        %v4534 = vpack.c.bf16 %v4530, %v4526
        %v4535 = vld [vmem:[#allocation7 + $0x40] sm:$0xf]
        %v4536 = vld [vmem:[#allocation7 + $0x44] sm:$0xf]
        %v4537 = vld [vmem:[#allocation7 + $0x48] sm:$0xf]
        %v4538 = vld [vmem:[#allocation7 + $0x4c] sm:$0xf]
        %v4539 = vld [vmem:[#allocation7 + $0x50] sm:$0xf]
        %v4540 = vld [vmem:[#allocation7 + $0x54] sm:$0xf]
        %v4541 = vld [vmem:[#allocation7 + $0x58] sm:$0xf]
        %v4542 = vld [vmem:[#allocation7 + $0x5c] sm:$0xf]
        %v4543 = vld [vmem:[#allocation7 + $0x60] sm:$0xf]
        %v4544 = vld [vmem:[#allocation7 + $0x64] sm:$0xf]
        %v4545 = vld [vmem:[#allocation7 + $0x68] sm:$0xf]
        %v4546 = vld [vmem:[#allocation7 + $0x6c] sm:$0xf]
        %v4547 = vld [vmem:[#allocation7 + $0x70] sm:$0xf]
        %v4548 = vld [vmem:[#allocation7 + $0x74] sm:$0xf]
        %v4549 = vld [vmem:[#allocation7 + $0x78] sm:$0xf]
        %v4550 = vld [vmem:[#allocation7 + $0x7c] sm:$0xf]
        %v4551 = vld [vmem:[#allocation7 + $0x80] sm:$0xf]
        %v4552 = vld [vmem:[#allocation7 + $0x84] sm:$0xf]
        %v4553 = vld [vmem:[#allocation7 + $0x88] sm:$0xf]
        %v4554 = vld [vmem:[#allocation7 + $0x8c] sm:$0xf]
        %v4555 = vld [vmem:[#allocation7 + $0x90] sm:$0xf]
        %v4556 = vld [vmem:[#allocation7 + $0x94] sm:$0xf]
        %v4557 = vld [vmem:[#allocation7 + $0x98] sm:$0xf]
        %v4558 = vld [vmem:[#allocation7 + $0x9c] sm:$0xf]
        %v4559 = vld [vmem:[#allocation7 + $0xa0] sm:$0xf]
        %v4560 = vld [vmem:[#allocation7 + $0xa4] sm:$0xf]
        %v4561 = vld [vmem:[#allocation7 + $0xa8] sm:$0xf]
        %v4562 = vld [vmem:[#allocation7 + $0xac] sm:$0xf]
        %v4563 = vld [vmem:[#allocation7 + $0xb0] sm:$0xf]
        %v4564 = vld [vmem:[#allocation7 + $0xb4] sm:$0xf]
        %v4565 = vld [vmem:[#allocation7 + $0xb8] sm:$0xf]
        %v4566 = vld [vmem:[#allocation7 + $0xbc] sm:$0xf]
        %v4567 = vld [vmem:[#allocation7 + $0xc0] sm:$0xf]
        %v4568 = vld [vmem:[#allocation7 + $0xc4] sm:$0xf]
        %v4569 = vld [vmem:[#allocation7 + $0xc8] sm:$0xf]
        %v4570 = vld [vmem:[#allocation7 + $0xcc] sm:$0xf]
        %v4571 = vld [vmem:[#allocation7 + $0xd0] sm:$0xf]
        %v4572 = vld [vmem:[#allocation7 + $0xd4] sm:$0xf]
        %v4573 = vld [vmem:[#allocation7 + $0xd8] sm:$0xf]
        %v4574 = vld [vmem:[#allocation7 + $0xdc] sm:$0xf]
        %v4575 = vld [vmem:[#allocation7 + $0xe0] sm:$0xf]
        %v4576 = vld [vmem:[#allocation7 + $0xe4] sm:$0xf]
        %v4577 = vld [vmem:[#allocation7 + $0xe8] sm:$0xf]
        %v4578 = vld [vmem:[#allocation7 + $0xec] sm:$0xf]
        %v4579 = vld [vmem:[#allocation7 + $0xf0] sm:$0xf]
        %v4580 = vld [vmem:[#allocation7 + $0xf4] sm:$0xf]
        %v4581 = vld [vmem:[#allocation7 + $0xf8] sm:$0xf]
        %v4582 = vld [vmem:[#allocation7 + $0xfc] sm:$0xf]
        %v4583 = vld [vmem:[#allocation7 + $0x100] sm:$0xf]
        %v4584 = vld [vmem:[#allocation7 + $0x104] sm:$0xf]
        %v4585 = vld [vmem:[#allocation7 + $0x108] sm:$0xf]
        %v4586 = vld [vmem:[#allocation7 + $0x10c] sm:$0xf]
        %v4587 = vld [vmem:[#allocation7 + $0x110] sm:$0xf]
        %v4588 = vld [vmem:[#allocation7 + $0x114] sm:$0xf]
        %v4589 = vld [vmem:[#allocation7 + $0x118] sm:$0xf]
        %v4590 = vld [vmem:[#allocation7 + $0x11c] sm:$0xf]
        %v4591 = vld [vmem:[#allocation7 + $0x120] sm:$0xf]
        %v4592 = vld [vmem:[#allocation7 + $0x124] sm:$0xf]
        %v4593 = vld [vmem:[#allocation7 + $0x128] sm:$0xf]
        %v4594 = vld [vmem:[#allocation7 + $0x12c] sm:$0xf]
        %v4595 = vld [vmem:[#allocation7 + $0x130] sm:$0xf]
        %v4596 = vld [vmem:[#allocation7 + $0x134] sm:$0xf]
        %v4597 = vld [vmem:[#allocation7 + $0x138] sm:$0xf]
        %v4598 = vld [vmem:[#allocation7 + $0x13c] sm:$0xf]
        %v4599 = vld [vmem:[#allocation13 + $0x23] ss:$0 sm:$0xff]
        %v4664 = vunpack.c.l.b16 %v4535
        %v4665 = vunpack.c.l.b16 %v4536
        %v4666 = vunpack.c.l.b16 %v4537
        %v4667 = vunpack.c.l.b16 %v4538
        %v4668 = vunpack.c.l.b16 %v4539
        %v4669 = vunpack.c.l.b16 %v4540
        %v4670 = vunpack.c.l.b16 %v4541
        %v4671 = vunpack.c.l.b16 %v4542
        %v4672 = vunpack.c.l.b16 %v4543
        %v4673 = vunpack.c.l.b16 %v4544
        %v4674 = vunpack.c.l.b16 %v4545
        %v4675 = vunpack.c.l.b16 %v4546
        %v4676 = vunpack.c.l.b16 %v4547
        %v4677 = vunpack.c.l.b16 %v4548
        %v4678 = vunpack.c.l.b16 %v4549
        %v4679 = vunpack.c.l.b16 %v4550
        %v4680 = vunpack.c.l.b16 %v4551
        %v4681 = vunpack.c.l.b16 %v4552
        %v4682 = vunpack.c.l.b16 %v4553
        %v4683 = vunpack.c.l.b16 %v4554
        %v4684 = vunpack.c.l.b16 %v4555
        %v4685 = vunpack.c.l.b16 %v4556
        %v4686 = vunpack.c.l.b16 %v4557
        %v4687 = vunpack.c.l.b16 %v4558
        %v4688 = vunpack.c.l.b16 %v4559
        %v4689 = vunpack.c.l.b16 %v4560
        %v4690 = vunpack.c.l.b16 %v4561
        %v4691 = vunpack.c.l.b16 %v4562
        %v4692 = vunpack.c.l.b16 %v4563
        %v4693 = vunpack.c.l.b16 %v4564
        %v4694 = vunpack.c.l.b16 %v4565
        %v4695 = vunpack.c.l.b16 %v4566
        %v4696 = vunpack.c.l.b16 %v4567
        %v4697 = vunpack.c.l.b16 %v4568
        %v4698 = vunpack.c.l.b16 %v4569
        %v4699 = vunpack.c.l.b16 %v4570
        %v4700 = vunpack.c.l.b16 %v4571
        %v4701 = vunpack.c.l.b16 %v4572
        %v4702 = vunpack.c.l.b16 %v4573
        %v4703 = vunpack.c.l.b16 %v4574
        %v4704 = vunpack.c.l.b16 %v4575
        %v4705 = vunpack.c.l.b16 %v4576
        %v4706 = vunpack.c.l.b16 %v4577
        %v4707 = vunpack.c.l.b16 %v4578
        %v4708 = vunpack.c.l.b16 %v4579
        %v4709 = vunpack.c.l.b16 %v4580
        %v4710 = vunpack.c.l.b16 %v4581
        %v4711 = vunpack.c.l.b16 %v4582
        %v4712 = vunpack.c.l.b16 %v4583
        %v4713 = vunpack.c.l.b16 %v4584
        %v4714 = vunpack.c.l.b16 %v4585
        %v4715 = vunpack.c.l.b16 %v4586
        %v4716 = vunpack.c.l.b16 %v4587
        %v4717 = vunpack.c.l.b16 %v4588
        %v4718 = vunpack.c.l.b16 %v4589
        %v4719 = vunpack.c.l.b16 %v4590
        %v4720 = vunpack.c.l.b16 %v4591
        %v4721 = vunpack.c.l.b16 %v4592
        %v4722 = vunpack.c.l.b16 %v4593
        %v4723 = vunpack.c.l.b16 %v4594
        %v4724 = vunpack.c.l.b16 %v4595
        %v4725 = vunpack.c.l.b16 %v4596
        %v4726 = vunpack.c.l.b16 %v4597
        %v4727 = vunpack.c.l.b16 %v4598
        %v4728 = vpack.c.b16 %v4665, %v4664
        %v4729 = vpack.c.b16 %v4667, %v4666
        %v4730 = vpack.c.b16 %v4669, %v4668
        %v4731 = vpack.c.b16 %v4671, %v4670
        %v4732 = vpack.c.b16 %v4673, %v4672
        %v4733 = vpack.c.b16 %v4675, %v4674
        %v4734 = vpack.c.b16 %v4677, %v4676
        %v4735 = vpack.c.b16 %v4679, %v4678
        %v4736 = vpack.c.b16 %v4681, %v4680
        %v4737 = vpack.c.b16 %v4683, %v4682
        %v4738 = vpack.c.b16 %v4685, %v4684
        %v4739 = vpack.c.b16 %v4687, %v4686
        %v4740 = vpack.c.b16 %v4689, %v4688
        %v4741 = vpack.c.b16 %v4691, %v4690
        %v4742 = vpack.c.b16 %v4693, %v4692
        %v4743 = vpack.c.b16 %v4695, %v4694
        %v4744 = vpack.c.b16 %v4697, %v4696
        %v4745 = vpack.c.b16 %v4699, %v4698
        %v4746 = vpack.c.b16 %v4701, %v4700
        %v4747 = vpack.c.b16 %v4703, %v4702
        %v4748 = vpack.c.b16 %v4705, %v4704
        %v4749 = vpack.c.b16 %v4707, %v4706
        %v4750 = vpack.c.b16 %v4709, %v4708
        %v4751 = vpack.c.b16 %v4711, %v4710
        %v4752 = vpack.c.b16 %v4713, %v4712
        %v4753 = vpack.c.b16 %v4715, %v4714
        %v4754 = vpack.c.b16 %v4717, %v4716
        %v4755 = vpack.c.b16 %v4719, %v4718
        %v4756 = vpack.c.b16 %v4721, %v4720
        %v4757 = vpack.c.b16 %v4723, %v4722
        %v4758 = vpack.c.b16 %v4725, %v4724
        %v4759 = vpack.c.b16 %v4727, %v4726
        %4792 = vmatprep.subr.bf16.mxu0 0
        %4793 = vmatpush1.bf16.msra.mxu0 %v4728
        %4794 = vmatprep.subr.bf16.mxu0 0
        %4795 = vmatpush1.bf16.msra.mxu0 %v4729
        %4796 = vmatprep.subr.bf16.mxu0 0
        %4797 = vmatpush1.bf16.msra.mxu0 %v4730
        %4798 = vmatprep.subr.bf16.mxu0 0
        %4799 = vmatpush1.bf16.msra.mxu0 %v4731
        %4800 = vmatprep.subr.bf16.mxu0 0
        %4801 = vmatpush1.bf16.msra.mxu0 %v4732
        %4802 = vmatprep.subr.bf16.mxu0 0
        %4803 = vmatpush1.bf16.msra.mxu0 %v4733
        %4804 = vmatprep.subr.bf16.mxu0 0
        %4805 = vmatpush1.bf16.msra.mxu0 %v4734
        %4806 = vmatprep.subr.bf16.mxu0 0
        %4807 = vmatpush1.bf16.msra.mxu0 %v4735
        %4808 = vmatprep.subr.bf16.mxu0 0
        %4809 = vmatpush1.bf16.msra.mxu0 %v4736
        %4810 = vmatprep.subr.bf16.mxu0 0
        %4811 = vmatpush1.bf16.msra.mxu0 %v4737
        %4812 = vmatprep.subr.bf16.mxu0 0
        %4813 = vmatpush1.bf16.msra.mxu0 %v4738
        %4814 = vmatprep.subr.bf16.mxu0 0
        %4815 = vmatpush1.bf16.msra.mxu0 %v4739
        %4816 = vmatprep.subr.bf16.mxu0 0
        %4817 = vmatpush1.bf16.msra.mxu0 %v4740
        %4818 = vmatprep.subr.bf16.mxu0 0
        %4819 = vmatpush1.bf16.msra.mxu0 %v4741
        %4820 = vmatprep.subr.bf16.mxu0 0
        %4821 = vmatpush1.bf16.msra.mxu0 %v4742
        %4822 = vmatprep.subr.bf16.mxu0 0
        %4823 = vmatpush1.bf16.msra.mxu0 %v4743
        %4824 = vmatprep.mubr.bf16.mxu0 %v4532
        %4825 = vmatmul.mubr.bf16.gmra.mrb[0].mxu0 %v4531
        %v4826 = vpop.f32.mrb[0].mxu0
        %v4827 = vadd.f32 %v4599, %v4826
        %v4828 = vpop.f32.mrb[0].mxu0
        %v4829 = vpop.f32.mrb[0].mxu0
        %v4830 = vadd.f32 %v4599, %v4829
        %v4831 = vpop.f32.mrb[0].mxu0
        %4832 = vdwg.mxu0
        %4833 = vmatprep.subr.bf16.mxu0 0
        %4834 = vmatpush1.bf16.msra.mxu0 %v4744
        %4835 = vmatprep.subr.bf16.mxu0 0
        %4836 = vmatpush1.bf16.msra.mxu0 %v4745
        %4837 = vmatprep.subr.bf16.mxu0 0
        %4838 = vmatpush1.bf16.msra.mxu0 %v4746
        %4839 = vmatprep.subr.bf16.mxu0 0
        %4840 = vmatpush1.bf16.msra.mxu0 %v4747
        %4841 = vmatprep.subr.bf16.mxu0 0
        %4842 = vmatpush1.bf16.msra.mxu0 %v4748
        %4843 = vmatprep.subr.bf16.mxu0 0
        %4844 = vmatpush1.bf16.msra.mxu0 %v4749
        %4845 = vmatprep.subr.bf16.mxu0 0
        %4846 = vmatpush1.bf16.msra.mxu0 %v4750
        %4847 = vmatprep.subr.bf16.mxu0 0
        %4848 = vmatpush1.bf16.msra.mxu0 %v4751
        %4849 = vmatprep.subr.bf16.mxu0 0
        %4850 = vmatpush1.bf16.msra.mxu0 %v4752
        %4851 = vmatprep.subr.bf16.mxu0 0
        %4852 = vmatpush1.bf16.msra.mxu0 %v4753
        %4853 = vmatprep.subr.bf16.mxu0 0
        %4854 = vmatpush1.bf16.msra.mxu0 %v4754
        %4855 = vmatprep.subr.bf16.mxu0 0
        %4856 = vmatpush1.bf16.msra.mxu0 %v4755
        %4857 = vmatprep.subr.bf16.mxu0 0
        %4858 = vmatpush1.bf16.msra.mxu0 %v4756
        %4859 = vmatprep.subr.bf16.mxu0 0
        %4860 = vmatpush1.bf16.msra.mxu0 %v4757
        %4861 = vmatprep.subr.bf16.mxu0 0
        %4862 = vmatpush1.bf16.msra.mxu0 %v4758
        %4863 = vmatprep.subr.bf16.mxu0 0
        %4864 = vmatpush1.bf16.msra.mxu0 %v4759
        %4865 = vmatprep.mubr.bf16.mxu0 %v4534
        %4866 = vmatmul.mubr.bf16.gmra.mrb[0].mxu0 %v4533
        %v4867 = vpop.f32.mrb[0].mxu0
        %v4868 = vadd.f32 %v4827, %v4867
        %v4869 = vpop.f32.mrb[0].mxu0
        %v4870 = vpop.f32.mrb[0].mxu0
        %v4871 = vadd.f32 %v4830, %v4870
        %v4872 = vpop.f32.mrb[0].mxu0
        %4873 = vdwg.mxu0
        %v4874 = vxor.u32 %v4868, 2147483648
        %v4875 = vxor.u32 %v4871, 2147483648
        %v4876 = vmul.f32 %v4874, 1.442695
        %v4877 = vpow.pop %v4876
        %v4878 = vmul.f32 %v4875, 1.442695
        %v4879 = vpow.pop %v4878
        %v4880 = vadd.f32 %v4877, 1.0
        %v4881 = vadd.f32 %v4879, 1.0
        %v4882 = vrcp.pop %v4880
        %v4883 = vmul.f32 1.0, %v4882
        %v4884 = vrcp.pop %v4881
        %v4885 = vmul.f32 1.0, %v4884
        %4886 = vst [vmem:[%s439] sm:$0xff] %v4883
        %4887 = vst [vmem:[%s439 + $0x8] sm:$0xff] %v4885
        %s4888 = sand.u32 %s199, 1
        %s4889 = scalar_lea.sflag [#allocation4], %s4888
        %s4890 = sand.u32 %s199, 1
        %s4891 = smul.addr %s4890, 16
        %s4892 = scalar_lea.vmem [#allocation14], %s4891
        %s4893 = sand.u32 %s225, 1
        %s4894 = scalar_lea.sflag [#allocation16], %s4893
        %s4895 = sand.u32 %s225, 1
        %s4896 = scalar_lea.vmem [#allocation15], %s4895
        // Predicated region
        $region77: #{tpu_custom_call.1} parent=47 // pred_check
          %p4897 = pneg %p209
        $region78: #{tpu_custom_call.1} parent=47 // pred_check_branch
          %4899 = sbr.rel (%p4897) target = $region80
        $region79: #{tpu_custom_call.1} parent=47 // pred_region
          %s4900 = smul.u32 2, %s34
          %s4902 = ssub.s32 256, 256
          %4903 = vsyncadd %s4889, %s4902
          %s4904 = smul.addr %s4900, 128
          %s4905 = scalar_lea.hbm %s7, %s4904
          %s4906 = sshll.u32 %s4892, 4
          %s4907 = int_to_ptr.vmem [resolvable:$true] %s4906
          %4912 = dma.vmem_to_hbm [thread:$0]  %s4907, 256, %s4905, %s4889, 128, 128, 8
        $region80: #{tpu_custom_call.1} parent=47 // pred_fallthru
          _
        // Predicated region
        $region81: #{tpu_custom_call.1} parent=47 // pred_check
          %p4913 = pneg %p235
        $region82: #{tpu_custom_call.1} parent=47 // pred_check_branch
          %4915 = sbr.rel (%p4913) target = $region84
        $region83: #{tpu_custom_call.1} parent=47 // pred_region
          %s4917 = ssub.s32 16, 16
          %4918 = vsyncadd %s4894, %s4917
          %s4919 = smul.addr %s34, 16
          %s4920 = scalar_lea.hbm %s8, %s4919
          %s4922 = sshll.u32 %s4896, 4
          %s4923 = int_to_ptr.vmem [resolvable:$true] %s4922
          %4925 = dma.vmem_to_hbm [thread:$0]  %s4923, 16, %s4920, %s4894
        $region84: #{tpu_custom_call.1} parent=47 // pred_fallthru
          _
      $region48: #{tpu_custom_call.1} parent=5 // pred_fallthru
        _
      %p4926 = scmp.le.s32.totalorder 2, %s29
      // Predicated region
      $region85: #{tpu_custom_call.1} parent=5 // pred_check
        %p4927 = pneg %p4926
      $region86: #{tpu_custom_call.1} parent=5 // pred_check_branch
        %4929 = sbr.rel (%p4927) target = $region88
      $region87: #{tpu_custom_call.1} parent=5 // pred_region
        %s4930 = ssub.s32 %s29, 2
        // Predicated region
        $region89: #{tpu_custom_call.1} parent=87 // pred_check
          %p4931 = pneg %p215
        $region90: #{tpu_custom_call.1} parent=87 // pred_check_branch
          %4933 = sbr.rel (%p4931) target = $region92
        $region91: #{tpu_custom_call.1} parent=87 // pred_region
          %s4934 = sand.u32 %s200, 1
          %s4935 = scalar_lea.sflag [#allocation4], %s4934
          %s4936 = sand.u32 %s200, 1
          %s4937 = smul.addr %s4936, 16
          %s4938 = scalar_lea.vmem [#allocation14], %s4937
          %4939 = dma.done %s4935, 256
        $region92: #{tpu_custom_call.1} parent=87 // pred_fallthru
          _
        // Predicated region
        $region93: #{tpu_custom_call.1} parent=87 // pred_check
          %p4940 = pneg %p241
        $region94: #{tpu_custom_call.1} parent=87 // pred_check_branch
          %4942 = sbr.rel (%p4940) target = $region96
        $region95: #{tpu_custom_call.1} parent=87 // pred_region
          %s4943 = sand.u32 %s226, 1
          %s4944 = scalar_lea.sflag [#allocation16], %s4943
          %s4945 = sand.u32 %s226, 1
          %s4946 = scalar_lea.vmem [#allocation15], %s4945
          %4947 = dma.done %s4944, 16
        $region96: #{tpu_custom_call.1} parent=87 // pred_fallthru
          _
      $region88: #{tpu_custom_call.1} parent=5 // pred_fallthru
        _
    $region6: #{tpu_custom_call.1} parent=1 // loop_footer
      %s33 = sadd.s32 1, %s29
    $region7: #{tpu_custom_call.1} parent=1 // loop_footer_branch
      %28 = sbr.rel target = $region3
    $region8: #{tpu_custom_call.1} parent=1 // loop_exit
      _
    %4948 = vsyncpa [#allocation3], 1
    %s4949 = scalar_lea.sflag [#allocation3], 1
    %4950 = vsyncpa %s4949, 1
    %4951 = vsyncpa [#allocation6], 1
    %s4952 = scalar_lea.sflag [#allocation6], 1
    %4953 = vsyncpa %s4952, 1
    %4954 = vsyncpa [#allocation9], 1
    %4955 = vsyncpa [#allocation12], 1
    %4956 = vsyncpa [#allocation4], 1
    %s4957 = scalar_lea.sflag [#allocation4], 1
    %4958 = vsyncpa %s4957, 1
    %4959 = vsyncpa [#allocation16], 1
    %s4960 = scalar_lea.sflag [#allocation16], 1
    %4961 = vsyncpa %s4960, 1

</llo_original>
